<compile_context>
chip_gen: v5e
topology: v5e:2x2
jax: 0.10.0
libtpu: 0.0.40
codegen_flags: <defaults>
</compile_context>

<pallas_src>
import functools

import jax
import jax.numpy as jnp
from jax import lax
from jax.experimental import pallas as pl
from jax.experimental.pallas import tpu as pltpu


# ----------------------------------------------------------------------------
# VMEM budget / tiling helpers
# ----------------------------------------------------------------------------
@functools.lru_cache(maxsize=None)
def _vmem_limit_bytes():
    """Generation-aware scoped-VMEM budget (~75% of physical, capped at 100 MiB)."""
    cap = 64 * 1024 * 1024
    try:
        info_fn = getattr(pltpu, "get_tpu_info", None)
        if info_fn is not None:
            cap = int(info_fn().vmem_capacity_bytes)
    except Exception:
        pass
    return int(min(cap - cap // 4, 100 * 1024 * 1024))


def _pick_t_chunk(S, B, H, d_in, x_itemsize, out_itemsize, vmem_budget):
    """Largest time-chunk (divisor of S) whose footprint fits the VMEM budget."""
    # Grid-invariant residents: bf16 W_ih^T + W_hh^T (double-buffered by default),
    # bias, h/c scratch + boundary-state blocks.
    fixed = 2 * 2 * (d_in * 4 * H + H * 4 * H) + 2 * 4 * H * 4 + 8 * B * H * 4
    budget = int(vmem_budget * 0.75)
    for t in (128, 64, 32, 16, 8, 4, 2, 1):
        if S % t:
            continue
        per_chunk = (2 * t * B * d_in * x_itemsize      # x chunk (double-buffered)
                     + 2 * t * B * H * out_itemsize     # out chunk (double-buffered)
                     + t * B * 4 * H * 4)               # fp32 gate scratch
        if fixed + per_chunk <= budget:
            return t
    raise ValueError("LSTM layer does not fit the scoped VMEM budget; "
                     "reduce hidden_dim / batch.")


# ----------------------------------------------------------------------------
# Kernel bodies
# ----------------------------------------------------------------------------
def _lstm_chunk_body(x_ref, wihT_ref, whhT_ref, b_ref, gx_scr, h_init, c_init,
                     out_ref):
    """Run T_CHUNK LSTM steps.  Input projection is hoisted to one chunk matmul."""
    T, B, d_in = x_ref.shape
    H = whhT_ref.shape[0]

    # (1) Hoisted input projection: one (T*B, d_in) x (d_in, 4H) MXU matmul with
    #     the folded bias, fp32 accumulation, stored to VMEM scratch.
    x2 = x_ref[...].reshape(T * B, d_in).astype(wihT_ref.dtype)
    gx_scr[...] = (jnp.dot(x2, wihT_ref[...], preferred_element_type=jnp.float32)
                   + b_ref[...])

    whhT = whhT_ref[...]  # grid-invariant recurrent weight, hoisted out of the loop

    # (2) Sequential recurrence: only h @ W_hh^T remains on the serial chain.
    def step(t, carry):
        h, c = carry
        row = pl.multiple_of(t * B, B)
        gates = gx_scr[pl.ds(row, B), :] + jnp.dot(
            h.astype(whhT.dtype), whhT, preferred_element_type=jnp.float32)
        # Gate layout is (i, f, o, g): one contiguous sigmoid slice + one tanh slice.
        sig = jax.nn.sigmoid(gates[:, : 3 * H])
        i_g = sig[:, 0 * H:1 * H]
        f_g = sig[:, 1 * H:2 * H]
        o_g = sig[:, 2 * H:3 * H]
        g_g = jnp.tanh(gates[:, 3 * H:4 * H])
        c_new = f_g * c + i_g * g_g
        h_new = o_g * jnp.tanh(c_new)
        if out_ref is not None:
            out_ref[t] = h_new.astype(out_ref.dtype)
        return h_new, c_new

    unroll = True if T <= 16 else 8   # partial unroll keeps vreg pressure bounded
    return lax.fori_loop(0, T, step, (h_init, c_init), unroll=unroll)


def lstm_seq_kernel(x_ref, h0_ref, c0_ref, wihT_ref, whhT_ref, b_ref,
                    out_ref, hN_ref, cN_ref, h_scr, c_scr, gx_scr):
    """Non-final LSTM layer: fused input projection + recurrence, emits the full
    hidden sequence (bf16), chunked over time."""
    ci = pl.program_id(0)
    nc = pl.num_programs(0)

    @pl.when(ci == 0)
    def _():
        h_scr[...] = h0_ref[...]
        c_scr[...] = c0_ref[...]

    h_fin, c_fin = _lstm_chunk_body(x_ref, wihT_ref, whhT_ref, b_ref, gx_scr,
                                    h_scr[...], c_scr[...], out_ref)

    @pl.when(ci != nc - 1)
    def _():
        h_scr[...] = h_fin
        c_scr[...] = c_fin

    @pl.when(ci == nc - 1)
    def _():
        hN_ref[...] = h_fin
        cN_ref[...] = c_fin


def lstm_seq_fc_kernel(x_ref, h0_ref, c0_ref, wihT_ref, whhT_ref, b_ref,
                       fc_wT_ref, fc_b_ref,
                       hN_ref, cN_ref, out_ref, h_scr, c_scr, gx_scr):
    """Final LSTM layer with fused fc(relu(h_last)) epilogue (no sequence output)."""
    ci = pl.program_id(0)
    nc = pl.num_programs(0)

    @pl.when(ci == 0)
    def _():
        h_scr[...] = h0_ref[...]
        c_scr[...] = c0_ref[...]

    h_fin, c_fin = _lstm_chunk_body(x_ref, wihT_ref, whhT_ref, b_ref, gx_scr,
                                    h_scr[...], c_scr[...], None)

    @pl.when(ci != nc - 1)
    def _():
        h_scr[...] = h_fin
        c_scr[...] = c_fin

    @pl.when(ci == nc - 1)
    def _():
        hN_ref[...] = h_fin
        cN_ref[...] = c_fin
        relu_h = jnp.maximum(h_fin, 0.0)
        out_ref[...] = (
            jnp.dot(relu_h.astype(fc_wT_ref.dtype), fc_wT_ref[...],
                    preferred_element_type=jnp.float32)
            + fc_b_ref[...]
        )


# ----------------------------------------------------------------------------
# pallas_call wrappers
# ----------------------------------------------------------------------------
def lstm_layer(x_seq, h0, c0, wihT, whhT, bias, t_chunk, vmem_limit):
    """Non-final layer.  Returns (out_seq (S,B,H) bf16, h_N fp32, c_N fp32)."""
    S, B, d_in = x_seq.shape
    H, G4 = whhT.shape
    return pl.pallas_call(
        lstm_seq_kernel,
        out_shape=(
            jax.ShapeDtypeStruct((S, B, H), jnp.bfloat16),
            jax.ShapeDtypeStruct((B, H), jnp.float32),
            jax.ShapeDtypeStruct((B, H), jnp.float32),
        ),
        grid=(S // t_chunk,),
        in_specs=[
            pl.BlockSpec((t_chunk, B, d_in), lambda c: (c, 0, 0)),   # x chunk
            pl.BlockSpec((B, H), lambda c: (0, 0)),                  # h0
            pl.BlockSpec((B, H), lambda c: (0, 0)),                  # c0
            pl.BlockSpec((d_in, G4), lambda c: (0, 0)),              # W_ih^T (bf16)
            pl.BlockSpec((H, G4), lambda c: (0, 0)),                 # W_hh^T (bf16)
            pl.BlockSpec((1, G4), lambda c: (0, 0)),                 # b_ih + b_hh
        ],
        out_specs=(
            pl.BlockSpec((t_chunk, B, H), lambda c: (c, 0, 0)),      # out chunk
            pl.BlockSpec((B, H), lambda c: (0, 0)),                  # h_N
            pl.BlockSpec((B, H), lambda c: (0, 0)),                  # c_N
        ),
        scratch_shapes=[
            pltpu.VMEM((B, H), jnp.float32),
            pltpu.VMEM((B, H), jnp.float32),
            pltpu.VMEM((t_chunk * B, G4), jnp.float32),
        ],
        compiler_params=pltpu.CompilerParams(
            dimension_semantics=("arbitrary",),
            vmem_limit_bytes=vmem_limit),
    )(x_seq, h0, c0, wihT, whhT, bias)


def lstm_last_layer(x_seq, h0, c0, wihT, whhT, bias, fc_wT, fc_b, t_chunk,
                    vmem_limit):
    """Last layer: returns (h_N, c_N, fc_out) with the fc epilogue fused."""
    S, B, d_in = x_seq.shape
    H, G4 = whhT.shape
    O = fc_wT.shape[-1]
    return pl.pallas_call(
        lstm_seq_fc_kernel,
        out_shape=(
            jax.ShapeDtypeStruct((B, H), jnp.float32),
            jax.ShapeDtypeStruct((B, H), jnp.float32),
            jax.ShapeDtypeStruct((B, O), jnp.float32),
        ),
        grid=(S // t_chunk,),
        in_specs=[
            pl.BlockSpec((t_chunk, B, d_in), lambda c: (c, 0, 0)),   # x chunk
            pl.BlockSpec((B, H), lambda c: (0, 0)),                  # h0
            pl.BlockSpec((B, H), lambda c: (0, 0)),                  # c0
            pl.BlockSpec((d_in, G4), lambda c: (0, 0)),              # W_ih^T (bf16)
            pl.BlockSpec((H, G4), lambda c: (0, 0)),                 # W_hh^T (bf16)
            pl.BlockSpec((1, G4), lambda c: (0, 0)),                 # b_ih + b_hh
            pl.BlockSpec((H, O), lambda c: (0, 0)),                  # fc W^T (bf16)
            pl.BlockSpec((1, O), lambda c: (0, 0)),                  # fc b
        ],
        out_specs=(
            pl.BlockSpec((B, H), lambda c: (0, 0)),                  # h_N
            pl.BlockSpec((B, H), lambda c: (0, 0)),                  # c_N
            pl.BlockSpec((B, O), lambda c: (0, 0)),                  # fc out
        ),
        scratch_shapes=[
            pltpu.VMEM((B, H), jnp.float32),
            pltpu.VMEM((B, H), jnp.float32),
            pltpu.VMEM((t_chunk * B, G4), jnp.float32),
        ],
        compiler_params=pltpu.CompilerParams(
            dimension_semantics=("arbitrary",),
            vmem_limit_bytes=vmem_limit),
    )(x_seq, h0, c0, wihT, whhT, bias, fc_wT, fc_b)


def lstmnet_forward(x, h, params):
    """Matches LSTMNet.forward(x, h): returns (out, (h_n, c_n)).

    x: (B, S, input_dim)  batch-first (PyTorch batch_first=True)
    h: (h0, c0), each (n_layers, B, hidden_dim)
    """
    h0, c0 = h
    x_tm = jnp.transpose(x, (1, 0, 2))       # time-major (S, B, D)
    S, B, _ = x_tm.shape
    n_layers = len(params["lstm"])
    vmem_limit = _vmem_limit_bytes()

    seq = x_tm
    h_finals, c_finals = [], []
    out = None
    for l, (wihT, whhT, bias) in enumerate(params["lstm"]):
        d_in = seq.shape[-1]
        H = whhT.shape[0]
        last = (l == n_layers - 1)
        out_isz = 0 if last else jnp.dtype(jnp.bfloat16).itemsize
        t_chunk = _pick_t_chunk(S, B, H, d_in, seq.dtype.itemsize, out_isz,
                                vmem_limit)
        if last:
            h_f, c_f, out = lstm_last_layer(
                seq, h0[l], c0[l], wihT, whhT, bias,
                params["fc_wT"], params["fc_b"], t_chunk, vmem_limit)
        else:
            seq, h_f, c_f = lstm_layer(
                seq, h0[l], c0[l], wihT, whhT, bias, t_chunk, vmem_limit)
        h_finals.append(h_f)
        c_finals.append(c_f)
    return out, (jnp.stack(h_finals), jnp.stack(c_finals))


# ----------------------------------------------------------------------------
# Parameter init.
#   - "kernel" params: gate blocks permuted from PyTorch (i,f,g,o) to (i,f,o,g),
#     transposed, bf16 MXU operands; biases folded (b_ih + b_hh) and kept fp32.
#   - "ref" params: untouched PyTorch-layout fp32 weights for the pure-JAX reference.
# ----------------------------------------------------------------------------
def init_params(key, input_dim, hidden_dim, output_dim, n_layers):
    H = hidden_dim
    k = 1.0 / (hidden_dim ** 0.5)
    # PyTorch rows (i, f, g, o) -> kernel rows (i, f, o, g)
    perm = jnp.concatenate([jnp.arange(0, H), jnp.arange(H, 2 * H),
                            jnp.arange(3 * H, 4 * H), jnp.arange(2 * H, 3 * H)])
    kern = {"lstm": []}
    ref = {"lstm": []}
    for l in range(n_layers):
        d_in = input_dim if l == 0 else hidden_dim
        key, k1, k2, k3, k4 = jax.random.split(key, 5)
        w_ih = jax.random.uniform(k1, (4 * H, d_in), jnp.float32, -k, k)
        w_hh = jax.random.uniform(k2, (4 * H, H), jnp.float32, -k, k)
        b_ih = jax.random.uniform(k3, (4 * H,), jnp.float32, -k, k)
        b_hh = jax.random.uniform(k4, (4 * H,), jnp.float32, -k, k)
        ref["lstm"].append((w_ih, w_hh, b_ih + b_hh))
        kern["lstm"].append((
            w_ih[perm].T.astype(jnp.bfloat16),      # (d_in, 4H), (i,f,o,g) columns
            w_hh[perm].T.astype(jnp.bfloat16),      # (H, 4H)
            (b_ih + b_hh)[perm][None, :],           # (1, 4H) fp32, folded
        ))
    key, k5, k6 = jax.random.split(key, 3)
    fc_w = jax.random.uniform(k5, (output_dim, H), jnp.float32, -k, k)
    fc_b = jax.random.uniform(k6, (output_dim,), jnp.float32, -k, k)
    ref["fc_w"] = fc_w
    ref["fc_b"] = fc_b
    kern["fc_wT"] = fc_w.T.astype(jnp.bfloat16)
    kern["fc_b"] = fc_b[None, :]
    return kern, ref


# ----------------------------------------------------------------------------
# Pure-JAX reference in PyTorch (i, f, g, o) gate order, with the same
# bf16-operand / fp32-accumulate rounding points as the kernel.  It also checks
# that the (i,f,o,g) permutation inside the kernel is semantics-preserving.
# ----------------------------------------------------------------------------
def reference_forward(x, h, ref_params):
    def bdot(a, b):
        return jnp.dot(a.astype(jnp.bfloat16), b.astype(jnp.bfloat16),
                       preferred_element_type=jnp.float32)

    h0, c0 = h
    x_tm = jnp.transpose(x, (1, 0, 2))
    S, B, _ = x_tm.shape
    layer_in = x_tm
    h_finals, c_finals = [], []
    for l, (w_ih, w_hh, b) in enumerate(ref_params["lstm"]):
        H = w_hh.shape[1]
        gx = bdot(layer_in.reshape(S * B, -1), w_ih.T).reshape(S, B, 4 * H) + b
        hs, cs = h0[l], c0[l]
        outs = []
        for t in range(S):
            gates = gx[t] + bdot(hs, w_hh.T)
            i_g = jax.nn.sigmoid(gates[:, 0 * H:1 * H])
            f_g = jax.nn.sigmoid(gates[:, 1 * H:2 * H])
            g_g = jnp.tanh(gates[:, 2 * H:3 * H])
            o_g = jax.nn.sigmoid(gates[:, 3 * H:4 * H])
            cs = f_g * cs + i_g * g_g
            hs = o_g * jnp.tanh(cs)
            outs.append(hs)
        layer_in = jnp.stack(outs, axis=0)
        h_finals.append(hs)
        c_finals.append(cs)
    out = bdot(jnp.maximum(h_finals[-1], 0.0), ref_params["fc_w"].T) + ref_params["fc_b"]
    return out, (jnp.stack(h_finals), jnp.stack(c_finals))


if __name__ == "__main__":
    # H=128 keeps every gate slice lane-dense (full 128-lane vregs); B=8 fills sublanes.
    B, S, D, H, O, L = 8, 8, 16, 128, 4, 2

    key = jax.random.PRNGKey(0)
    kx, kp = jax.random.split(key)
    x = jax.random.normal(kx, (B, S, D), jnp.float32)
    h0 = jnp.zeros((L, B, H), jnp.float32)   # init_hidden
    c0 = jnp.zeros((L, B, H), jnp.float32)
    kern_params, ref_params = init_params(kp, D, H, O, L)

    fwd = jax.jit(lstmnet_forward)
    out, (h_n, c_n) = fwd(x, (h0, c0), kern_params)
    out = jax.block_until_ready(out)
    h_n = jax.block_until_ready(h_n)
    c_n = jax.block_until_ready(c_n)

    ref_out, (ref_h, ref_c) = reference_forward(x, (h0, c0), ref_params)
    assert out.shape == (B, O) and h_n.shape == (L, B, H) and c_n.shape == (L, B, H)
    assert jnp.allclose(out, ref_out, atol=2e-3, rtol=2e-3)
    assert jnp.allclose(h_n, ref_h, atol=2e-3, rtol=2e-3)
    assert jnp.allclose(c_n, ref_c, atol=2e-3, rtol=2e-3)

    print("KERNEL_OK")
</pallas_src>

<mosaic_0001>
module attributes {stable_mosaic.version = 11 : i64} {
  func.func @lstm_seq_kernel(%arg0: i32, %arg1: memref<8x8x16xf32, #tpu.memory_space<vmem>>, %arg2: memref<8x128xf32, #tpu.memory_space<vmem>>, %arg3: memref<8x128xf32, #tpu.memory_space<vmem>>, %arg4: memref<16x512xbf16, #tpu.memory_space<vmem>>, %arg5: memref<128x512xbf16, #tpu.memory_space<vmem>>, %arg6: memref<1x512xf32, #tpu.memory_space<vmem>>, %arg7: memref<8x8x128xbf16, #tpu.memory_space<vmem>>, %arg8: memref<8x128xf32, #tpu.memory_space<vmem>>, %arg9: memref<8x128xf32, #tpu.memory_space<vmem>>, %arg10: memref<8x128xf32, #tpu.memory_space<vmem>>, %arg11: memref<8x128xf32, #tpu.memory_space<vmem>>, %arg12: memref<64x512xf32, #tpu.memory_space<vmem>>) attributes {dimension_semantics = [#tpu.dimension_semantics<arbitrary>], iteration_bounds = array<i64: 1>, scalar_prefetch = 0 : i64, scratch_operands = 3 : i64, tpu.core_type = #tpu.core_type<tc>, window_params = [{transform_indices = @transform_0, window_bounds = array<i64: 8, 8, 16>}, {pipeline_mode = #tpu.pipeline_mode<synchronous>, transform_indices = @transform_1, window_bounds = array<i64: 8, 128>}, {pipeline_mode = #tpu.pipeline_mode<synchronous>, transform_indices = @transform_2, window_bounds = array<i64: 8, 128>}, {pipeline_mode = #tpu.pipeline_mode<synchronous>, transform_indices = @transform_3, window_bounds = array<i64: 16, 512>}, {pipeline_mode = #tpu.pipeline_mode<synchronous>, transform_indices = @transform_4, window_bounds = array<i64: 128, 512>}, {pipeline_mode = #tpu.pipeline_mode<synchronous>, transform_indices = @transform_5, window_bounds = array<i64: 1, 512>}, {transform_indices = @transform_6, window_bounds = array<i64: 8, 8, 128>}, {pipeline_mode = #tpu.pipeline_mode<synchronous>, transform_indices = @transform_7, window_bounds = array<i64: 8, 128>}, {pipeline_mode = #tpu.pipeline_mode<synchronous>, transform_indices = @transform_8, window_bounds = array<i64: 8, 128>}]} {
    %c0_i32 = arith.constant 0 : i32
    %0 = arith.cmpi eq, %arg0, %c0_i32 : i32
    %1 = arith.extui %0 : i1 to i32
    %c0_i32_0 = arith.constant 0 : i32
    %2 = arith.cmpi ne, %1, %c0_i32_0 : i32
    scf.if %2 {
      %c0_68 = arith.constant 0 : index
      %c0_69 = arith.constant 0 : index
      %245 = vector.load %arg2[%c0_68, %c0_69] : memref<8x128xf32, #tpu.memory_space<vmem>>, vector<8x128xf32>
      %c0_70 = arith.constant 0 : index
      %c0_71 = arith.constant 0 : index
      %246 = vector.load %arg10[%c0_70, %c0_71] : memref<8x128xf32, #tpu.memory_space<vmem>>, vector<8x128xf32>
      tpu.vector_store %arg10[%c0_70, %c0_71], %245 {strides = array<i32>} : memref<8x128xf32, #tpu.memory_space<vmem>>, vector<8x128xf32>,
      %c0_72 = arith.constant 0 : index
      %c0_73 = arith.constant 0 : index
      %247 = vector.load %arg3[%c0_72, %c0_73] : memref<8x128xf32, #tpu.memory_space<vmem>>, vector<8x128xf32>
      %c0_74 = arith.constant 0 : index
      %c0_75 = arith.constant 0 : index
      %248 = vector.load %arg11[%c0_74, %c0_75] : memref<8x128xf32, #tpu.memory_space<vmem>>, vector<8x128xf32>
      tpu.vector_store %arg11[%c0_74, %c0_75], %247 {strides = array<i32>} : memref<8x128xf32, #tpu.memory_space<vmem>>, vector<8x128xf32>,
    } else {
    }
    %c0 = arith.constant 0 : index
    %c0_1 = arith.constant 0 : index
    %3 = vector.load %arg10[%c0, %c0_1] : memref<8x128xf32, #tpu.memory_space<vmem>>, vector<8x128xf32>
    %c0_2 = arith.constant 0 : index
    %c0_3 = arith.constant 0 : index
    %4 = vector.load %arg11[%c0_2, %c0_3] : memref<8x128xf32, #tpu.memory_space<vmem>>, vector<8x128xf32>
    %c0_4 = arith.constant 0 : index
    %c0_5 = arith.constant 0 : index
    %c0_6 = arith.constant 0 : index
    %5 = vector.load %arg1[%c0_4, %c0_5, %c0_6] : memref<8x8x16xf32, #tpu.memory_space<vmem>>, vector<8x8x16xf32>
    %6 = vector.shape_cast %5 : vector<8x8x16xf32> to vector<64x16xf32>
    %7 = arith.truncf %6 : vector<64x16xf32> to vector<64x16xbf16>
    %c0_7 = arith.constant 0 : index
    %c0_8 = arith.constant 0 : index
    %8 = vector.load %arg4[%c0_7, %c0_8] : memref<16x512xbf16, #tpu.memory_space<vmem>>, vector<16x512xbf16>
    %cst = arith.constant dense<0.000000e+00> : vector<64x512xf32>
    %9 = tpu.matmul %7, %8, %cst {dimension_numbers = #tpu.dot_dimension_numbers<[1], [0], [0], [1], [0, 0, 1, 1], [], []>} : vector<64x16xbf16>, vector<16x512xbf16>, vector<64x512xf32> -> vector<64x512xf32>
    %c0_9 = arith.constant 0 : index
    %c0_10 = arith.constant 0 : index
    %10 = vector.load %arg6[%c0_9, %c0_10] : memref<1x512xf32, #tpu.memory_space<vmem>>, vector<1x512xf32>
    %11 = vector.broadcast %10 : vector<1x512xf32> to vector<64x512xf32>
    %12 = arith.addf %9, %11 : vector<64x512xf32>
    %c0_11 = arith.constant 0 : index
    %c0_12 = arith.constant 0 : index
    %13 = vector.load %arg12[%c0_11, %c0_12] : memref<64x512xf32, #tpu.memory_space<vmem>>, vector<64x512xf32>
    tpu.vector_store %arg12[%c0_11, %c0_12], %12 {strides = array<i32>} : memref<64x512xf32, #tpu.memory_space<vmem>>, vector<64x512xf32>,
    %c0_13 = arith.constant 0 : index
    %c0_14 = arith.constant 0 : index
    %14 = vector.load %arg5[%c0_13, %c0_14] : memref<128x512xbf16, #tpu.memory_space<vmem>>, vector<128x512xbf16>
    %c0_i32_15 = arith.constant 0 : i32
    %c8_i32 = arith.constant 8 : i32
    %15 = arith.muli %c0_i32_15, %c8_i32 : i32
    %16 = tpu.assume_multiple %15, 8 : i32
    %17 = arith.index_cast %16 : i32 to index
    %c0_16 = arith.constant 0 : index
    %18 = vector.load %arg12[%17, %c0_16] : memref<64x512xf32, #tpu.memory_space<vmem>>, vector<8x512xf32>
    %19 = arith.truncf %3 : vector<8x128xf32> to vector<8x128xbf16>
    %cst_17 = arith.constant dense<0.000000e+00> : vector<8x512xf32>
    %20 = tpu.matmul %19, %14, %cst_17 {dimension_numbers = #tpu.dot_dimension_numbers<[1], [0], [0], [1], [0, 0, 1, 1], [], []>} : vector<8x128xbf16>, vector<128x512xbf16>, vector<8x512xf32> -> vector<8x512xf32>
    %21 = arith.addf %18, %20 : vector<8x512xf32>
    %22 = vector.extract_strided_slice %21 {offsets = [0, 0], sizes = [8, 384], strides = [1, 1]} : vector<8x512xf32> to vector<8x384xf32>
    %23 = arith.negf %22 : vector<8x384xf32>
    %24 = math.exp %23 : vector<8x384xf32>
    %cst_18 = arith.constant 1.000000e+00 : f32
    %25 = vector.broadcast %cst_18 : f32 to vector<8x384xf32>
    %26 = arith.addf %25, %24 : vector<8x384xf32>
    %27 = arith.divf %25, %26 : vector<8x384xf32>
    %28 = vector.extract_strided_slice %27 {offsets = [0, 0], sizes = [8, 128], strides = [1, 1]} : vector<8x384xf32> to vector<8x128xf32>
    %29 = vector.extract_strided_slice %27 {offsets = [0, 128], sizes = [8, 128], strides = [1, 1]} : vector<8x384xf32> to vector<8x128xf32>
    %30 = vector.extract_strided_slice %27 {offsets = [0, 256], sizes = [8, 128], strides = [1, 1]} : vector<8x384xf32> to vector<8x128xf32>
    %31 = vector.extract_strided_slice %21 {offsets = [0, 384], sizes = [8, 128], strides = [1, 1]} : vector<8x512xf32> to vector<8x128xf32>
    %32 = math.tanh %31 : vector<8x128xf32>
    %33 = arith.mulf %29, %4 : vector<8x128xf32>
    %34 = arith.mulf %28, %32 : vector<8x128xf32>
    %35 = arith.addf %33, %34 : vector<8x128xf32>
    %36 = math.tanh %35 : vector<8x128xf32>
    %37 = arith.mulf %30, %36 : vector<8x128xf32>
    %38 = arith.truncf %37 : vector<8x128xf32> to vector<8x128xbf16>
    %39 = arith.index_cast %c0_i32_15 : i32 to index
    %c0_19 = arith.constant 0 : index
    %c0_20 = arith.constant 0 : index
    %40 = vector.load %arg7[%39, %c0_19, %c0_20] : memref<8x8x128xbf16, #tpu.memory_space<vmem>>, vector<1x8x128xbf16>
    %41 = vector.shape_cast %40 : vector<1x8x128xbf16> to vector<8x128xbf16>
    %42 = vector.shape_cast %38 : vector<8x128xbf16> to vector<1x8x128xbf16>
    tpu.vector_store %arg7[%39, %c0_19, %c0_20], %42 {strides = array<i32>} : memref<8x8x128xbf16, #tpu.memory_space<vmem>>, vector<1x8x128xbf16>,
    %c1_i32 = arith.constant 1 : i32
    %c8_i32_21 = arith.constant 8 : i32
    %43 = arith.muli %c1_i32, %c8_i32_21 : i32
    %44 = tpu.assume_multiple %43, 8 : i32
    %45 = arith.index_cast %44 : i32 to index
    %c0_22 = arith.constant 0 : index
    %46 = vector.load %arg12[%45, %c0_22] : memref<64x512xf32, #tpu.memory_space<vmem>>, vector<8x512xf32>
    %47 = arith.truncf %37 : vector<8x128xf32> to vector<8x128xbf16>
    %cst_23 = arith.constant dense<0.000000e+00> : vector<8x512xf32>
    %48 = tpu.matmul %47, %14, %cst_23 {dimension_numbers = #tpu.dot_dimension_numbers<[1], [0], [0], [1], [0, 0, 1, 1], [], []>} : vector<8x128xbf16>, vector<128x512xbf16>, vector<8x512xf32> -> vector<8x512xf32>
    %49 = arith.addf %46, %48 : vector<8x512xf32>
    %50 = vector.extract_strided_slice %49 {offsets = [0, 0], sizes = [8, 384], strides = [1, 1]} : vector<8x512xf32> to vector<8x384xf32>
    %51 = arith.negf %50 : vector<8x384xf32>
    %52 = math.exp %51 : vector<8x384xf32>
    %cst_24 = arith.constant 1.000000e+00 : f32
    %53 = vector.broadcast %cst_24 : f32 to vector<8x384xf32>
    %54 = arith.addf %53, %52 : vector<8x384xf32>
    %55 = arith.divf %53, %54 : vector<8x384xf32>
    %56 = vector.extract_strided_slice %55 {offsets = [0, 0], sizes = [8, 128], strides = [1, 1]} : vector<8x384xf32> to vector<8x128xf32>
    %57 = vector.extract_strided_slice %55 {offsets = [0, 128], sizes = [8, 128], strides = [1, 1]} : vector<8x384xf32> to vector<8x128xf32>
    %58 = vector.extract_strided_slice %55 {offsets = [0, 256], sizes = [8, 128], strides = [1, 1]} : vector<8x384xf32> to vector<8x128xf32>
    %59 = vector.extract_strided_slice %49 {offsets = [0, 384], sizes = [8, 128], strides = [1, 1]} : vector<8x512xf32> to vector<8x128xf32>
    %60 = math.tanh %59 : vector<8x128xf32>
    %61 = arith.mulf %57, %35 : vector<8x128xf32>
    %62 = arith.mulf %56, %60 : vector<8x128xf32>
    %63 = arith.addf %61, %62 : vector<8x128xf32>
    %64 = math.tanh %63 : vector<8x128xf32>
    %65 = arith.mulf %58, %64 : vector<8x128xf32>
    %66 = arith.truncf %65 : vector<8x128xf32> to vector<8x128xbf16>
    %67 = arith.index_cast %c1_i32 : i32 to index
    %c0_25 = arith.constant 0 : index
    %c0_26 = arith.constant 0 : index
    %68 = vector.load %arg7[%67, %c0_25, %c0_26] : memref<8x8x128xbf16, #tpu.memory_space<vmem>>, vector<1x8x128xbf16>
    %69 = vector.shape_cast %68 : vector<1x8x128xbf16> to vector<8x128xbf16>
    %70 = vector.shape_cast %66 : vector<8x128xbf16> to vector<1x8x128xbf16>
    tpu.vector_store %arg7[%67, %c0_25, %c0_26], %70 {strides = array<i32>} : memref<8x8x128xbf16, #tpu.memory_space<vmem>>, vector<1x8x128xbf16>,
    %c2_i32 = arith.constant 2 : i32
    %c8_i32_27 = arith.constant 8 : i32
    %71 = arith.muli %c2_i32, %c8_i32_27 : i32
    %72 = tpu.assume_multiple %71, 8 : i32
    %73 = arith.index_cast %72 : i32 to index
    %c0_28 = arith.constant 0 : index
    %74 = vector.load %arg12[%73, %c0_28] : memref<64x512xf32, #tpu.memory_space<vmem>>, vector<8x512xf32>
    %75 = arith.truncf %65 : vector<8x128xf32> to vector<8x128xbf16>
    %cst_29 = arith.constant dense<0.000000e+00> : vector<8x512xf32>
    %76 = tpu.matmul %75, %14, %cst_29 {dimension_numbers = #tpu.dot_dimension_numbers<[1], [0], [0], [1], [0, 0, 1, 1], [], []>} : vector<8x128xbf16>, vector<128x512xbf16>, vector<8x512xf32> -> vector<8x512xf32>
    %77 = arith.addf %74, %76 : vector<8x512xf32>
    %78 = vector.extract_strided_slice %77 {offsets = [0, 0], sizes = [8, 384], strides = [1, 1]} : vector<8x512xf32> to vector<8x384xf32>
    %79 = arith.negf %78 : vector<8x384xf32>
    %80 = math.exp %79 : vector<8x384xf32>
    %cst_30 = arith.constant 1.000000e+00 : f32
    %81 = vector.broadcast %cst_30 : f32 to vector<8x384xf32>
    %82 = arith.addf %81, %80 : vector<8x384xf32>
    %83 = arith.divf %81, %82 : vector<8x384xf32>
    %84 = vector.extract_strided_slice %83 {offsets = [0, 0], sizes = [8, 128], strides = [1, 1]} : vector<8x384xf32> to vector<8x128xf32>
    %85 = vector.extract_strided_slice %83 {offsets = [0, 128], sizes = [8, 128], strides = [1, 1]} : vector<8x384xf32> to vector<8x128xf32>
    %86 = vector.extract_strided_slice %83 {offsets = [0, 256], sizes = [8, 128], strides = [1, 1]} : vector<8x384xf32> to vector<8x128xf32>
    %87 = vector.extract_strided_slice %77 {offsets = [0, 384], sizes = [8, 128], strides = [1, 1]} : vector<8x512xf32> to vector<8x128xf32>
    %88 = math.tanh %87 : vector<8x128xf32>
    %89 = arith.mulf %85, %63 : vector<8x128xf32>
    %90 = arith.mulf %84, %88 : vector<8x128xf32>
    %91 = arith.addf %89, %90 : vector<8x128xf32>
    %92 = math.tanh %91 : vector<8x128xf32>
    %93 = arith.mulf %86, %92 : vector<8x128xf32>
    %94 = arith.truncf %93 : vector<8x128xf32> to vector<8x128xbf16>
    %95 = arith.index_cast %c2_i32 : i32 to index
    %c0_31 = arith.constant 0 : index
    %c0_32 = arith.constant 0 : index
    %96 = vector.load %arg7[%95, %c0_31, %c0_32] : memref<8x8x128xbf16, #tpu.memory_space<vmem>>, vector<1x8x128xbf16>
    %97 = vector.shape_cast %96 : vector<1x8x128xbf16> to vector<8x128xbf16>
    %98 = vector.shape_cast %94 : vector<8x128xbf16> to vector<1x8x128xbf16>
    tpu.vector_store %arg7[%95, %c0_31, %c0_32], %98 {strides = array<i32>} : memref<8x8x128xbf16, #tpu.memory_space<vmem>>, vector<1x8x128xbf16>,
    %c3_i32 = arith.constant 3 : i32
    %c8_i32_33 = arith.constant 8 : i32
    %99 = arith.muli %c3_i32, %c8_i32_33 : i32
    %100 = tpu.assume_multiple %99, 8 : i32
    %101 = arith.index_cast %100 : i32 to index
    %c0_34 = arith.constant 0 : index
    %102 = vector.load %arg12[%101, %c0_34] : memref<64x512xf32, #tpu.memory_space<vmem>>, vector<8x512xf32>
    %103 = arith.truncf %93 : vector<8x128xf32> to vector<8x128xbf16>
    %cst_35 = arith.constant dense<0.000000e+00> : vector<8x512xf32>
    %104 = tpu.matmul %103, %14, %cst_35 {dimension_numbers = #tpu.dot_dimension_numbers<[1], [0], [0], [1], [0, 0, 1, 1], [], []>} : vector<8x128xbf16>, vector<128x512xbf16>, vector<8x512xf32> -> vector<8x512xf32>
    %105 = arith.addf %102, %104 : vector<8x512xf32>
    %106 = vector.extract_strided_slice %105 {offsets = [0, 0], sizes = [8, 384], strides = [1, 1]} : vector<8x512xf32> to vector<8x384xf32>
    %107 = arith.negf %106 : vector<8x384xf32>
    %108 = math.exp %107 : vector<8x384xf32>
    %cst_36 = arith.constant 1.000000e+00 : f32
    %109 = vector.broadcast %cst_36 : f32 to vector<8x384xf32>
    %110 = arith.addf %109, %108 : vector<8x384xf32>
    %111 = arith.divf %109, %110 : vector<8x384xf32>
    %112 = vector.extract_strided_slice %111 {offsets = [0, 0], sizes = [8, 128], strides = [1, 1]} : vector<8x384xf32> to vector<8x128xf32>
    %113 = vector.extract_strided_slice %111 {offsets = [0, 128], sizes = [8, 128], strides = [1, 1]} : vector<8x384xf32> to vector<8x128xf32>
    %114 = vector.extract_strided_slice %111 {offsets = [0, 256], sizes = [8, 128], strides = [1, 1]} : vector<8x384xf32> to vector<8x128xf32>
    %115 = vector.extract_strided_slice %105 {offsets = [0, 384], sizes = [8, 128], strides = [1, 1]} : vector<8x512xf32> to vector<8x128xf32>
    %116 = math.tanh %115 : vector<8x128xf32>
    %117 = arith.mulf %113, %91 : vector<8x128xf32>
    %118 = arith.mulf %112, %116 : vector<8x128xf32>
    %119 = arith.addf %117, %118 : vector<8x128xf32>
    %120 = math.tanh %119 : vector<8x128xf32>
    %121 = arith.mulf %114, %120 : vector<8x128xf32>
    %122 = arith.truncf %121 : vector<8x128xf32> to vector<8x128xbf16>
    %123 = arith.index_cast %c3_i32 : i32 to index
    %c0_37 = arith.constant 0 : index
    %c0_38 = arith.constant 0 : index
    %124 = vector.load %arg7[%123, %c0_37, %c0_38] : memref<8x8x128xbf16, #tpu.memory_space<vmem>>, vector<1x8x128xbf16>
    %125 = vector.shape_cast %124 : vector<1x8x128xbf16> to vector<8x128xbf16>
    %126 = vector.shape_cast %122 : vector<8x128xbf16> to vector<1x8x128xbf16>
    tpu.vector_store %arg7[%123, %c0_37, %c0_38], %126 {strides = array<i32>} : memref<8x8x128xbf16, #tpu.memory_space<vmem>>, vector<1x8x128xbf16>,
    %c4_i32 = arith.constant 4 : i32
    %c8_i32_39 = arith.constant 8 : i32
    %127 = arith.muli %c4_i32, %c8_i32_39 : i32
    %128 = tpu.assume_multiple %127, 8 : i32
    %129 = arith.index_cast %128 : i32 to index
    %c0_40 = arith.constant 0 : index
    %130 = vector.load %arg12[%129, %c0_40] : memref<64x512xf32, #tpu.memory_space<vmem>>, vector<8x512xf32>
    %131 = arith.truncf %121 : vector<8x128xf32> to vector<8x128xbf16>
    %cst_41 = arith.constant dense<0.000000e+00> : vector<8x512xf32>
    %132 = tpu.matmul %131, %14, %cst_41 {dimension_numbers = #tpu.dot_dimension_numbers<[1], [0], [0], [1], [0, 0, 1, 1], [], []>} : vector<8x128xbf16>, vector<128x512xbf16>, vector<8x512xf32> -> vector<8x512xf32>
    %133 = arith.addf %130, %132 : vector<8x512xf32>
    %134 = vector.extract_strided_slice %133 {offsets = [0, 0], sizes = [8, 384], strides = [1, 1]} : vector<8x512xf32> to vector<8x384xf32>
    %135 = arith.negf %134 : vector<8x384xf32>
    %136 = math.exp %135 : vector<8x384xf32>
    %cst_42 = arith.constant 1.000000e+00 : f32
    %137 = vector.broadcast %cst_42 : f32 to vector<8x384xf32>
    %138 = arith.addf %137, %136 : vector<8x384xf32>
    %139 = arith.divf %137, %138 : vector<8x384xf32>
    %140 = vector.extract_strided_slice %139 {offsets = [0, 0], sizes = [8, 128], strides = [1, 1]} : vector<8x384xf32> to vector<8x128xf32>
    %141 = vector.extract_strided_slice %139 {offsets = [0, 128], sizes = [8, 128], strides = [1, 1]} : vector<8x384xf32> to vector<8x128xf32>
    %142 = vector.extract_strided_slice %139 {offsets = [0, 256], sizes = [8, 128], strides = [1, 1]} : vector<8x384xf32> to vector<8x128xf32>
    %143 = vector.extract_strided_slice %133 {offsets = [0, 384], sizes = [8, 128], strides = [1, 1]} : vector<8x512xf32> to vector<8x128xf32>
    %144 = math.tanh %143 : vector<8x128xf32>
    %145 = arith.mulf %141, %119 : vector<8x128xf32>
    %146 = arith.mulf %140, %144 : vector<8x128xf32>
    %147 = arith.addf %145, %146 : vector<8x128xf32>
    %148 = math.tanh %147 : vector<8x128xf32>
    %149 = arith.mulf %142, %148 : vector<8x128xf32>
    %150 = arith.truncf %149 : vector<8x128xf32> to vector<8x128xbf16>
    %151 = arith.index_cast %c4_i32 : i32 to index
    %c0_43 = arith.constant 0 : index
    %c0_44 = arith.constant 0 : index
    %152 = vector.load %arg7[%151, %c0_43, %c0_44] : memref<8x8x128xbf16, #tpu.memory_space<vmem>>, vector<1x8x128xbf16>
    %153 = vector.shape_cast %152 : vector<1x8x128xbf16> to vector<8x128xbf16>
    %154 = vector.shape_cast %150 : vector<8x128xbf16> to vector<1x8x128xbf16>
    tpu.vector_store %arg7[%151, %c0_43, %c0_44], %154 {strides = array<i32>} : memref<8x8x128xbf16, #tpu.memory_space<vmem>>, vector<1x8x128xbf16>,
    %c5_i32 = arith.constant 5 : i32
    %c8_i32_45 = arith.constant 8 : i32
    %155 = arith.muli %c5_i32, %c8_i32_45 : i32
    %156 = tpu.assume_multiple %155, 8 : i32
    %157 = arith.index_cast %156 : i32 to index
    %c0_46 = arith.constant 0 : index
    %158 = vector.load %arg12[%157, %c0_46] : memref<64x512xf32, #tpu.memory_space<vmem>>, vector<8x512xf32>
    %159 = arith.truncf %149 : vector<8x128xf32> to vector<8x128xbf16>
    %cst_47 = arith.constant dense<0.000000e+00> : vector<8x512xf32>
    %160 = tpu.matmul %159, %14, %cst_47 {dimension_numbers = #tpu.dot_dimension_numbers<[1], [0], [0], [1], [0, 0, 1, 1], [], []>} : vector<8x128xbf16>, vector<128x512xbf16>, vector<8x512xf32> -> vector<8x512xf32>
    %161 = arith.addf %158, %160 : vector<8x512xf32>
    %162 = vector.extract_strided_slice %161 {offsets = [0, 0], sizes = [8, 384], strides = [1, 1]} : vector<8x512xf32> to vector<8x384xf32>
    %163 = arith.negf %162 : vector<8x384xf32>
    %164 = math.exp %163 : vector<8x384xf32>
    %cst_48 = arith.constant 1.000000e+00 : f32
    %165 = vector.broadcast %cst_48 : f32 to vector<8x384xf32>
    %166 = arith.addf %165, %164 : vector<8x384xf32>
    %167 = arith.divf %165, %166 : vector<8x384xf32>
    %168 = vector.extract_strided_slice %167 {offsets = [0, 0], sizes = [8, 128], strides = [1, 1]} : vector<8x384xf32> to vector<8x128xf32>
    %169 = vector.extract_strided_slice %167 {offsets = [0, 128], sizes = [8, 128], strides = [1, 1]} : vector<8x384xf32> to vector<8x128xf32>
    %170 = vector.extract_strided_slice %167 {offsets = [0, 256], sizes = [8, 128], strides = [1, 1]} : vector<8x384xf32> to vector<8x128xf32>
    %171 = vector.extract_strided_slice %161 {offsets = [0, 384], sizes = [8, 128], strides = [1, 1]} : vector<8x512xf32> to vector<8x128xf32>
    %172 = math.tanh %171 : vector<8x128xf32>
    %173 = arith.mulf %169, %147 : vector<8x128xf32>
    %174 = arith.mulf %168, %172 : vector<8x128xf32>
    %175 = arith.addf %173, %174 : vector<8x128xf32>
    %176 = math.tanh %175 : vector<8x128xf32>
    %177 = arith.mulf %170, %176 : vector<8x128xf32>
    %178 = arith.truncf %177 : vector<8x128xf32> to vector<8x128xbf16>
    %179 = arith.index_cast %c5_i32 : i32 to index
    %c0_49 = arith.constant 0 : index
    %c0_50 = arith.constant 0 : index
    %180 = vector.load %arg7[%179, %c0_49, %c0_50] : memref<8x8x128xbf16, #tpu.memory_space<vmem>>, vector<1x8x128xbf16>
    %181 = vector.shape_cast %180 : vector<1x8x128xbf16> to vector<8x128xbf16>
    %182 = vector.shape_cast %178 : vector<8x128xbf16> to vector<1x8x128xbf16>
    tpu.vector_store %arg7[%179, %c0_49, %c0_50], %182 {strides = array<i32>} : memref<8x8x128xbf16, #tpu.memory_space<vmem>>, vector<1x8x128xbf16>,
    %c6_i32 = arith.constant 6 : i32
    %c8_i32_51 = arith.constant 8 : i32
    %183 = arith.muli %c6_i32, %c8_i32_51 : i32
    %184 = tpu.assume_multiple %183, 8 : i32
    %185 = arith.index_cast %184 : i32 to index
    %c0_52 = arith.constant 0 : index
    %186 = vector.load %arg12[%185, %c0_52] : memref<64x512xf32, #tpu.memory_space<vmem>>, vector<8x512xf32>
    %187 = arith.truncf %177 : vector<8x128xf32> to vector<8x128xbf16>
    %cst_53 = arith.constant dense<0.000000e+00> : vector<8x512xf32>
    %188 = tpu.matmul %187, %14, %cst_53 {dimension_numbers = #tpu.dot_dimension_numbers<[1], [0], [0], [1], [0, 0, 1, 1], [], []>} : vector<8x128xbf16>, vector<128x512xbf16>, vector<8x512xf32> -> vector<8x512xf32>
    %189 = arith.addf %186, %188 : vector<8x512xf32>
    %190 = vector.extract_strided_slice %189 {offsets = [0, 0], sizes = [8, 384], strides = [1, 1]} : vector<8x512xf32> to vector<8x384xf32>
    %191 = arith.negf %190 : vector<8x384xf32>
    %192 = math.exp %191 : vector<8x384xf32>
    %cst_54 = arith.constant 1.000000e+00 : f32
    %193 = vector.broadcast %cst_54 : f32 to vector<8x384xf32>
    %194 = arith.addf %193, %192 : vector<8x384xf32>
    %195 = arith.divf %193, %194 : vector<8x384xf32>
    %196 = vector.extract_strided_slice %195 {offsets = [0, 0], sizes = [8, 128], strides = [1, 1]} : vector<8x384xf32> to vector<8x128xf32>
    %197 = vector.extract_strided_slice %195 {offsets = [0, 128], sizes = [8, 128], strides = [1, 1]} : vector<8x384xf32> to vector<8x128xf32>
    %198 = vector.extract_strided_slice %195 {offsets = [0, 256], sizes = [8, 128], strides = [1, 1]} : vector<8x384xf32> to vector<8x128xf32>
    %199 = vector.extract_strided_slice %189 {offsets = [0, 384], sizes = [8, 128], strides = [1, 1]} : vector<8x512xf32> to vector<8x128xf32>
    %200 = math.tanh %199 : vector<8x128xf32>
    %201 = arith.mulf %197, %175 : vector<8x128xf32>
    %202 = arith.mulf %196, %200 : vector<8x128xf32>
    %203 = arith.addf %201, %202 : vector<8x128xf32>
    %204 = math.tanh %203 : vector<8x128xf32>
    %205 = arith.mulf %198, %204 : vector<8x128xf32>
    %206 = arith.truncf %205 : vector<8x128xf32> to vector<8x128xbf16>
    %207 = arith.index_cast %c6_i32 : i32 to index
    %c0_55 = arith.constant 0 : index
    %c0_56 = arith.constant 0 : index
    %208 = vector.load %arg7[%207, %c0_55, %c0_56] : memref<8x8x128xbf16, #tpu.memory_space<vmem>>, vector<1x8x128xbf16>
    %209 = vector.shape_cast %208 : vector<1x8x128xbf16> to vector<8x128xbf16>
    %210 = vector.shape_cast %206 : vector<8x128xbf16> to vector<1x8x128xbf16>
    tpu.vector_store %arg7[%207, %c0_55, %c0_56], %210 {strides = array<i32>} : memref<8x8x128xbf16, #tpu.memory_space<vmem>>, vector<1x8x128xbf16>,
    %c7_i32 = arith.constant 7 : i32
    %c8_i32_57 = arith.constant 8 : i32
    %211 = arith.muli %c7_i32, %c8_i32_57 : i32
    %212 = tpu.assume_multiple %211, 8 : i32
    %213 = arith.index_cast %212 : i32 to index
    %c0_58 = arith.constant 0 : index
    %214 = vector.load %arg12[%213, %c0_58] : memref<64x512xf32, #tpu.memory_space<vmem>>, vector<8x512xf32>
    %215 = arith.truncf %205 : vector<8x128xf32> to vector<8x128xbf16>
    %cst_59 = arith.constant dense<0.000000e+00> : vector<8x512xf32>
    %216 = tpu.matmul %215, %14, %cst_59 {dimension_numbers = #tpu.dot_dimension_numbers<[1], [0], [0], [1], [0, 0, 1, 1], [], []>} : vector<8x128xbf16>, vector<128x512xbf16>, vector<8x512xf32> -> vector<8x512xf32>
    %217 = arith.addf %214, %216 : vector<8x512xf32>
    %218 = vector.extract_strided_slice %217 {offsets = [0, 0], sizes = [8, 384], strides = [1, 1]} : vector<8x512xf32> to vector<8x384xf32>
    %219 = arith.negf %218 : vector<8x384xf32>
    %220 = math.exp %219 : vector<8x384xf32>
    %cst_60 = arith.constant 1.000000e+00 : f32
    %221 = vector.broadcast %cst_60 : f32 to vector<8x384xf32>
    %222 = arith.addf %221, %220 : vector<8x384xf32>
    %223 = arith.divf %221, %222 : vector<8x384xf32>
    %224 = vector.extract_strided_slice %223 {offsets = [0, 0], sizes = [8, 128], strides = [1, 1]} : vector<8x384xf32> to vector<8x128xf32>
    %225 = vector.extract_strided_slice %223 {offsets = [0, 128], sizes = [8, 128], strides = [1, 1]} : vector<8x384xf32> to vector<8x128xf32>
    %226 = vector.extract_strided_slice %223 {offsets = [0, 256], sizes = [8, 128], strides = [1, 1]} : vector<8x384xf32> to vector<8x128xf32>
    %227 = vector.extract_strided_slice %217 {offsets = [0, 384], sizes = [8, 128], strides = [1, 1]} : vector<8x512xf32> to vector<8x128xf32>
    %228 = math.tanh %227 : vector<8x128xf32>
    %229 = arith.mulf %225, %203 : vector<8x128xf32>
    %230 = arith.mulf %224, %228 : vector<8x128xf32>
    %231 = arith.addf %229, %230 : vector<8x128xf32>
    %232 = math.tanh %231 : vector<8x128xf32>
    %233 = arith.mulf %226, %232 : vector<8x128xf32>
    %234 = arith.truncf %233 : vector<8x128xf32> to vector<8x128xbf16>
    %235 = arith.index_cast %c7_i32 : i32 to index
    %c0_61 = arith.constant 0 : index
    %c0_62 = arith.constant 0 : index
    %236 = vector.load %arg7[%235, %c0_61, %c0_62] : memref<8x8x128xbf16, #tpu.memory_space<vmem>>, vector<1x8x128xbf16>
    %237 = vector.shape_cast %236 : vector<1x8x128xbf16> to vector<8x128xbf16>
    %238 = vector.shape_cast %234 : vector<8x128xbf16> to vector<1x8x128xbf16>
    tpu.vector_store %arg7[%235, %c0_61, %c0_62], %238 {strides = array<i32>} : memref<8x8x128xbf16, #tpu.memory_space<vmem>>, vector<1x8x128xbf16>,
    %c8_i32_63 = arith.constant 8 : i32
    %c0_i32_64 = arith.constant 0 : i32
    %239 = arith.cmpi ne, %arg0, %c0_i32_64 : i32
    %240 = arith.extui %239 : i1 to i32
    %c0_i32_65 = arith.constant 0 : i32
    %241 = arith.cmpi ne, %240, %c0_i32_65 : i32
    scf.if %241 {
      %c0_68 = arith.constant 0 : index
      %c0_69 = arith.constant 0 : index
      %245 = vector.load %arg10[%c0_68, %c0_69] : memref<8x128xf32, #tpu.memory_space<vmem>>, vector<8x128xf32>
      tpu.vector_store %arg10[%c0_68, %c0_69], %233 {strides = array<i32>} : memref<8x128xf32, #tpu.memory_space<vmem>>, vector<8x128xf32>,
      %c0_70 = arith.constant 0 : index
      %c0_71 = arith.constant 0 : index
      %246 = vector.load %arg11[%c0_70, %c0_71] : memref<8x128xf32, #tpu.memory_space<vmem>>, vector<8x128xf32>
      tpu.vector_store %arg11[%c0_70, %c0_71], %231 {strides = array<i32>} : memref<8x128xf32, #tpu.memory_space<vmem>>, vector<8x128xf32>,
    } else {
    }
    %c0_i32_66 = arith.constant 0 : i32
    %242 = arith.cmpi eq, %arg0, %c0_i32_66 : i32
    %243 = arith.extui %242 : i1 to i32
    %c0_i32_67 = arith.constant 0 : i32
    %244 = arith.cmpi ne, %243, %c0_i32_67 : i32
    scf.if %244 {
      %c0_68 = arith.constant 0 : index
      %c0_69 = arith.constant 0 : index
      %245 = vector.load %arg8[%c0_68, %c0_69] : memref<8x128xf32, #tpu.memory_space<vmem>>, vector<8x128xf32>
      tpu.vector_store %arg8[%c0_68, %c0_69], %233 {strides = array<i32>} : memref<8x128xf32, #tpu.memory_space<vmem>>, vector<8x128xf32>,
      %c0_70 = arith.constant 0 : index
      %c0_71 = arith.constant 0 : index
      %246 = vector.load %arg9[%c0_70, %c0_71] : memref<8x128xf32, #tpu.memory_space<vmem>>, vector<8x128xf32>
      tpu.vector_store %arg9[%c0_70, %c0_71], %231 {strides = array<i32>} : memref<8x128xf32, #tpu.memory_space<vmem>>, vector<8x128xf32>,
    } else {
    }
    return
  }
  func.func @transform_0(%arg0: i32) -> (i32, i32, i32) {
    %c0_i32 = arith.constant 0 : i32
    %c0_i32_0 = arith.constant 0 : i32
    %c0_i32_1 = arith.constant 0 : i32
    return %arg0, %c0_i32, %c0_i32_0 : i32, i32, i32
  }
  func.func @transform_1(%arg0: i32) -> (i32, i32) {
    %c0_i32 = arith.constant 0 : i32
    %c0_i32_0 = arith.constant 0 : i32
    %c0_i32_1 = arith.constant 0 : i32
    return %c0_i32, %c0_i32_0 : i32, i32
  }
  func.func @transform_2(%arg0: i32) -> (i32, i32) {
    %c0_i32 = arith.constant 0 : i32
    %c0_i32_0 = arith.constant 0 : i32
    %c0_i32_1 = arith.constant 0 : i32
    return %c0_i32, %c0_i32_0 : i32, i32
  }
  func.func @transform_3(%arg0: i32) -> (i32, i32) {
    %c0_i32 = arith.constant 0 : i32
    %c0_i32_0 = arith.constant 0 : i32
    %c0_i32_1 = arith.constant 0 : i32
    return %c0_i32, %c0_i32_0 : i32, i32
  }
  func.func @transform_4(%arg0: i32) -> (i32, i32) {
    %c0_i32 = arith.constant 0 : i32
    %c0_i32_0 = arith.constant 0 : i32
    %c0_i32_1 = arith.constant 0 : i32
    return %c0_i32, %c0_i32_0 : i32, i32
  }
  func.func @transform_5(%arg0: i32) -> (i32, i32) {
    %c0_i32 = arith.constant 0 : i32
    %c0_i32_0 = arith.constant 0 : i32
    %c0_i32_1 = arith.constant 0 : i32
    return %c0_i32, %c0_i32_0 : i32, i32
  }
  func.func @transform_6(%arg0: i32) -> (i32, i32, i32) {
    %c0_i32 = arith.constant 0 : i32
    %c0_i32_0 = arith.constant 0 : i32
    %c0_i32_1 = arith.constant 0 : i32
    return %arg0, %c0_i32, %c0_i32_0 : i32, i32, i32
  }
  func.func @transform_7(%arg0: i32) -> (i32, i32) {
    %c0_i32 = arith.constant 0 : i32
    %c0_i32_0 = arith.constant 0 : i32
    %c0_i32_1 = arith.constant 0 : i32
    return %c0_i32, %c0_i32_0 : i32, i32
  }
  func.func @transform_8(%arg0: i32) -> (i32, i32) {
    %c0_i32 = arith.constant 0 : i32
    %c0_i32_0 = arith.constant 0 : i32
    %c0_i32_1 = arith.constant 0 : i32
    return %c0_i32, %c0_i32_0 : i32, i32
  }
}

module attributes {stable_mosaic.version = 11 : i64} {
  func.func @lstm_seq_fc_kernel(%arg0: i32, %arg1: memref<8x8x128xbf16, #tpu.memory_space<vmem>>, %arg2: memref<8x128xf32, #tpu.memory_space<vmem>>, %arg3: memref<8x128xf32, #tpu.memory_space<vmem>>, %arg4: memref<128x512xbf16, #tpu.memory_space<vmem>>, %arg5: memref<128x512xbf16, #tpu.memory_space<vmem>>, %arg6: memref<1x512xf32, #tpu.memory_space<vmem>>, %arg7: memref<128x4xbf16, #tpu.memory_space<vmem>>, %arg8: memref<1x4xf32, #tpu.memory_space<vmem>>, %arg9: memref<8x128xf32, #tpu.memory_space<vmem>>, %arg10: memref<8x128xf32, #tpu.memory_space<vmem>>, %arg11: memref<8x4xf32, #tpu.memory_space<vmem>>, %arg12: memref<8x128xf32, #tpu.memory_space<vmem>>, %arg13: memref<8x128xf32, #tpu.memory_space<vmem>>, %arg14: memref<64x512xf32, #tpu.memory_space<vmem>>) attributes {dimension_semantics = [#tpu.dimension_semantics<arbitrary>], iteration_bounds = array<i64: 1>, scalar_prefetch = 0 : i64, scratch_operands = 3 : i64, tpu.core_type = #tpu.core_type<tc>, window_params = [{transform_indices = @transform_0, window_bounds = array<i64: 8, 8, 128>}, {pipeline_mode = #tpu.pipeline_mode<synchronous>, transform_indices = @transform_1, window_bounds = array<i64: 8, 128>}, {pipeline_mode = #tpu.pipeline_mode<synchronous>, transform_indices = @transform_2, window_bounds = array<i64: 8, 128>}, {pipeline_mode = #tpu.pipeline_mode<synchronous>, transform_indices = @transform_3, window_bounds = array<i64: 128, 512>}, {pipeline_mode = #tpu.pipeline_mode<synchronous>, transform_indices = @transform_4, window_bounds = array<i64: 128, 512>}, {pipeline_mode = #tpu.pipeline_mode<synchronous>, transform_indices = @transform_5, window_bounds = array<i64: 1, 512>}, {pipeline_mode = #tpu.pipeline_mode<synchronous>, transform_indices = @transform_6, window_bounds = array<i64: 128, 4>}, {pipeline_mode = #tpu.pipeline_mode<synchronous>, transform_indices = @transform_7, window_bounds = array<i64: 1, 4>}, {pipeline_mode = #tpu.pipeline_mode<synchronous>, transform_indices = @transform_8, window_bounds = array<i64: 8, 128>}, {pipeline_mode = #tpu.pipeline_mode<synchronous>, transform_indices = @transform_9, window_bounds = array<i64: 8, 128>}, {pipeline_mode = #tpu.pipeline_mode<synchronous>, transform_indices = @transform_10, window_bounds = array<i64: 8, 4>}]} {
    %c0_i32 = arith.constant 0 : i32
    %0 = arith.cmpi eq, %arg0, %c0_i32 : i32
    %1 = arith.extui %0 : i1 to i32
    %c0_i32_0 = arith.constant 0 : i32
    %2 = arith.cmpi ne, %1, %c0_i32_0 : i32
    scf.if %2 {
      %c0_52 = arith.constant 0 : index
      %c0_53 = arith.constant 0 : index
      %204 = vector.load %arg2[%c0_52, %c0_53] : memref<8x128xf32, #tpu.memory_space<vmem>>, vector<8x128xf32>
      %c0_54 = arith.constant 0 : index
      %c0_55 = arith.constant 0 : index
      %205 = vector.load %arg12[%c0_54, %c0_55] : memref<8x128xf32, #tpu.memory_space<vmem>>, vector<8x128xf32>
      tpu.vector_store %arg12[%c0_54, %c0_55], %204 {strides = array<i32>} : memref<8x128xf32, #tpu.memory_space<vmem>>, vector<8x128xf32>,
      %c0_56 = arith.constant 0 : index
      %c0_57 = arith.constant 0 : index
      %206 = vector.load %arg3[%c0_56, %c0_57] : memref<8x128xf32, #tpu.memory_space<vmem>>, vector<8x128xf32>
      %c0_58 = arith.constant 0 : index
      %c0_59 = arith.constant 0 : index
      %207 = vector.load %arg13[%c0_58, %c0_59] : memref<8x128xf32, #tpu.memory_space<vmem>>, vector<8x128xf32>
      tpu.vector_store %arg13[%c0_58, %c0_59], %206 {strides = array<i32>} : memref<8x128xf32, #tpu.memory_space<vmem>>, vector<8x128xf32>,
    } else {
    }
    %c0 = arith.constant 0 : index
    %c0_1 = arith.constant 0 : index
    %3 = vector.load %arg12[%c0, %c0_1] : memref<8x128xf32, #tpu.memory_space<vmem>>, vector<8x128xf32>
    %c0_2 = arith.constant 0 : index
    %c0_3 = arith.constant 0 : index
    %4 = vector.load %arg13[%c0_2, %c0_3] : memref<8x128xf32, #tpu.memory_space<vmem>>, vector<8x128xf32>
    %c0_4 = arith.constant 0 : index
    %c0_5 = arith.constant 0 : index
    %c0_6 = arith.constant 0 : index
    %5 = vector.load %arg1[%c0_4, %c0_5, %c0_6] : memref<8x8x128xbf16, #tpu.memory_space<vmem>>, vector<8x8x128xbf16>
    %6 = vector.shape_cast %5 : vector<8x8x128xbf16> to vector<64x128xbf16>
    %c0_7 = arith.constant 0 : index
    %c0_8 = arith.constant 0 : index
    %7 = vector.load %arg4[%c0_7, %c0_8] : memref<128x512xbf16, #tpu.memory_space<vmem>>, vector<128x512xbf16>
    %cst = arith.constant dense<0.000000e+00> : vector<64x512xf32>
    %8 = tpu.matmul %6, %7, %cst {dimension_numbers = #tpu.dot_dimension_numbers<[1], [0], [0], [1], [0, 0, 1, 1], [], []>} : vector<64x128xbf16>, vector<128x512xbf16>, vector<64x512xf32> -> vector<64x512xf32>
    %c0_9 = arith.constant 0 : index
    %c0_10 = arith.constant 0 : index
    %9 = vector.load %arg6[%c0_9, %c0_10] : memref<1x512xf32, #tpu.memory_space<vmem>>, vector<1x512xf32>
    %10 = vector.broadcast %9 : vector<1x512xf32> to vector<64x512xf32>
    %11 = arith.addf %8, %10 : vector<64x512xf32>
    %c0_11 = arith.constant 0 : index
    %c0_12 = arith.constant 0 : index
    %12 = vector.load %arg14[%c0_11, %c0_12] : memref<64x512xf32, #tpu.memory_space<vmem>>, vector<64x512xf32>
    tpu.vector_store %arg14[%c0_11, %c0_12], %11 {strides = array<i32>} : memref<64x512xf32, #tpu.memory_space<vmem>>, vector<64x512xf32>,
    %c0_13 = arith.constant 0 : index
    %c0_14 = arith.constant 0 : index
    %13 = vector.load %arg5[%c0_13, %c0_14] : memref<128x512xbf16, #tpu.memory_space<vmem>>, vector<128x512xbf16>
    %c0_i32_15 = arith.constant 0 : i32
    %c8_i32 = arith.constant 8 : i32
    %14 = arith.muli %c0_i32_15, %c8_i32 : i32
    %15 = tpu.assume_multiple %14, 8 : i32
    %16 = arith.index_cast %15 : i32 to index
    %c0_16 = arith.constant 0 : index
    %17 = vector.load %arg14[%16, %c0_16] : memref<64x512xf32, #tpu.memory_space<vmem>>, vector<8x512xf32>
    %18 = arith.truncf %3 : vector<8x128xf32> to vector<8x128xbf16>
    %cst_17 = arith.constant dense<0.000000e+00> : vector<8x512xf32>
    %19 = tpu.matmul %18, %13, %cst_17 {dimension_numbers = #tpu.dot_dimension_numbers<[1], [0], [0], [1], [0, 0, 1, 1], [], []>} : vector<8x128xbf16>, vector<128x512xbf16>, vector<8x512xf32> -> vector<8x512xf32>
    %20 = arith.addf %17, %19 : vector<8x512xf32>
    %21 = vector.extract_strided_slice %20 {offsets = [0, 0], sizes = [8, 384], strides = [1, 1]} : vector<8x512xf32> to vector<8x384xf32>
    %22 = arith.negf %21 : vector<8x384xf32>
    %23 = math.exp %22 : vector<8x384xf32>
    %cst_18 = arith.constant 1.000000e+00 : f32
    %24 = vector.broadcast %cst_18 : f32 to vector<8x384xf32>
    %25 = arith.addf %24, %23 : vector<8x384xf32>
    %26 = arith.divf %24, %25 : vector<8x384xf32>
    %27 = vector.extract_strided_slice %26 {offsets = [0, 0], sizes = [8, 128], strides = [1, 1]} : vector<8x384xf32> to vector<8x128xf32>
    %28 = vector.extract_strided_slice %26 {offsets = [0, 128], sizes = [8, 128], strides = [1, 1]} : vector<8x384xf32> to vector<8x128xf32>
    %29 = vector.extract_strided_slice %26 {offsets = [0, 256], sizes = [8, 128], strides = [1, 1]} : vector<8x384xf32> to vector<8x128xf32>
    %30 = vector.extract_strided_slice %20 {offsets = [0, 384], sizes = [8, 128], strides = [1, 1]} : vector<8x512xf32> to vector<8x128xf32>
    %31 = math.tanh %30 : vector<8x128xf32>
    %32 = arith.mulf %28, %4 : vector<8x128xf32>
    %33 = arith.mulf %27, %31 : vector<8x128xf32>
    %34 = arith.addf %32, %33 : vector<8x128xf32>
    %35 = math.tanh %34 : vector<8x128xf32>
    %36 = arith.mulf %29, %35 : vector<8x128xf32>
    %c1_i32 = arith.constant 1 : i32
    %c8_i32_19 = arith.constant 8 : i32
    %37 = arith.muli %c1_i32, %c8_i32_19 : i32
    %38 = tpu.assume_multiple %37, 8 : i32
    %39 = arith.index_cast %38 : i32 to index
    %c0_20 = arith.constant 0 : index
    %40 = vector.load %arg14[%39, %c0_20] : memref<64x512xf32, #tpu.memory_space<vmem>>, vector<8x512xf32>
    %41 = arith.truncf %36 : vector<8x128xf32> to vector<8x128xbf16>
    %cst_21 = arith.constant dense<0.000000e+00> : vector<8x512xf32>
    %42 = tpu.matmul %41, %13, %cst_21 {dimension_numbers = #tpu.dot_dimension_numbers<[1], [0], [0], [1], [0, 0, 1, 1], [], []>} : vector<8x128xbf16>, vector<128x512xbf16>, vector<8x512xf32> -> vector<8x512xf32>
    %43 = arith.addf %40, %42 : vector<8x512xf32>
    %44 = vector.extract_strided_slice %43 {offsets = [0, 0], sizes = [8, 384], strides = [1, 1]} : vector<8x512xf32> to vector<8x384xf32>
    %45 = arith.negf %44 : vector<8x384xf32>
    %46 = math.exp %45 : vector<8x384xf32>
    %cst_22 = arith.constant 1.000000e+00 : f32
    %47 = vector.broadcast %cst_22 : f32 to vector<8x384xf32>
    %48 = arith.addf %47, %46 : vector<8x384xf32>
    %49 = arith.divf %47, %48 : vector<8x384xf32>
    %50 = vector.extract_strided_slice %49 {offsets = [0, 0], sizes = [8, 128], strides = [1, 1]} : vector<8x384xf32> to vector<8x128xf32>
    %51 = vector.extract_strided_slice %49 {offsets = [0, 128], sizes = [8, 128], strides = [1, 1]} : vector<8x384xf32> to vector<8x128xf32>
    %52 = vector.extract_strided_slice %49 {offsets = [0, 256], sizes = [8, 128], strides = [1, 1]} : vector<8x384xf32> to vector<8x128xf32>
    %53 = vector.extract_strided_slice %43 {offsets = [0, 384], sizes = [8, 128], strides = [1, 1]} : vector<8x512xf32> to vector<8x128xf32>
    %54 = math.tanh %53 : vector<8x128xf32>
    %55 = arith.mulf %51, %34 : vector<8x128xf32>
    %56 = arith.mulf %50, %54 : vector<8x128xf32>
    %57 = arith.addf %55, %56 : vector<8x128xf32>
    %58 = math.tanh %57 : vector<8x128xf32>
    %59 = arith.mulf %52, %58 : vector<8x128xf32>
    %c2_i32 = arith.constant 2 : i32
    %c8_i32_23 = arith.constant 8 : i32
    %60 = arith.muli %c2_i32, %c8_i32_23 : i32
    %61 = tpu.assume_multiple %60, 8 : i32
    %62 = arith.index_cast %61 : i32 to index
    %c0_24 = arith.constant 0 : index
    %63 = vector.load %arg14[%62, %c0_24] : memref<64x512xf32, #tpu.memory_space<vmem>>, vector<8x512xf32>
    %64 = arith.truncf %59 : vector<8x128xf32> to vector<8x128xbf16>
    %cst_25 = arith.constant dense<0.000000e+00> : vector<8x512xf32>
    %65 = tpu.matmul %64, %13, %cst_25 {dimension_numbers = #tpu.dot_dimension_numbers<[1], [0], [0], [1], [0, 0, 1, 1], [], []>} : vector<8x128xbf16>, vector<128x512xbf16>, vector<8x512xf32> -> vector<8x512xf32>
    %66 = arith.addf %63, %65 : vector<8x512xf32>
    %67 = vector.extract_strided_slice %66 {offsets = [0, 0], sizes = [8, 384], strides = [1, 1]} : vector<8x512xf32> to vector<8x384xf32>
    %68 = arith.negf %67 : vector<8x384xf32>
    %69 = math.exp %68 : vector<8x384xf32>
    %cst_26 = arith.constant 1.000000e+00 : f32
    %70 = vector.broadcast %cst_26 : f32 to vector<8x384xf32>
    %71 = arith.addf %70, %69 : vector<8x384xf32>
    %72 = arith.divf %70, %71 : vector<8x384xf32>
    %73 = vector.extract_strided_slice %72 {offsets = [0, 0], sizes = [8, 128], strides = [1, 1]} : vector<8x384xf32> to vector<8x128xf32>
    %74 = vector.extract_strided_slice %72 {offsets = [0, 128], sizes = [8, 128], strides = [1, 1]} : vector<8x384xf32> to vector<8x128xf32>
    %75 = vector.extract_strided_slice %72 {offsets = [0, 256], sizes = [8, 128], strides = [1, 1]} : vector<8x384xf32> to vector<8x128xf32>
    %76 = vector.extract_strided_slice %66 {offsets = [0, 384], sizes = [8, 128], strides = [1, 1]} : vector<8x512xf32> to vector<8x128xf32>
    %77 = math.tanh %76 : vector<8x128xf32>
    %78 = arith.mulf %74, %57 : vector<8x128xf32>
    %79 = arith.mulf %73, %77 : vector<8x128xf32>
    %80 = arith.addf %78, %79 : vector<8x128xf32>
    %81 = math.tanh %80 : vector<8x128xf32>
    %82 = arith.mulf %75, %81 : vector<8x128xf32>
    %c3_i32 = arith.constant 3 : i32
    %c8_i32_27 = arith.constant 8 : i32
    %83 = arith.muli %c3_i32, %c8_i32_27 : i32
    %84 = tpu.assume_multiple %83, 8 : i32
    %85 = arith.index_cast %84 : i32 to index
    %c0_28 = arith.constant 0 : index
    %86 = vector.load %arg14[%85, %c0_28] : memref<64x512xf32, #tpu.memory_space<vmem>>, vector<8x512xf32>
    %87 = arith.truncf %82 : vector<8x128xf32> to vector<8x128xbf16>
    %cst_29 = arith.constant dense<0.000000e+00> : vector<8x512xf32>
    %88 = tpu.matmul %87, %13, %cst_29 {dimension_numbers = #tpu.dot_dimension_numbers<[1], [0], [0], [1], [0, 0, 1, 1], [], []>} : vector<8x128xbf16>, vector<128x512xbf16>, vector<8x512xf32> -> vector<8x512xf32>
    %89 = arith.addf %86, %88 : vector<8x512xf32>
    %90 = vector.extract_strided_slice %89 {offsets = [0, 0], sizes = [8, 384], strides = [1, 1]} : vector<8x512xf32> to vector<8x384xf32>
    %91 = arith.negf %90 : vector<8x384xf32>
    %92 = math.exp %91 : vector<8x384xf32>
    %cst_30 = arith.constant 1.000000e+00 : f32
    %93 = vector.broadcast %cst_30 : f32 to vector<8x384xf32>
    %94 = arith.addf %93, %92 : vector<8x384xf32>
    %95 = arith.divf %93, %94 : vector<8x384xf32>
    %96 = vector.extract_strided_slice %95 {offsets = [0, 0], sizes = [8, 128], strides = [1, 1]} : vector<8x384xf32> to vector<8x128xf32>
    %97 = vector.extract_strided_slice %95 {offsets = [0, 128], sizes = [8, 128], strides = [1, 1]} : vector<8x384xf32> to vector<8x128xf32>
    %98 = vector.extract_strided_slice %95 {offsets = [0, 256], sizes = [8, 128], strides = [1, 1]} : vector<8x384xf32> to vector<8x128xf32>
    %99 = vector.extract_strided_slice %89 {offsets = [0, 384], sizes = [8, 128], strides = [1, 1]} : vector<8x512xf32> to vector<8x128xf32>
    %100 = math.tanh %99 : vector<8x128xf32>
    %101 = arith.mulf %97, %80 : vector<8x128xf32>
    %102 = arith.mulf %96, %100 : vector<8x128xf32>
    %103 = arith.addf %101, %102 : vector<8x128xf32>
    %104 = math.tanh %103 : vector<8x128xf32>
    %105 = arith.mulf %98, %104 : vector<8x128xf32>
    %c4_i32 = arith.constant 4 : i32
    %c8_i32_31 = arith.constant 8 : i32
    %106 = arith.muli %c4_i32, %c8_i32_31 : i32
    %107 = tpu.assume_multiple %106, 8 : i32
    %108 = arith.index_cast %107 : i32 to index
    %c0_32 = arith.constant 0 : index
    %109 = vector.load %arg14[%108, %c0_32] : memref<64x512xf32, #tpu.memory_space<vmem>>, vector<8x512xf32>
    %110 = arith.truncf %105 : vector<8x128xf32> to vector<8x128xbf16>
    %cst_33 = arith.constant dense<0.000000e+00> : vector<8x512xf32>
    %111 = tpu.matmul %110, %13, %cst_33 {dimension_numbers = #tpu.dot_dimension_numbers<[1], [0], [0], [1], [0, 0, 1, 1], [], []>} : vector<8x128xbf16>, vector<128x512xbf16>, vector<8x512xf32> -> vector<8x512xf32>
    %112 = arith.addf %109, %111 : vector<8x512xf32>
    %113 = vector.extract_strided_slice %112 {offsets = [0, 0], sizes = [8, 384], strides = [1, 1]} : vector<8x512xf32> to vector<8x384xf32>
    %114 = arith.negf %113 : vector<8x384xf32>
    %115 = math.exp %114 : vector<8x384xf32>
    %cst_34 = arith.constant 1.000000e+00 : f32
    %116 = vector.broadcast %cst_34 : f32 to vector<8x384xf32>
    %117 = arith.addf %116, %115 : vector<8x384xf32>
    %118 = arith.divf %116, %117 : vector<8x384xf32>
    %119 = vector.extract_strided_slice %118 {offsets = [0, 0], sizes = [8, 128], strides = [1, 1]} : vector<8x384xf32> to vector<8x128xf32>
    %120 = vector.extract_strided_slice %118 {offsets = [0, 128], sizes = [8, 128], strides = [1, 1]} : vector<8x384xf32> to vector<8x128xf32>
    %121 = vector.extract_strided_slice %118 {offsets = [0, 256], sizes = [8, 128], strides = [1, 1]} : vector<8x384xf32> to vector<8x128xf32>
    %122 = vector.extract_strided_slice %112 {offsets = [0, 384], sizes = [8, 128], strides = [1, 1]} : vector<8x512xf32> to vector<8x128xf32>
    %123 = math.tanh %122 : vector<8x128xf32>
    %124 = arith.mulf %120, %103 : vector<8x128xf32>
    %125 = arith.mulf %119, %123 : vector<8x128xf32>
    %126 = arith.addf %124, %125 : vector<8x128xf32>
    %127 = math.tanh %126 : vector<8x128xf32>
    %128 = arith.mulf %121, %127 : vector<8x128xf32>
    %c5_i32 = arith.constant 5 : i32
    %c8_i32_35 = arith.constant 8 : i32
    %129 = arith.muli %c5_i32, %c8_i32_35 : i32
    %130 = tpu.assume_multiple %129, 8 : i32
    %131 = arith.index_cast %130 : i32 to index
    %c0_36 = arith.constant 0 : index
    %132 = vector.load %arg14[%131, %c0_36] : memref<64x512xf32, #tpu.memory_space<vmem>>, vector<8x512xf32>
    %133 = arith.truncf %128 : vector<8x128xf32> to vector<8x128xbf16>
    %cst_37 = arith.constant dense<0.000000e+00> : vector<8x512xf32>
    %134 = tpu.matmul %133, %13, %cst_37 {dimension_numbers = #tpu.dot_dimension_numbers<[1], [0], [0], [1], [0, 0, 1, 1], [], []>} : vector<8x128xbf16>, vector<128x512xbf16>, vector<8x512xf32> -> vector<8x512xf32>
    %135 = arith.addf %132, %134 : vector<8x512xf32>
    %136 = vector.extract_strided_slice %135 {offsets = [0, 0], sizes = [8, 384], strides = [1, 1]} : vector<8x512xf32> to vector<8x384xf32>
    %137 = arith.negf %136 : vector<8x384xf32>
    %138 = math.exp %137 : vector<8x384xf32>
    %cst_38 = arith.constant 1.000000e+00 : f32
    %139 = vector.broadcast %cst_38 : f32 to vector<8x384xf32>
    %140 = arith.addf %139, %138 : vector<8x384xf32>
    %141 = arith.divf %139, %140 : vector<8x384xf32>
    %142 = vector.extract_strided_slice %141 {offsets = [0, 0], sizes = [8, 128], strides = [1, 1]} : vector<8x384xf32> to vector<8x128xf32>
    %143 = vector.extract_strided_slice %141 {offsets = [0, 128], sizes = [8, 128], strides = [1, 1]} : vector<8x384xf32> to vector<8x128xf32>
    %144 = vector.extract_strided_slice %141 {offsets = [0, 256], sizes = [8, 128], strides = [1, 1]} : vector<8x384xf32> to vector<8x128xf32>
    %145 = vector.extract_strided_slice %135 {offsets = [0, 384], sizes = [8, 128], strides = [1, 1]} : vector<8x512xf32> to vector<8x128xf32>
    %146 = math.tanh %145 : vector<8x128xf32>
    %147 = arith.mulf %143, %126 : vector<8x128xf32>
    %148 = arith.mulf %142, %146 : vector<8x128xf32>
    %149 = arith.addf %147, %148 : vector<8x128xf32>
    %150 = math.tanh %149 : vector<8x128xf32>
    %151 = arith.mulf %144, %150 : vector<8x128xf32>
    %c6_i32 = arith.constant 6 : i32
    %c8_i32_39 = arith.constant 8 : i32
    %152 = arith.muli %c6_i32, %c8_i32_39 : i32
    %153 = tpu.assume_multiple %152, 8 : i32
    %154 = arith.index_cast %153 : i32 to index
    %c0_40 = arith.constant 0 : index
    %155 = vector.load %arg14[%154, %c0_40] : memref<64x512xf32, #tpu.memory_space<vmem>>, vector<8x512xf32>
    %156 = arith.truncf %151 : vector<8x128xf32> to vector<8x128xbf16>
    %cst_41 = arith.constant dense<0.000000e+00> : vector<8x512xf32>
    %157 = tpu.matmul %156, %13, %cst_41 {dimension_numbers = #tpu.dot_dimension_numbers<[1], [0], [0], [1], [0, 0, 1, 1], [], []>} : vector<8x128xbf16>, vector<128x512xbf16>, vector<8x512xf32> -> vector<8x512xf32>
    %158 = arith.addf %155, %157 : vector<8x512xf32>
    %159 = vector.extract_strided_slice %158 {offsets = [0, 0], sizes = [8, 384], strides = [1, 1]} : vector<8x512xf32> to vector<8x384xf32>
    %160 = arith.negf %159 : vector<8x384xf32>
    %161 = math.exp %160 : vector<8x384xf32>
    %cst_42 = arith.constant 1.000000e+00 : f32
    %162 = vector.broadcast %cst_42 : f32 to vector<8x384xf32>
    %163 = arith.addf %162, %161 : vector<8x384xf32>
    %164 = arith.divf %162, %163 : vector<8x384xf32>
    %165 = vector.extract_strided_slice %164 {offsets = [0, 0], sizes = [8, 128], strides = [1, 1]} : vector<8x384xf32> to vector<8x128xf32>
    %166 = vector.extract_strided_slice %164 {offsets = [0, 128], sizes = [8, 128], strides = [1, 1]} : vector<8x384xf32> to vector<8x128xf32>
    %167 = vector.extract_strided_slice %164 {offsets = [0, 256], sizes = [8, 128], strides = [1, 1]} : vector<8x384xf32> to vector<8x128xf32>
    %168 = vector.extract_strided_slice %158 {offsets = [0, 384], sizes = [8, 128], strides = [1, 1]} : vector<8x512xf32> to vector<8x128xf32>
    %169 = math.tanh %168 : vector<8x128xf32>
    %170 = arith.mulf %166, %149 : vector<8x128xf32>
    %171 = arith.mulf %165, %169 : vector<8x128xf32>
    %172 = arith.addf %170, %171 : vector<8x128xf32>
    %173 = math.tanh %172 : vector<8x128xf32>
    %174 = arith.mulf %167, %173 : vector<8x128xf32>
    %c7_i32 = arith.constant 7 : i32
    %c8_i32_43 = arith.constant 8 : i32
    %175 = arith.muli %c7_i32, %c8_i32_43 : i32
    %176 = tpu.assume_multiple %175, 8 : i32
    %177 = arith.index_cast %176 : i32 to index
    %c0_44 = arith.constant 0 : index
    %178 = vector.load %arg14[%177, %c0_44] : memref<64x512xf32, #tpu.memory_space<vmem>>, vector<8x512xf32>
    %179 = arith.truncf %174 : vector<8x128xf32> to vector<8x128xbf16>
    %cst_45 = arith.constant dense<0.000000e+00> : vector<8x512xf32>
    %180 = tpu.matmul %179, %13, %cst_45 {dimension_numbers = #tpu.dot_dimension_numbers<[1], [0], [0], [1], [0, 0, 1, 1], [], []>} : vector<8x128xbf16>, vector<128x512xbf16>, vector<8x512xf32> -> vector<8x512xf32>
    %181 = arith.addf %178, %180 : vector<8x512xf32>
    %182 = vector.extract_strided_slice %181 {offsets = [0, 0], sizes = [8, 384], strides = [1, 1]} : vector<8x512xf32> to vector<8x384xf32>
    %183 = arith.negf %182 : vector<8x384xf32>
    %184 = math.exp %183 : vector<8x384xf32>
    %cst_46 = arith.constant 1.000000e+00 : f32
    %185 = vector.broadcast %cst_46 : f32 to vector<8x384xf32>
    %186 = arith.addf %185, %184 : vector<8x384xf32>
    %187 = arith.divf %185, %186 : vector<8x384xf32>
    %188 = vector.extract_strided_slice %187 {offsets = [0, 0], sizes = [8, 128], strides = [1, 1]} : vector<8x384xf32> to vector<8x128xf32>
    %189 = vector.extract_strided_slice %187 {offsets = [0, 128], sizes = [8, 128], strides = [1, 1]} : vector<8x384xf32> to vector<8x128xf32>
    %190 = vector.extract_strided_slice %187 {offsets = [0, 256], sizes = [8, 128], strides = [1, 1]} : vector<8x384xf32> to vector<8x128xf32>
    %191 = vector.extract_strided_slice %181 {offsets = [0, 384], sizes = [8, 128], strides = [1, 1]} : vector<8x512xf32> to vector<8x128xf32>
    %192 = math.tanh %191 : vector<8x128xf32>
    %193 = arith.mulf %189, %172 : vector<8x128xf32>
    %194 = arith.mulf %188, %192 : vector<8x128xf32>
    %195 = arith.addf %193, %194 : vector<8x128xf32>
    %196 = math.tanh %195 : vector<8x128xf32>
    %197 = arith.mulf %190, %196 : vector<8x128xf32>
    %c8_i32_47 = arith.constant 8 : i32
    %c0_i32_48 = arith.constant 0 : i32
    %198 = arith.cmpi ne, %arg0, %c0_i32_48 : i32
    %199 = arith.extui %198 : i1 to i32
    %c0_i32_49 = arith.constant 0 : i32
    %200 = arith.cmpi ne, %199, %c0_i32_49 : i32
    scf.if %200 {
      %c0_52 = arith.constant 0 : index
      %c0_53 = arith.constant 0 : index
      %204 = vector.load %arg12[%c0_52, %c0_53] : memref<8x128xf32, #tpu.memory_space<vmem>>, vector<8x128xf32>
      tpu.vector_store %arg12[%c0_52, %c0_53], %197 {strides = array<i32>} : memref<8x128xf32, #tpu.memory_space<vmem>>, vector<8x128xf32>,
      %c0_54 = arith.constant 0 : index
      %c0_55 = arith.constant 0 : index
      %205 = vector.load %arg13[%c0_54, %c0_55] : memref<8x128xf32, #tpu.memory_space<vmem>>, vector<8x128xf32>
      tpu.vector_store %arg13[%c0_54, %c0_55], %195 {strides = array<i32>} : memref<8x128xf32, #tpu.memory_space<vmem>>, vector<8x128xf32>,
    } else {
    }
    %c0_i32_50 = arith.constant 0 : i32
    %201 = arith.cmpi eq, %arg0, %c0_i32_50 : i32
    %202 = arith.extui %201 : i1 to i32
    %c0_i32_51 = arith.constant 0 : i32
    %203 = arith.cmpi ne, %202, %c0_i32_51 : i32
    scf.if %203 {
      %c0_52 = arith.constant 0 : index
      %c0_53 = arith.constant 0 : index
      %204 = vector.load %arg9[%c0_52, %c0_53] : memref<8x128xf32, #tpu.memory_space<vmem>>, vector<8x128xf32>
      tpu.vector_store %arg9[%c0_52, %c0_53], %197 {strides = array<i32>} : memref<8x128xf32, #tpu.memory_space<vmem>>, vector<8x128xf32>,
      %c0_54 = arith.constant 0 : index
      %c0_55 = arith.constant 0 : index
      %205 = vector.load %arg10[%c0_54, %c0_55] : memref<8x128xf32, #tpu.memory_space<vmem>>, vector<8x128xf32>
      tpu.vector_store %arg10[%c0_54, %c0_55], %195 {strides = array<i32>} : memref<8x128xf32, #tpu.memory_space<vmem>>, vector<8x128xf32>,
      %cst_56 = arith.constant 0.000000e+00 : f32
      %206 = vector.broadcast %cst_56 : f32 to vector<8x128xf32>
      %207 = arith.maximumf %197, %206 : vector<8x128xf32>
      %208 = arith.truncf %207 : vector<8x128xf32> to vector<8x128xbf16>
      %c0_57 = arith.constant 0 : index
      %c0_58 = arith.constant 0 : index
      %209 = vector.load %arg7[%c0_57, %c0_58] : memref<128x4xbf16, #tpu.memory_space<vmem>>, vector<128x4xbf16>
      %cst_59 = arith.constant dense<0.000000e+00> : vector<8x4xf32>
      %210 = tpu.matmul %208, %209, %cst_59 {dimension_numbers = #tpu.dot_dimension_numbers<[1], [0], [0], [1], [0, 0, 1, 1], [], []>} : vector<8x128xbf16>, vector<128x4xbf16>, vector<8x4xf32> -> vector<8x4xf32>
      %c0_60 = arith.constant 0 : index
      %c0_61 = arith.constant 0 : index
      %211 = vector.load %arg8[%c0_60, %c0_61] : memref<1x4xf32, #tpu.memory_space<vmem>>, vector<1x4xf32>
      %212 = vector.broadcast %211 : vector<1x4xf32> to vector<8x4xf32>
      %213 = arith.addf %210, %212 : vector<8x4xf32>
      %c0_62 = arith.constant 0 : index
      %c0_63 = arith.constant 0 : index
      %214 = vector.load %arg11[%c0_62, %c0_63] : memref<8x4xf32, #tpu.memory_space<vmem>>, vector<8x4xf32>
      tpu.vector_store %arg11[%c0_62, %c0_63], %213 {strides = array<i32>} : memref<8x4xf32, #tpu.memory_space<vmem>>, vector<8x4xf32>,
    } else {
    }
    return
  }
  func.func @transform_0(%arg0: i32) -> (i32, i32, i32) {
    %c0_i32 = arith.constant 0 : i32
    %c0_i32_0 = arith.constant 0 : i32
    %c0_i32_1 = arith.constant 0 : i32
    return %arg0, %c0_i32, %c0_i32_0 : i32, i32, i32
  }
  func.func @transform_1(%arg0: i32) -> (i32, i32) {
    %c0_i32 = arith.constant 0 : i32
    %c0_i32_0 = arith.constant 0 : i32
    %c0_i32_1 = arith.constant 0 : i32
    return %c0_i32, %c0_i32_0 : i32, i32
  }
  func.func @transform_2(%arg0: i32) -> (i32, i32) {
    %c0_i32 = arith.constant 0 : i32
    %c0_i32_0 = arith.constant 0 : i32
    %c0_i32_1 = arith.constant 0 : i32
    return %c0_i32, %c0_i32_0 : i32, i32
  }
  func.func @transform_3(%arg0: i32) -> (i32, i32) {
    %c0_i32 = arith.constant 0 : i32
    %c0_i32_0 = arith.constant 0 : i32
    %c0_i32_1 = arith.constant 0 : i32
    return %c0_i32, %c0_i32_0 : i32, i32
  }
  func.func @transform_4(%arg0: i32) -> (i32, i32) {
    %c0_i32 = arith.constant 0 : i32
    %c0_i32_0 = arith.constant 0 : i32
    %c0_i32_1 = arith.constant 0 : i32
    return %c0_i32, %c0_i32_0 : i32, i32
  }
  func.func @transform_5(%arg0: i32) -> (i32, i32) {
    %c0_i32 = arith.constant 0 : i32
    %c0_i32_0 = arith.constant 0 : i32
    %c0_i32_1 = arith.constant 0 : i32
    return %c0_i32, %c0_i32_0 : i32, i32
  }
  func.func @transform_6(%arg0: i32) -> (i32, i32) {
    %c0_i32 = arith.constant 0 : i32
    %c0_i32_0 = arith.constant 0 : i32
    %c0_i32_1 = arith.constant 0 : i32
    return %c0_i32, %c0_i32_0 : i32, i32
  }
  func.func @transform_7(%arg0: i32) -> (i32, i32) {
    %c0_i32 = arith.constant 0 : i32
    %c0_i32_0 = arith.constant 0 : i32
    %c0_i32_1 = arith.constant 0 : i32
    return %c0_i32, %c0_i32_0 : i32, i32
  }
  func.func @transform_8(%arg0: i32) -> (i32, i32) {
    %c0_i32 = arith.constant 0 : i32
    %c0_i32_0 = arith.constant 0 : i32
    %c0_i32_1 = arith.constant 0 : i32
    return %c0_i32, %c0_i32_0 : i32, i32
  }
  func.func @transform_9(%arg0: i32) -> (i32, i32) {
    %c0_i32 = arith.constant 0 : i32
    %c0_i32_0 = arith.constant 0 : i32
    %c0_i32_1 = arith.constant 0 : i32
    return %c0_i32, %c0_i32_0 : i32, i32
  }
  func.func @transform_10(%arg0: i32) -> (i32, i32) {
    %c0_i32 = arith.constant 0 : i32
    %c0_i32_0 = arith.constant 0 : i32
    %c0_i32_1 = arith.constant 0 : i32
    return %c0_i32, %c0_i32_0 : i32, i32
  }
}

</mosaic_0001>

<llo_original>
// kernel: lstmnet_forward.3
$region0: #{lstmnet_forward.3}
  #allocation0 [shape = 'u32[]', space=smem, size = 0x4, offset = 0x4, fixed_abs, tag = 'smem constant byte address 0x4 - core index']
  #allocation1 [shape = 'u32[72,128]{1,0:T(1,128)}', space=vmem, size = 0x9000, scoped, tag = 'internal scratch']
  #allocation2 [shape = 'f32[8,128]{1,0:T(8,128)}', space=vmem, size = 0x1000, scoped, tag = 'scratch operand']
  #allocation3 [shape = 'f32[8,128]{1,0:T(8,128)}', space=vmem, size = 0x1000, scoped, tag = 'scratch operand']
  #allocation4 [shape = 'f32[64,512]{1,0:T(8,128)}', space=vmem, size = 0x20000, scoped, tag = 'scratch operand']
  %s0 = inlined_call_operand.vmem [shape: bf16[8,8,128], index: 0, kind: input, shape index: {}]
  %s1 = inlined_call_operand.vmem [shape: f32[8,128], index: 1, kind: input, shape index: {}]
  %s2 = inlined_call_operand.vmem [shape: f32[8,128], index: 2, kind: input, shape index: {}]
  %s3 = inlined_call_operand.hbm [shape: bf16[128,512], index: 3, kind: input, shape index: {}]
  %s4 = inlined_call_operand.hbm [shape: bf16[128,512], index: 4, kind: input, shape index: {}]
  %s5 = inlined_call_operand.vmem [shape: f32[1,512], index: 5, kind: input, shape index: {}]
  %s6 = inlined_call_operand.vmem [shape: bf16[128,4], index: 6, kind: input, shape index: {}]
  %s7 = inlined_call_operand.vmem [shape: f32[1,4], index: 7, kind: input, shape index: {}]
  %s8 = inlined_call_operand.vmem [shape: f32[8,128], index: 8, kind: output, shape index: {0}]
  %s9 = inlined_call_operand.vmem [shape: f32[8,128], index: 9, kind: output, shape index: {1}]
  %s10 = inlined_call_operand.vmem [shape: f32[8,4], index: 10, kind: output, shape index: {2}]
  %11 = xla_tuple %s8, %s9, %s10
  %s12 = sld [smem:[#allocation0]]
  $region78: #{lstmnet_forward.3} parent=0
    _
  %s14 = ssub.s32 1, %s12
  %s15 = scalar_select 0, %s14, %s12
  $region1: #{lstmnet_forward.3} parent=0
    #allocation5 [shape = 'u8[131072]{0}', space=vmem, size = 0x20000, scoped, tag = 'input window, operand 3, single buffered']
    #allocation6 [shape = 's32[1]{0}', space=sflag, size = 0x4, scoped, tag = 'scoped memory for lstmnet_forward.3']
    #allocation7 [shape = 'u8[131072]{0}', space=vmem, size = 0x20000, scoped, tag = 'input window, operand 4, single buffered']
    #allocation8 [shape = 's32[1]{0}', space=sflag, size = 0x4, scoped, tag = 'scoped memory for lstmnet_forward.3']
    %16 = vsyncpa [#allocation6], 0
    %17 = vsyncpa [#allocation8], 0
    // Predicated region
    $region2: #{lstmnet_forward.3} parent=1 // pred_check
      _
    $region3: #{lstmnet_forward.3} parent=1 // pred_check_branch
      %19 = sbr.rel (0) target = $region5
    $region4: #{lstmnet_forward.3} parent=1 // pred_region
      _
    $region5: #{lstmnet_forward.3} parent=1 // pred_fallthru
      _
    // Predicated region
    $region6: #{lstmnet_forward.3} parent=1 // pred_check
      _
    $region7: #{lstmnet_forward.3} parent=1 // pred_check_branch
      %21 = sbr.rel (0) target = $region9
    $region8: #{lstmnet_forward.3} parent=1 // pred_region
      _
    $region9: #{lstmnet_forward.3} parent=1 // pred_fallthru
      _
    // Predicated region
    $region10: #{lstmnet_forward.3} parent=1 // pred_check
      _
    $region11: #{lstmnet_forward.3} parent=1 // pred_check_branch
      %23 = sbr.rel (0) target = $region13
    $region12: #{lstmnet_forward.3} parent=1 // pred_region
      _
    $region13: #{lstmnet_forward.3} parent=1 // pred_fallthru
      _
    // Predicated region
    $region14: #{lstmnet_forward.3} parent=1 // pred_check
      _
    $region15: #{lstmnet_forward.3} parent=1 // pred_check_branch
      %25 = sbr.rel (0) target = $region17
    $region16: #{lstmnet_forward.3} parent=1 // pred_region
      %27 = vsyncadd [#allocation6], 0
      %s28 = sshll.u32 %s3, 4
      %s29 = int_to_ptr.hbm [resolvable:$true] %s28
      %s30 = sshll.u32 [#allocation5], 4
      %s31 = int_to_ptr.vmem [resolvable:$true] %s30
      %36 = dma.hbm_to_vmem [thread:$0]  %s29, 4096, %s31, [#allocation6], 256, 256, 16
    $region17: #{lstmnet_forward.3} parent=1 // pred_fallthru
      _
    // Predicated region
    $region18: #{lstmnet_forward.3} parent=1 // pred_check
      _
    $region19: #{lstmnet_forward.3} parent=1 // pred_check_branch
      %38 = sbr.rel (0) target = $region21
    $region20: #{lstmnet_forward.3} parent=1 // pred_region
      %40 = vsyncadd [#allocation8], 0
      %s41 = sshll.u32 %s4, 4
      %s42 = int_to_ptr.hbm [resolvable:$true] %s41
      %s43 = sshll.u32 [#allocation7], 4
      %s44 = int_to_ptr.vmem [resolvable:$true] %s43
      %49 = dma.hbm_to_vmem [thread:$0]  %s42, 4096, %s44, [#allocation8], 256, 256, 16
    $region21: #{lstmnet_forward.3} parent=1 // pred_fallthru
      _
    // Predicated region
    $region22: #{lstmnet_forward.3} parent=1 // pred_check
      _
    $region23: #{lstmnet_forward.3} parent=1 // pred_check_branch
      %51 = sbr.rel (0) target = $region25
    $region24: #{lstmnet_forward.3} parent=1 // pred_region
      _
    $region25: #{lstmnet_forward.3} parent=1 // pred_fallthru
      _
    // Predicated region
    $region26: #{lstmnet_forward.3} parent=1 // pred_check
      _
    $region27: #{lstmnet_forward.3} parent=1 // pred_check_branch
      %53 = sbr.rel (0) target = $region29
    $region28: #{lstmnet_forward.3} parent=1 // pred_region
      _
    $region29: #{lstmnet_forward.3} parent=1 // pred_fallthru
      _
    // Predicated region
    $region30: #{lstmnet_forward.3} parent=1 // pred_check
      _
    $region31: #{lstmnet_forward.3} parent=1 // pred_check_branch
      %55 = sbr.rel (0) target = $region33
    $region32: #{lstmnet_forward.3} parent=1 // pred_region
      _
    $region33: #{lstmnet_forward.3} parent=1 // pred_fallthru
      _
    // Predicated region
    $region34: #{lstmnet_forward.3} parent=1 // pred_check
      _
    $region35: #{lstmnet_forward.3} parent=1 // pred_check_branch
      %57 = sbr.rel (0) target = $region37
    $region36: #{lstmnet_forward.3} parent=1 // pred_region
      %59 = dma.done [#allocation6], 4096
    $region37: #{lstmnet_forward.3} parent=1 // pred_fallthru
      _
    // Predicated region
    $region38: #{lstmnet_forward.3} parent=1 // pred_check
      _
    $region39: #{lstmnet_forward.3} parent=1 // pred_check_branch
      %61 = sbr.rel (0) target = $region41
    $region40: #{lstmnet_forward.3} parent=1 // pred_region
      %63 = dma.done [#allocation8], 4096
    $region41: #{lstmnet_forward.3} parent=1 // pred_fallthru
      _
    %p64 = scmp.eq.s32.totalorder 0, 0
    // Predicated region
    $region42: #{lstmnet_forward.3} parent=1 // pred_check
      %p65 = pneg %p64
    $region43: #{lstmnet_forward.3} parent=1 // pred_check_branch
      %67 = sbr.rel (%p65) target = $region45
    $region44: #{lstmnet_forward.3} parent=1 // pred_region
      %v68 = vld [vmem:[%s1] sm:$0xff]
      %69 = vst [vmem:[#allocation2] sm:$0xff] %v68
      %v70 = vld [vmem:[%s2] sm:$0xff]
      %71 = vst [vmem:[#allocation3] sm:$0xff] %v70
    $region45: #{lstmnet_forward.3} parent=1 // pred_fallthru
      _
    %v72 = vld [vmem:[#allocation2] sm:$0xff]
    %v73 = vld [vmem:[#allocation3] sm:$0xff]
    %v74 = vld [vmem:[%s0] sm:$0xf]
    %v75 = vld [vmem:[%s0 + $0x4] sm:$0xf]
    %v76 = vld [vmem:[%s0 + $0x8] sm:$0xf]
    %v77 = vld [vmem:[%s0 + $0xc] sm:$0xf]
    %v78 = vld [vmem:[%s0 + $0x10] sm:$0xf]
    %v79 = vld [vmem:[%s0 + $0x14] sm:$0xf]
    %v80 = vld [vmem:[%s0 + $0x18] sm:$0xf]
    %v81 = vld [vmem:[%s0 + $0x1c] sm:$0xf]
    %v82 = vld [vmem:[#allocation5] sm:$0xff]
    %v83 = vld [vmem:[#allocation5 + $0x8] sm:$0xff]
    %v84 = vld [vmem:[#allocation5 + $0x10] sm:$0xff]
    %v85 = vld [vmem:[#allocation5 + $0x18] sm:$0xff]
    %v86 = vld [vmem:[#allocation5 + $0x20] sm:$0xff]
    %v87 = vld [vmem:[#allocation5 + $0x28] sm:$0xff]
    %v88 = vld [vmem:[#allocation5 + $0x30] sm:$0xff]
    %v89 = vld [vmem:[#allocation5 + $0x38] sm:$0xff]
    %v90 = vld [vmem:[#allocation5 + $0x40] sm:$0xff]
    %v91 = vld [vmem:[#allocation5 + $0x48] sm:$0xff]
    %v92 = vld [vmem:[#allocation5 + $0x50] sm:$0xff]
    %v93 = vld [vmem:[#allocation5 + $0x58] sm:$0xff]
    %v94 = vld [vmem:[#allocation5 + $0x60] sm:$0xff]
    %v95 = vld [vmem:[#allocation5 + $0x68] sm:$0xff]
    %v96 = vld [vmem:[#allocation5 + $0x70] sm:$0xff]
    %v97 = vld [vmem:[#allocation5 + $0x78] sm:$0xff]
    %v98 = vld [vmem:[#allocation5 + $0x80] sm:$0xff]
    %v99 = vld [vmem:[#allocation5 + $0x88] sm:$0xff]
    %v100 = vld [vmem:[#allocation5 + $0x90] sm:$0xff]
    %v101 = vld [vmem:[#allocation5 + $0x98] sm:$0xff]
    %v102 = vld [vmem:[#allocation5 + $0xa0] sm:$0xff]
    %v103 = vld [vmem:[#allocation5 + $0xa8] sm:$0xff]
    %v104 = vld [vmem:[#allocation5 + $0xb0] sm:$0xff]
    %v105 = vld [vmem:[#allocation5 + $0xb8] sm:$0xff]
    %v106 = vld [vmem:[#allocation5 + $0xc0] sm:$0xff]
    %v107 = vld [vmem:[#allocation5 + $0xc8] sm:$0xff]
    %v108 = vld [vmem:[#allocation5 + $0xd0] sm:$0xff]
    %v109 = vld [vmem:[#allocation5 + $0xd8] sm:$0xff]
    %v110 = vld [vmem:[#allocation5 + $0xe0] sm:$0xff]
    %v111 = vld [vmem:[#allocation5 + $0xe8] sm:$0xff]
    %v112 = vld [vmem:[#allocation5 + $0xf0] sm:$0xff]
    %v113 = vld [vmem:[#allocation5 + $0xf8] sm:$0xff]
    %v114 = vld [vmem:[%s5] sm:$0xf]
    %v116 = vperm.slane %v114, 0
    %v117 = vperm.slane %v114, 1
    %v118 = vperm.slane %v114, 2
    %v119 = vperm.slane %v114, 3
    %v132 = vunpack.c.l.b16 %v74
    %v133 = vunpack.c.l.b16 %v75
    %v134 = vunpack.c.l.b16 %v76
    %v135 = vunpack.c.l.b16 %v77
    %v136 = vunpack.c.l.b16 %v78
    %v137 = vunpack.c.l.b16 %v79
    %v138 = vunpack.c.l.b16 %v80
    %v139 = vunpack.c.l.b16 %v81
    %v140 = vpack.c.b16 %v133, %v132
    %v141 = vpack.c.b16 %v135, %v134
    %v142 = vpack.c.b16 %v137, %v136
    %v143 = vpack.c.b16 %v139, %v138
    %v180 = vunpack.c.l.b16 %v82
    %v181 = vunpack.c.h.b16 %v82
    %v182 = vunpack.c.l.b16 %v83
    %v183 = vunpack.c.h.b16 %v83
    %v184 = vunpack.c.l.b16 %v84
    %v185 = vunpack.c.h.b16 %v84
    %v186 = vunpack.c.l.b16 %v85
    %v187 = vunpack.c.h.b16 %v85
    %v188 = vunpack.c.l.b16 %v86
    %v189 = vunpack.c.h.b16 %v86
    %v190 = vunpack.c.l.b16 %v87
    %v191 = vunpack.c.h.b16 %v87
    %v192 = vunpack.c.l.b16 %v88
    %v193 = vunpack.c.h.b16 %v88
    %v194 = vunpack.c.l.b16 %v89
    %v195 = vunpack.c.h.b16 %v89
    %v196 = vunpack.c.l.b16 %v90
    %v197 = vunpack.c.h.b16 %v90
    %v198 = vunpack.c.l.b16 %v91
    %v199 = vunpack.c.h.b16 %v91
    %v200 = vunpack.c.l.b16 %v92
    %v201 = vunpack.c.h.b16 %v92
    %v202 = vunpack.c.l.b16 %v93
    %v203 = vunpack.c.h.b16 %v93
    %v204 = vunpack.c.l.b16 %v94
    %v205 = vunpack.c.h.b16 %v94
    %v206 = vunpack.c.l.b16 %v95
    %v207 = vunpack.c.h.b16 %v95
    %v208 = vunpack.c.l.b16 %v96
    %v209 = vunpack.c.h.b16 %v96
    %v210 = vunpack.c.l.b16 %v97
    %v211 = vunpack.c.h.b16 %v97
    %v212 = vunpack.c.l.b16 %v98
    %v213 = vunpack.c.h.b16 %v98
    %v214 = vunpack.c.l.b16 %v99
    %v215 = vunpack.c.h.b16 %v99
    %v216 = vunpack.c.l.b16 %v100
    %v217 = vunpack.c.h.b16 %v100
    %v218 = vunpack.c.l.b16 %v101
    %v219 = vunpack.c.h.b16 %v101
    %v220 = vunpack.c.l.b16 %v102
    %v221 = vunpack.c.h.b16 %v102
    %v222 = vunpack.c.l.b16 %v103
    %v223 = vunpack.c.h.b16 %v103
    %v224 = vunpack.c.l.b16 %v104
    %v225 = vunpack.c.h.b16 %v104
    %v226 = vunpack.c.l.b16 %v105
    %v227 = vunpack.c.h.b16 %v105
    %v228 = vunpack.c.l.b16 %v106
    %v229 = vunpack.c.h.b16 %v106
    %v230 = vunpack.c.l.b16 %v107
    %v231 = vunpack.c.h.b16 %v107
    %v232 = vunpack.c.l.b16 %v108
    %v233 = vunpack.c.h.b16 %v108
    %v234 = vunpack.c.l.b16 %v109
    %v235 = vunpack.c.h.b16 %v109
    %v236 = vunpack.c.l.b16 %v110
    %v237 = vunpack.c.h.b16 %v110
    %v238 = vunpack.c.l.b16 %v111
    %v239 = vunpack.c.h.b16 %v111
    %v240 = vunpack.c.l.b16 %v112
    %v241 = vunpack.c.h.b16 %v112
    %v242 = vunpack.c.l.b16 %v113
    %v243 = vunpack.c.h.b16 %v113
    %v244 = vpack.c.b16 %v184, %v180
    %v245 = vpack.c.b16 %v185, %v181
    %v246 = vpack.c.b16 %v186, %v182
    %v247 = vpack.c.b16 %v187, %v183
    %v248 = vpack.c.b16 %v192, %v188
    %v249 = vpack.c.b16 %v193, %v189
    %v250 = vpack.c.b16 %v194, %v190
    %v251 = vpack.c.b16 %v195, %v191
    %v252 = vpack.c.b16 %v200, %v196
    %v253 = vpack.c.b16 %v201, %v197
    %v254 = vpack.c.b16 %v202, %v198
    %v255 = vpack.c.b16 %v203, %v199
    %v256 = vpack.c.b16 %v208, %v204
    %v257 = vpack.c.b16 %v209, %v205
    %v258 = vpack.c.b16 %v210, %v206
    %v259 = vpack.c.b16 %v211, %v207
    %v260 = vpack.c.b16 %v216, %v212
    %v261 = vpack.c.b16 %v217, %v213
    %v262 = vpack.c.b16 %v218, %v214
    %v263 = vpack.c.b16 %v219, %v215
    %v264 = vpack.c.b16 %v224, %v220
    %v265 = vpack.c.b16 %v225, %v221
    %v266 = vpack.c.b16 %v226, %v222
    %v267 = vpack.c.b16 %v227, %v223
    %v268 = vpack.c.b16 %v232, %v228
    %v269 = vpack.c.b16 %v233, %v229
    %v270 = vpack.c.b16 %v234, %v230
    %v271 = vpack.c.b16 %v235, %v231
    %v272 = vpack.c.b16 %v240, %v236
    %v273 = vpack.c.b16 %v241, %v237
    %v274 = vpack.c.b16 %v242, %v238
    %v275 = vpack.c.b16 %v243, %v239
    %308 = vmatpush.bf16.msra.mxu0 %v272
    %309 = vmatpush.bf16.msra.mxu0 %v268
    %310 = vmatpush.bf16.msra.mxu0 %v264
    %311 = vmatpush.bf16.msra.mxu0 %v260
    %312 = vmatpush.bf16.msra.mxu0 %v256
    %313 = vmatpush.bf16.msra.mxu0 %v252
    %314 = vmatpush.bf16.msra.mxu0 %v248
    %315 = vmatpush.bf16.msra.mxu0 %v244
    %316 = vmatmul.bf16.gmra.mxu0 %v140
    %v317 = vpop.f32.mrf.mxu0
    %v318 = vadd.f32 %v116, %v317
    %v319 = vpop.f32.mrf.mxu0
    %v320 = vadd.f32 %v116, %v319
    %321 = vmatmul.bf16.gmra.mxu0 %v141
    %v322 = vpop.f32.mrf.mxu0
    %v323 = vadd.f32 %v116, %v322
    %v324 = vpop.f32.mrf.mxu0
    %v325 = vadd.f32 %v116, %v324
    %326 = vmatmul.bf16.gmra.mxu0 %v142
    %v327 = vpop.f32.mrf.mxu0
    %v328 = vadd.f32 %v116, %v327
    %v329 = vpop.f32.mrf.mxu0
    %v330 = vadd.f32 %v116, %v329
    %331 = vmatmul.bf16.gmra.mxu0 %v143
    %v332 = vpop.f32.mrf.mxu0
    %v333 = vadd.f32 %v116, %v332
    %v334 = vpop.f32.mrf.mxu0
    %v335 = vadd.f32 %v116, %v334
    %336 = vdwg.mxu0
    %337 = vmatpush.bf16.msra.mxu0 %v273
    %338 = vmatpush.bf16.msra.mxu0 %v269
    %339 = vmatpush.bf16.msra.mxu0 %v265
    %340 = vmatpush.bf16.msra.mxu0 %v261
    %341 = vmatpush.bf16.msra.mxu0 %v257
    %342 = vmatpush.bf16.msra.mxu0 %v253
    %343 = vmatpush.bf16.msra.mxu0 %v249
    %344 = vmatpush.bf16.msra.mxu0 %v245
    %345 = vmatmul.bf16.gmra.mxu0 %v140
    %v346 = vpop.f32.mrf.mxu0
    %v347 = vadd.f32 %v117, %v346
    %v348 = vpop.f32.mrf.mxu0
    %v349 = vadd.f32 %v117, %v348
    %350 = vmatmul.bf16.gmra.mxu0 %v141
    %v351 = vpop.f32.mrf.mxu0
    %v352 = vadd.f32 %v117, %v351
    %v353 = vpop.f32.mrf.mxu0
    %v354 = vadd.f32 %v117, %v353
    %355 = vmatmul.bf16.gmra.mxu0 %v142
    %v356 = vpop.f32.mrf.mxu0
    %v357 = vadd.f32 %v117, %v356
    %v358 = vpop.f32.mrf.mxu0
    %v359 = vadd.f32 %v117, %v358
    %360 = vmatmul.bf16.gmra.mxu0 %v143
    %v361 = vpop.f32.mrf.mxu0
    %v362 = vadd.f32 %v117, %v361
    %v363 = vpop.f32.mrf.mxu0
    %v364 = vadd.f32 %v117, %v363
    %365 = vdwg.mxu0
    %366 = vmatpush.bf16.msra.mxu0 %v274
    %367 = vmatpush.bf16.msra.mxu0 %v270
    %368 = vmatpush.bf16.msra.mxu0 %v266
    %369 = vmatpush.bf16.msra.mxu0 %v262
    %370 = vmatpush.bf16.msra.mxu0 %v258
    %371 = vmatpush.bf16.msra.mxu0 %v254
    %372 = vmatpush.bf16.msra.mxu0 %v250
    %373 = vmatpush.bf16.msra.mxu0 %v246
    %374 = vmatmul.bf16.gmra.mxu0 %v140
    %v375 = vpop.f32.mrf.mxu0
    %v376 = vadd.f32 %v118, %v375
    %v377 = vpop.f32.mrf.mxu0
    %v378 = vadd.f32 %v118, %v377
    %379 = vmatmul.bf16.gmra.mxu0 %v141
    %v380 = vpop.f32.mrf.mxu0
    %v381 = vadd.f32 %v118, %v380
    %v382 = vpop.f32.mrf.mxu0
    %v383 = vadd.f32 %v118, %v382
    %384 = vmatmul.bf16.gmra.mxu0 %v142
    %v385 = vpop.f32.mrf.mxu0
    %v386 = vadd.f32 %v118, %v385
    %v387 = vpop.f32.mrf.mxu0
    %v388 = vadd.f32 %v118, %v387
    %389 = vmatmul.bf16.gmra.mxu0 %v143
    %v390 = vpop.f32.mrf.mxu0
    %v391 = vadd.f32 %v118, %v390
    %v392 = vpop.f32.mrf.mxu0
    %v393 = vadd.f32 %v118, %v392
    %394 = vdwg.mxu0
    %395 = vmatpush.bf16.msra.mxu0 %v275
    %396 = vmatpush.bf16.msra.mxu0 %v271
    %397 = vmatpush.bf16.msra.mxu0 %v267
    %398 = vmatpush.bf16.msra.mxu0 %v263
    %399 = vmatpush.bf16.msra.mxu0 %v259
    %400 = vmatpush.bf16.msra.mxu0 %v255
    %401 = vmatpush.bf16.msra.mxu0 %v251
    %402 = vmatpush.bf16.msra.mxu0 %v247
    %403 = vmatmul.bf16.gmra.mxu0 %v140
    %v404 = vpop.f32.mrf.mxu0
    %v405 = vadd.f32 %v119, %v404
    %v406 = vpop.f32.mrf.mxu0
    %v407 = vadd.f32 %v119, %v406
    %408 = vmatmul.bf16.gmra.mxu0 %v141
    %v409 = vpop.f32.mrf.mxu0
    %v410 = vadd.f32 %v119, %v409
    %v411 = vpop.f32.mrf.mxu0
    %v412 = vadd.f32 %v119, %v411
    %413 = vmatmul.bf16.gmra.mxu0 %v142
    %v414 = vpop.f32.mrf.mxu0
    %v415 = vadd.f32 %v119, %v414
    %v416 = vpop.f32.mrf.mxu0
    %v417 = vadd.f32 %v119, %v416
    %418 = vmatmul.bf16.gmra.mxu0 %v143
    %v419 = vpop.f32.mrf.mxu0
    %v420 = vadd.f32 %v119, %v419
    %v421 = vpop.f32.mrf.mxu0
    %v422 = vadd.f32 %v119, %v421
    %423 = vdwg.mxu0
    %424 = vst [vmem:[#allocation4] sm:$0xff] %v318
    %425 = vst [vmem:[#allocation4 + $0x8] sm:$0xff] %v347
    %426 = vst [vmem:[#allocation4 + $0x10] sm:$0xff] %v376
    %427 = vst [vmem:[#allocation4 + $0x18] sm:$0xff] %v405
    %428 = vst [vmem:[#allocation4 + $0x20] sm:$0xff] %v320
    %429 = vst [vmem:[#allocation4 + $0x28] sm:$0xff] %v349
    %430 = vst [vmem:[#allocation4 + $0x30] sm:$0xff] %v378
    %431 = vst [vmem:[#allocation4 + $0x38] sm:$0xff] %v407
    %432 = vst [vmem:[#allocation4 + $0x40] sm:$0xff] %v323
    %433 = vst [vmem:[#allocation4 + $0x48] sm:$0xff] %v352
    %434 = vst [vmem:[#allocation4 + $0x50] sm:$0xff] %v381
    %435 = vst [vmem:[#allocation4 + $0x58] sm:$0xff] %v410
    %436 = vst [vmem:[#allocation4 + $0x60] sm:$0xff] %v325
    %437 = vst [vmem:[#allocation4 + $0x68] sm:$0xff] %v354
    %438 = vst [vmem:[#allocation4 + $0x70] sm:$0xff] %v383
    %439 = vst [vmem:[#allocation4 + $0x78] sm:$0xff] %v412
    %440 = vst [vmem:[#allocation4 + $0x80] sm:$0xff] %v328
    %441 = vst [vmem:[#allocation4 + $0x88] sm:$0xff] %v357
    %442 = vst [vmem:[#allocation4 + $0x90] sm:$0xff] %v386
    %443 = vst [vmem:[#allocation4 + $0x98] sm:$0xff] %v415
    %444 = vst [vmem:[#allocation4 + $0xa0] sm:$0xff] %v330
    %445 = vst [vmem:[#allocation4 + $0xa8] sm:$0xff] %v359
    %446 = vst [vmem:[#allocation4 + $0xb0] sm:$0xff] %v388
    %447 = vst [vmem:[#allocation4 + $0xb8] sm:$0xff] %v417
    %448 = vst [vmem:[#allocation4 + $0xc0] sm:$0xff] %v333
    %449 = vst [vmem:[#allocation4 + $0xc8] sm:$0xff] %v362
    %450 = vst [vmem:[#allocation4 + $0xd0] sm:$0xff] %v391
    %451 = vst [vmem:[#allocation4 + $0xd8] sm:$0xff] %v420
    %452 = vst [vmem:[#allocation4 + $0xe0] sm:$0xff] %v335
    %453 = vst [vmem:[#allocation4 + $0xe8] sm:$0xff] %v364
    %454 = vst [vmem:[#allocation4 + $0xf0] sm:$0xff] %v393
    %455 = vst [vmem:[#allocation4 + $0xf8] sm:$0xff] %v422
    %v456 = vld [vmem:[#allocation7] sm:$0xff]
    %v457 = vld [vmem:[#allocation7 + $0x8] sm:$0xff]
    %v458 = vld [vmem:[#allocation7 + $0x10] sm:$0xff]
    %v459 = vld [vmem:[#allocation7 + $0x18] sm:$0xff]
    %v460 = vld [vmem:[#allocation7 + $0x20] sm:$0xff]
    %v461 = vld [vmem:[#allocation7 + $0x28] sm:$0xff]
    %v462 = vld [vmem:[#allocation7 + $0x30] sm:$0xff]
    %v463 = vld [vmem:[#allocation7 + $0x38] sm:$0xff]
    %v464 = vld [vmem:[#allocation7 + $0x40] sm:$0xff]
    %v465 = vld [vmem:[#allocation7 + $0x48] sm:$0xff]
    %v466 = vld [vmem:[#allocation7 + $0x50] sm:$0xff]
    %v467 = vld [vmem:[#allocation7 + $0x58] sm:$0xff]
    %v468 = vld [vmem:[#allocation7 + $0x60] sm:$0xff]
    %v469 = vld [vmem:[#allocation7 + $0x68] sm:$0xff]
    %v470 = vld [vmem:[#allocation7 + $0x70] sm:$0xff]
    %v471 = vld [vmem:[#allocation7 + $0x78] sm:$0xff]
    %v472 = vld [vmem:[#allocation7 + $0x80] sm:$0xff]
    %v473 = vld [vmem:[#allocation7 + $0x88] sm:$0xff]
    %v474 = vld [vmem:[#allocation7 + $0x90] sm:$0xff]
    %v475 = vld [vmem:[#allocation7 + $0x98] sm:$0xff]
    %v476 = vld [vmem:[#allocation7 + $0xa0] sm:$0xff]
    %v477 = vld [vmem:[#allocation7 + $0xa8] sm:$0xff]
    %v478 = vld [vmem:[#allocation7 + $0xb0] sm:$0xff]
    %v479 = vld [vmem:[#allocation7 + $0xb8] sm:$0xff]
    %v480 = vld [vmem:[#allocation7 + $0xc0] sm:$0xff]
    %v481 = vld [vmem:[#allocation7 + $0xc8] sm:$0xff]
    %v482 = vld [vmem:[#allocation7 + $0xd0] sm:$0xff]
    %v483 = vld [vmem:[#allocation7 + $0xd8] sm:$0xff]
    %v484 = vld [vmem:[#allocation7 + $0xe0] sm:$0xff]
    %v485 = vld [vmem:[#allocation7 + $0xe8] sm:$0xff]
    %v486 = vld [vmem:[#allocation7 + $0xf0] sm:$0xff]
    %v487 = vld [vmem:[#allocation7 + $0xf8] sm:$0xff]
    %s488 = smul.u32 0, 4
    %s489 = smul.addr %s488, 8
    %s490 = scalar_lea.vmem [#allocation4], %s489
    %v491 = vld [vmem:[%s490] sm:$0xff]
    %v492 = vld [vmem:[%s490 + $0x8] sm:$0xff]
    %v493 = vld [vmem:[%s490 + $0x10] sm:$0xff]
    %v494 = vld [vmem:[%s490 + $0x18] sm:$0xff]
    %v495 = vpack.c.bf16 %v72, %v72
    %v528 = vunpack.c.l.b16 %v456
    %v529 = vunpack.c.h.b16 %v456
    %v530 = vunpack.c.l.b16 %v457
    %v531 = vunpack.c.h.b16 %v457
    %v532 = vunpack.c.l.b16 %v458
    %v533 = vunpack.c.h.b16 %v458
    %v534 = vunpack.c.l.b16 %v459
    %v535 = vunpack.c.h.b16 %v459
    %v536 = vunpack.c.l.b16 %v460
    %v537 = vunpack.c.h.b16 %v460
    %v538 = vunpack.c.l.b16 %v461
    %v539 = vunpack.c.h.b16 %v461
    %v540 = vunpack.c.l.b16 %v462
    %v541 = vunpack.c.h.b16 %v462
    %v542 = vunpack.c.l.b16 %v463
    %v543 = vunpack.c.h.b16 %v463
    %v544 = vunpack.c.l.b16 %v464
    %v545 = vunpack.c.h.b16 %v464
    %v546 = vunpack.c.l.b16 %v465
    %v547 = vunpack.c.h.b16 %v465
    %v548 = vunpack.c.l.b16 %v466
    %v549 = vunpack.c.h.b16 %v466
    %v550 = vunpack.c.l.b16 %v467
    %v551 = vunpack.c.h.b16 %v467
    %v552 = vunpack.c.l.b16 %v468
    %v553 = vunpack.c.h.b16 %v468
    %v554 = vunpack.c.l.b16 %v469
    %v555 = vunpack.c.h.b16 %v469
    %v556 = vunpack.c.l.b16 %v470
    %v557 = vunpack.c.h.b16 %v470
    %v558 = vunpack.c.l.b16 %v471
    %v559 = vunpack.c.h.b16 %v471
    %v560 = vunpack.c.l.b16 %v472
    %v561 = vunpack.c.h.b16 %v472
    %v562 = vunpack.c.l.b16 %v473
    %v563 = vunpack.c.h.b16 %v473
    %v564 = vunpack.c.l.b16 %v474
    %v565 = vunpack.c.h.b16 %v474
    %v566 = vunpack.c.l.b16 %v475
    %v567 = vunpack.c.h.b16 %v475
    %v568 = vunpack.c.l.b16 %v476
    %v569 = vunpack.c.h.b16 %v476
    %v570 = vunpack.c.l.b16 %v477
    %v571 = vunpack.c.h.b16 %v477
    %v572 = vunpack.c.l.b16 %v478
    %v573 = vunpack.c.h.b16 %v478
    %v574 = vunpack.c.l.b16 %v479
    %v575 = vunpack.c.h.b16 %v479
    %v576 = vunpack.c.l.b16 %v480
    %v577 = vunpack.c.h.b16 %v480
    %v578 = vunpack.c.l.b16 %v481
    %v579 = vunpack.c.h.b16 %v481
    %v580 = vunpack.c.l.b16 %v482
    %v581 = vunpack.c.h.b16 %v482
    %v582 = vunpack.c.l.b16 %v483
    %v583 = vunpack.c.h.b16 %v483
    %v584 = vunpack.c.l.b16 %v484
    %v585 = vunpack.c.h.b16 %v484
    %v586 = vunpack.c.l.b16 %v485
    %v587 = vunpack.c.h.b16 %v485
    %v588 = vunpack.c.l.b16 %v486
    %v589 = vunpack.c.h.b16 %v486
    %v590 = vunpack.c.l.b16 %v487
    %v591 = vunpack.c.h.b16 %v487
    %v592 = vpack.c.b16 %v532, %v528
    %v593 = vpack.c.b16 %v533, %v529
    %v594 = vpack.c.b16 %v534, %v530
    %v595 = vpack.c.b16 %v535, %v531
    %v596 = vpack.c.b16 %v540, %v536
    %v597 = vpack.c.b16 %v541, %v537
    %v598 = vpack.c.b16 %v542, %v538
    %v599 = vpack.c.b16 %v543, %v539
    %v600 = vpack.c.b16 %v548, %v544
    %v601 = vpack.c.b16 %v549, %v545
    %v602 = vpack.c.b16 %v550, %v546
    %v603 = vpack.c.b16 %v551, %v547
    %v604 = vpack.c.b16 %v556, %v552
    %v605 = vpack.c.b16 %v557, %v553
    %v606 = vpack.c.b16 %v558, %v554
    %v607 = vpack.c.b16 %v559, %v555
    %v608 = vpack.c.b16 %v564, %v560
    %v609 = vpack.c.b16 %v565, %v561
    %v610 = vpack.c.b16 %v566, %v562
    %v611 = vpack.c.b16 %v567, %v563
    %v612 = vpack.c.b16 %v572, %v568
    %v613 = vpack.c.b16 %v573, %v569
    %v614 = vpack.c.b16 %v574, %v570
    %v615 = vpack.c.b16 %v575, %v571
    %v616 = vpack.c.b16 %v580, %v576
    %v617 = vpack.c.b16 %v581, %v577
    %v618 = vpack.c.b16 %v582, %v578
    %v619 = vpack.c.b16 %v583, %v579
    %v620 = vpack.c.b16 %v588, %v584
    %v621 = vpack.c.b16 %v589, %v585
    %v622 = vpack.c.b16 %v590, %v586
    %v623 = vpack.c.b16 %v591, %v587
    %656 = vmatpush.bf16.msra.mxu0 %v620
    %657 = vmatpush.bf16.msra.mxu0 %v616
    %658 = vmatpush.bf16.msra.mxu0 %v612
    %659 = vmatpush.bf16.msra.mxu0 %v608
    %660 = vmatpush.bf16.msra.mxu0 %v604
    %661 = vmatpush.bf16.msra.mxu0 %v600
    %662 = vmatpush.bf16.msra.mxu0 %v596
    %663 = vmatpush.bf16.msra.mxu0 %v592
    %664 = vmatmul.bf16.gmra.mxu0 %v495
    %v665 = vpop.f32.mrf.mxu0
    %v666 = vadd.f32 0.0, %v665
    %v667 = vpop.f32.mrf.mxu0
    %668 = vdwg.mxu0
    %669 = vmatpush.bf16.msra.mxu0 %v621
    %670 = vmatpush.bf16.msra.mxu0 %v617
    %671 = vmatpush.bf16.msra.mxu0 %v613
    %672 = vmatpush.bf16.msra.mxu0 %v609
    %673 = vmatpush.bf16.msra.mxu0 %v605
    %674 = vmatpush.bf16.msra.mxu0 %v601
    %675 = vmatpush.bf16.msra.mxu0 %v597
    %676 = vmatpush.bf16.msra.mxu0 %v593
    %677 = vmatmul.bf16.gmra.mxu0 %v495
    %v678 = vpop.f32.mrf.mxu0
    %v679 = vadd.f32 0.0, %v678
    %v680 = vpop.f32.mrf.mxu0
    %681 = vdwg.mxu0
    %682 = vmatpush.bf16.msra.mxu0 %v622
    %683 = vmatpush.bf16.msra.mxu0 %v618
    %684 = vmatpush.bf16.msra.mxu0 %v614
    %685 = vmatpush.bf16.msra.mxu0 %v610
    %686 = vmatpush.bf16.msra.mxu0 %v606
    %687 = vmatpush.bf16.msra.mxu0 %v602
    %688 = vmatpush.bf16.msra.mxu0 %v598
    %689 = vmatpush.bf16.msra.mxu0 %v594
    %690 = vmatmul.bf16.gmra.mxu0 %v495
    %v691 = vpop.f32.mrf.mxu0
    %v692 = vadd.f32 0.0, %v691
    %v693 = vpop.f32.mrf.mxu0
    %694 = vdwg.mxu0
    %695 = vmatpush.bf16.msra.mxu0 %v623
    %696 = vmatpush.bf16.msra.mxu0 %v619
    %697 = vmatpush.bf16.msra.mxu0 %v615
    %698 = vmatpush.bf16.msra.mxu0 %v611
    %699 = vmatpush.bf16.msra.mxu0 %v607
    %700 = vmatpush.bf16.msra.mxu0 %v603
    %701 = vmatpush.bf16.msra.mxu0 %v599
    %702 = vmatpush.bf16.msra.mxu0 %v595
    %703 = vmatmul.bf16.gmra.mxu0 %v495
    %v704 = vpop.f32.mrf.mxu0
    %v705 = vadd.f32 0.0, %v704
    %v706 = vpop.f32.mrf.mxu0
    %707 = vdwg.mxu0
    %v708 = vadd.f32 %v491, %v666
    %v709 = vadd.f32 %v492, %v679
    %v710 = vadd.f32 %v493, %v692
    %v711 = vadd.f32 %v494, %v705
    %v712 = vxor.u32 %v708, 2147483648
    %v713 = vxor.u32 %v709, 2147483648
    %v714 = vxor.u32 %v710, 2147483648
    %v715 = vmul.f32 %v712, 1.442695
    %v716 = vpow.pop %v715
    %v717 = vmul.f32 %v713, 1.442695
    %v718 = vpow.pop %v717
    %v719 = vmul.f32 %v714, 1.442695
    %v720 = vpow.pop %v719
    %v721 = vadd.f32 %v716, 1.0
    %v722 = vadd.f32 %v718, 1.0
    %v723 = vadd.f32 %v720, 1.0
    %v724 = vrcp.pop %v721
    %v725 = vmul.f32 %v721, %v724
    %v726 = vsub.f32 1.0, %v725
    %v727 = vmul.f32 %v724, %v726
    %v728 = vadd.f32 %v724, %v727
    %vm729 = vweird.f32 %v721
    %vm730 = vweird.f32 %v724
    %vm731 = vmor %vm729, %vm730
    %v732 = vsel %vm731, %v724, %v728
    %v733 = vand.u32 2147483647, %v721
    %vm734 = vcmp.eq.f32.partialorder %v733, 8.507059e+37
    %v735 = vand.u32 %v721, 2147483648
    %v736 = vor.u32 1.1754944e-38, %v735
    %v737 = vsel %vm734, %v736, %v732
    %v738 = vmul.f32 1.0, %v737
    %v739 = vrcp.pop %v722
    %v740 = vmul.f32 %v722, %v739
    %v741 = vsub.f32 1.0, %v740
    %v742 = vmul.f32 %v739, %v741
    %v743 = vadd.f32 %v739, %v742
    %vm744 = vweird.f32 %v722
    %vm745 = vweird.f32 %v739
    %vm746 = vmor %vm744, %vm745
    %v747 = vsel %vm746, %v739, %v743
    %v748 = vand.u32 2147483647, %v722
    %vm749 = vcmp.eq.f32.partialorder %v748, 8.507059e+37
    %v750 = vand.u32 %v722, 2147483648
    %v751 = vor.u32 1.1754944e-38, %v750
    %v752 = vsel %vm749, %v751, %v747
    %v753 = vmul.f32 1.0, %v752
    %v754 = vrcp.pop %v723
    %v755 = vmul.f32 %v723, %v754
    %v756 = vsub.f32 1.0, %v755
    %v757 = vmul.f32 %v754, %v756
    %v758 = vadd.f32 %v754, %v757
    %vm759 = vweird.f32 %v723
    %vm760 = vweird.f32 %v754
    %vm761 = vmor %vm759, %vm760
    %v762 = vsel %vm761, %v754, %v758
    %v763 = vand.u32 2147483647, %v723
    %vm764 = vcmp.eq.f32.partialorder %v763, 8.507059e+37
    %v765 = vand.u32 %v723, 2147483648
    %v766 = vor.u32 1.1754944e-38, %v765
    %v767 = vsel %vm764, %v766, %v762
    %v768 = vmul.f32 1.0, %v767
    %v769 = vtanh.pop %v711
    %v770 = vmul.f32 %v753, %v73
    %v771 = vmul.f32 %v738, %v769
    %v772 = vadd.f32 %v770, %v771
    %v773 = vtanh.pop %v772
    %v774 = vmul.f32 %v768, %v773
    %s775 = smul.u32 1, 4
    %s776 = smul.addr %s775, 8
    %s777 = scalar_lea.vmem [#allocation4], %s776
    %v778 = vld [vmem:[%s777] sm:$0xff]
    %v779 = vld [vmem:[%s777 + $0x8] sm:$0xff]
    %v780 = vld [vmem:[%s777 + $0x10] sm:$0xff]
    %v781 = vld [vmem:[%s777 + $0x18] sm:$0xff]
    %v782 = vpack.c.bf16 %v774, %v774
    %783 = vmatpush.bf16.msra.mxu0 %v620
    %784 = vmatpush.bf16.msra.mxu0 %v616
    %785 = vmatpush.bf16.msra.mxu0 %v612
    %786 = vmatpush.bf16.msra.mxu0 %v608
    %787 = vmatpush.bf16.msra.mxu0 %v604
    %788 = vmatpush.bf16.msra.mxu0 %v600
    %789 = vmatpush.bf16.msra.mxu0 %v596
    %790 = vmatpush.bf16.msra.mxu0 %v592
    %791 = vmatmul.bf16.gmra.mxu0 %v782
    %v792 = vpop.f32.mrf.mxu0
    %v793 = vadd.f32 0.0, %v792
    %v794 = vpop.f32.mrf.mxu0
    %795 = vdwg.mxu0
    %796 = vmatpush.bf16.msra.mxu0 %v621
    %797 = vmatpush.bf16.msra.mxu0 %v617
    %798 = vmatpush.bf16.msra.mxu0 %v613
    %799 = vmatpush.bf16.msra.mxu0 %v609
    %800 = vmatpush.bf16.msra.mxu0 %v605
    %801 = vmatpush.bf16.msra.mxu0 %v601
    %802 = vmatpush.bf16.msra.mxu0 %v597
    %803 = vmatpush.bf16.msra.mxu0 %v593
    %804 = vmatmul.bf16.gmra.mxu0 %v782
    %v805 = vpop.f32.mrf.mxu0
    %v806 = vadd.f32 0.0, %v805
    %v807 = vpop.f32.mrf.mxu0
    %808 = vdwg.mxu0
    %809 = vmatpush.bf16.msra.mxu0 %v622
    %810 = vmatpush.bf16.msra.mxu0 %v618
    %811 = vmatpush.bf16.msra.mxu0 %v614
    %812 = vmatpush.bf16.msra.mxu0 %v610
    %813 = vmatpush.bf16.msra.mxu0 %v606
    %814 = vmatpush.bf16.msra.mxu0 %v602
    %815 = vmatpush.bf16.msra.mxu0 %v598
    %816 = vmatpush.bf16.msra.mxu0 %v594
    %817 = vmatmul.bf16.gmra.mxu0 %v782
    %v818 = vpop.f32.mrf.mxu0
    %v819 = vadd.f32 0.0, %v818
    %v820 = vpop.f32.mrf.mxu0
    %821 = vdwg.mxu0
    %822 = vmatpush.bf16.msra.mxu0 %v623
    %823 = vmatpush.bf16.msra.mxu0 %v619
    %824 = vmatpush.bf16.msra.mxu0 %v615
    %825 = vmatpush.bf16.msra.mxu0 %v611
    %826 = vmatpush.bf16.msra.mxu0 %v607
    %827 = vmatpush.bf16.msra.mxu0 %v603
    %828 = vmatpush.bf16.msra.mxu0 %v599
    %829 = vmatpush.bf16.msra.mxu0 %v595
    %830 = vmatmul.bf16.gmra.mxu0 %v782
    %v831 = vpop.f32.mrf.mxu0
    %v832 = vadd.f32 0.0, %v831
    %v833 = vpop.f32.mrf.mxu0
    %834 = vdwg.mxu0
    %v835 = vadd.f32 %v778, %v793
    %v836 = vadd.f32 %v779, %v806
    %v837 = vadd.f32 %v780, %v819
    %v838 = vadd.f32 %v781, %v832
    %v839 = vxor.u32 %v835, 2147483648
    %v840 = vxor.u32 %v836, 2147483648
    %v841 = vxor.u32 %v837, 2147483648
    %v842 = vmul.f32 %v839, 1.442695
    %v843 = vpow.pop %v842
    %v844 = vmul.f32 %v840, 1.442695
    %v845 = vpow.pop %v844
    %v846 = vmul.f32 %v841, 1.442695
    %v847 = vpow.pop %v846
    %v848 = vadd.f32 %v843, 1.0
    %v849 = vadd.f32 %v845, 1.0
    %v850 = vadd.f32 %v847, 1.0
    %v851 = vrcp.pop %v848
    %v852 = vmul.f32 %v848, %v851
    %v853 = vsub.f32 1.0, %v852
    %v854 = vmul.f32 %v851, %v853
    %v855 = vadd.f32 %v851, %v854
    %vm856 = vweird.f32 %v848
    %vm857 = vweird.f32 %v851
    %vm858 = vmor %vm856, %vm857
    %v859 = vsel %vm858, %v851, %v855
    %v860 = vand.u32 2147483647, %v848
    %vm861 = vcmp.eq.f32.partialorder %v860, 8.507059e+37
    %v862 = vand.u32 %v848, 2147483648
    %v863 = vor.u32 1.1754944e-38, %v862
    %v864 = vsel %vm861, %v863, %v859
    %v865 = vmul.f32 1.0, %v864
    %v866 = vrcp.pop %v849
    %v867 = vmul.f32 %v849, %v866
    %v868 = vsub.f32 1.0, %v867
    %v869 = vmul.f32 %v866, %v868
    %v870 = vadd.f32 %v866, %v869
    %vm871 = vweird.f32 %v849
    %vm872 = vweird.f32 %v866
    %vm873 = vmor %vm871, %vm872
    %v874 = vsel %vm873, %v866, %v870
    %v875 = vand.u32 2147483647, %v849
    %vm876 = vcmp.eq.f32.partialorder %v875, 8.507059e+37
    %v877 = vand.u32 %v849, 2147483648
    %v878 = vor.u32 1.1754944e-38, %v877
    %v879 = vsel %vm876, %v878, %v874
    %v880 = vmul.f32 1.0, %v879
    %v881 = vrcp.pop %v850
    %v882 = vmul.f32 %v850, %v881
    %v883 = vsub.f32 1.0, %v882
    %v884 = vmul.f32 %v881, %v883
    %v885 = vadd.f32 %v881, %v884
    %vm886 = vweird.f32 %v850
    %vm887 = vweird.f32 %v881
    %vm888 = vmor %vm886, %vm887
    %v889 = vsel %vm888, %v881, %v885
    %v890 = vand.u32 2147483647, %v850
    %vm891 = vcmp.eq.f32.partialorder %v890, 8.507059e+37
    %v892 = vand.u32 %v850, 2147483648
    %v893 = vor.u32 1.1754944e-38, %v892
    %v894 = vsel %vm891, %v893, %v889
    %v895 = vmul.f32 1.0, %v894
    %v896 = vtanh.pop %v838
    %v897 = vmul.f32 %v880, %v772
    %v898 = vmul.f32 %v865, %v896
    %v899 = vadd.f32 %v897, %v898
    %v900 = vtanh.pop %v899
    %v901 = vmul.f32 %v895, %v900
    %s902 = smul.u32 2, 4
    %s903 = smul.addr %s902, 8
    %s904 = scalar_lea.vmem [#allocation4], %s903
    %v905 = vld [vmem:[%s904] sm:$0xff]
    %v906 = vld [vmem:[%s904 + $0x8] sm:$0xff]
    %v907 = vld [vmem:[%s904 + $0x10] sm:$0xff]
    %v908 = vld [vmem:[%s904 + $0x18] sm:$0xff]
    %v909 = vpack.c.bf16 %v901, %v901
    %910 = vmatpush.bf16.msra.mxu0 %v620
    %911 = vmatpush.bf16.msra.mxu0 %v616
    %912 = vmatpush.bf16.msra.mxu0 %v612
    %913 = vmatpush.bf16.msra.mxu0 %v608
    %914 = vmatpush.bf16.msra.mxu0 %v604
    %915 = vmatpush.bf16.msra.mxu0 %v600
    %916 = vmatpush.bf16.msra.mxu0 %v596
    %917 = vmatpush.bf16.msra.mxu0 %v592
    %918 = vmatmul.bf16.gmra.mxu0 %v909
    %v919 = vpop.f32.mrf.mxu0
    %v920 = vadd.f32 0.0, %v919
    %v921 = vpop.f32.mrf.mxu0
    %922 = vdwg.mxu0
    %923 = vmatpush.bf16.msra.mxu0 %v621
    %924 = vmatpush.bf16.msra.mxu0 %v617
    %925 = vmatpush.bf16.msra.mxu0 %v613
    %926 = vmatpush.bf16.msra.mxu0 %v609
    %927 = vmatpush.bf16.msra.mxu0 %v605
    %928 = vmatpush.bf16.msra.mxu0 %v601
    %929 = vmatpush.bf16.msra.mxu0 %v597
    %930 = vmatpush.bf16.msra.mxu0 %v593
    %931 = vmatmul.bf16.gmra.mxu0 %v909
    %v932 = vpop.f32.mrf.mxu0
    %v933 = vadd.f32 0.0, %v932
    %v934 = vpop.f32.mrf.mxu0
    %935 = vdwg.mxu0
    %936 = vmatpush.bf16.msra.mxu0 %v622
    %937 = vmatpush.bf16.msra.mxu0 %v618
    %938 = vmatpush.bf16.msra.mxu0 %v614
    %939 = vmatpush.bf16.msra.mxu0 %v610
    %940 = vmatpush.bf16.msra.mxu0 %v606
    %941 = vmatpush.bf16.msra.mxu0 %v602
    %942 = vmatpush.bf16.msra.mxu0 %v598
    %943 = vmatpush.bf16.msra.mxu0 %v594
    %944 = vmatmul.bf16.gmra.mxu0 %v909
    %v945 = vpop.f32.mrf.mxu0
    %v946 = vadd.f32 0.0, %v945
    %v947 = vpop.f32.mrf.mxu0
    %948 = vdwg.mxu0
    %949 = vmatpush.bf16.msra.mxu0 %v623
    %950 = vmatpush.bf16.msra.mxu0 %v619
    %951 = vmatpush.bf16.msra.mxu0 %v615
    %952 = vmatpush.bf16.msra.mxu0 %v611
    %953 = vmatpush.bf16.msra.mxu0 %v607
    %954 = vmatpush.bf16.msra.mxu0 %v603
    %955 = vmatpush.bf16.msra.mxu0 %v599
    %956 = vmatpush.bf16.msra.mxu0 %v595
    %957 = vmatmul.bf16.gmra.mxu0 %v909
    %v958 = vpop.f32.mrf.mxu0
    %v959 = vadd.f32 0.0, %v958
    %v960 = vpop.f32.mrf.mxu0
    %961 = vdwg.mxu0
    %v962 = vadd.f32 %v905, %v920
    %v963 = vadd.f32 %v906, %v933
    %v964 = vadd.f32 %v907, %v946
    %v965 = vadd.f32 %v908, %v959
    %v966 = vxor.u32 %v962, 2147483648
    %v967 = vxor.u32 %v963, 2147483648
    %v968 = vxor.u32 %v964, 2147483648
    %v969 = vmul.f32 %v966, 1.442695
    %v970 = vpow.pop %v969
    %v971 = vmul.f32 %v967, 1.442695
    %v972 = vpow.pop %v971
    %v973 = vmul.f32 %v968, 1.442695
    %v974 = vpow.pop %v973
    %v975 = vadd.f32 %v970, 1.0
    %v976 = vadd.f32 %v972, 1.0
    %v977 = vadd.f32 %v974, 1.0
    %v978 = vrcp.pop %v975
    %v979 = vmul.f32 %v975, %v978
    %v980 = vsub.f32 1.0, %v979
    %v981 = vmul.f32 %v978, %v980
    %v982 = vadd.f32 %v978, %v981
    %vm983 = vweird.f32 %v975
    %vm984 = vweird.f32 %v978
    %vm985 = vmor %vm983, %vm984
    %v986 = vsel %vm985, %v978, %v982
    %v987 = vand.u32 2147483647, %v975
    %vm988 = vcmp.eq.f32.partialorder %v987, 8.507059e+37
    %v989 = vand.u32 %v975, 2147483648
    %v990 = vor.u32 1.1754944e-38, %v989
    %v991 = vsel %vm988, %v990, %v986
    %v992 = vmul.f32 1.0, %v991
    %v993 = vrcp.pop %v976
    %v994 = vmul.f32 %v976, %v993
    %v995 = vsub.f32 1.0, %v994
    %v996 = vmul.f32 %v993, %v995
    %v997 = vadd.f32 %v993, %v996
    %vm998 = vweird.f32 %v976
    %vm999 = vweird.f32 %v993
    %vm1000 = vmor %vm998, %vm999
    %v1001 = vsel %vm1000, %v993, %v997
    %v1002 = vand.u32 2147483647, %v976
    %vm1003 = vcmp.eq.f32.partialorder %v1002, 8.507059e+37
    %v1004 = vand.u32 %v976, 2147483648
    %v1005 = vor.u32 1.1754944e-38, %v1004
    %v1006 = vsel %vm1003, %v1005, %v1001
    %v1007 = vmul.f32 1.0, %v1006
    %v1008 = vrcp.pop %v977
    %v1009 = vmul.f32 %v977, %v1008
    %v1010 = vsub.f32 1.0, %v1009
    %v1011 = vmul.f32 %v1008, %v1010
    %v1012 = vadd.f32 %v1008, %v1011
    %vm1013 = vweird.f32 %v977
    %vm1014 = vweird.f32 %v1008
    %vm1015 = vmor %vm1013, %vm1014
    %v1016 = vsel %vm1015, %v1008, %v1012
    %v1017 = vand.u32 2147483647, %v977
    %vm1018 = vcmp.eq.f32.partialorder %v1017, 8.507059e+37
    %v1019 = vand.u32 %v977, 2147483648
    %v1020 = vor.u32 1.1754944e-38, %v1019
    %v1021 = vsel %vm1018, %v1020, %v1016
    %v1022 = vmul.f32 1.0, %v1021
    %v1023 = vtanh.pop %v965
    %v1024 = vmul.f32 %v1007, %v899
    %v1025 = vmul.f32 %v992, %v1023
    %v1026 = vadd.f32 %v1024, %v1025
    %v1027 = vtanh.pop %v1026
    %v1028 = vmul.f32 %v1022, %v1027
    %s1029 = smul.u32 3, 4
    %s1030 = smul.addr %s1029, 8
    %s1031 = scalar_lea.vmem [#allocation4], %s1030
    %v1032 = vld [vmem:[%s1031] sm:$0xff]
    %v1033 = vld [vmem:[%s1031 + $0x8] sm:$0xff]
    %v1034 = vld [vmem:[%s1031 + $0x10] sm:$0xff]
    %v1035 = vld [vmem:[%s1031 + $0x18] sm:$0xff]
    %v1036 = vpack.c.bf16 %v1028, %v1028
    %1037 = vmatpush.bf16.msra.mxu0 %v620
    %1038 = vmatpush.bf16.msra.mxu0 %v616
    %1039 = vmatpush.bf16.msra.mxu0 %v612
    %1040 = vmatpush.bf16.msra.mxu0 %v608
    %1041 = vmatpush.bf16.msra.mxu0 %v604
    %1042 = vmatpush.bf16.msra.mxu0 %v600
    %1043 = vmatpush.bf16.msra.mxu0 %v596
    %1044 = vmatpush.bf16.msra.mxu0 %v592
    %1045 = vmatmul.bf16.gmra.mxu0 %v1036
    %v1046 = vpop.f32.mrf.mxu0
    %v1047 = vadd.f32 0.0, %v1046
    %v1048 = vpop.f32.mrf.mxu0
    %1049 = vdwg.mxu0
    %1050 = vmatpush.bf16.msra.mxu0 %v621
    %1051 = vmatpush.bf16.msra.mxu0 %v617
    %1052 = vmatpush.bf16.msra.mxu0 %v613
    %1053 = vmatpush.bf16.msra.mxu0 %v609
    %1054 = vmatpush.bf16.msra.mxu0 %v605
    %1055 = vmatpush.bf16.msra.mxu0 %v601
    %1056 = vmatpush.bf16.msra.mxu0 %v597
    %1057 = vmatpush.bf16.msra.mxu0 %v593
    %1058 = vmatmul.bf16.gmra.mxu0 %v1036
    %v1059 = vpop.f32.mrf.mxu0
    %v1060 = vadd.f32 0.0, %v1059
    %v1061 = vpop.f32.mrf.mxu0
    %1062 = vdwg.mxu0
    %1063 = vmatpush.bf16.msra.mxu0 %v622
    %1064 = vmatpush.bf16.msra.mxu0 %v618
    %1065 = vmatpush.bf16.msra.mxu0 %v614
    %1066 = vmatpush.bf16.msra.mxu0 %v610
    %1067 = vmatpush.bf16.msra.mxu0 %v606
    %1068 = vmatpush.bf16.msra.mxu0 %v602
    %1069 = vmatpush.bf16.msra.mxu0 %v598
    %1070 = vmatpush.bf16.msra.mxu0 %v594
    %1071 = vmatmul.bf16.gmra.mxu0 %v1036
    %v1072 = vpop.f32.mrf.mxu0
    %v1073 = vadd.f32 0.0, %v1072
    %v1074 = vpop.f32.mrf.mxu0
    %1075 = vdwg.mxu0
    %1076 = vmatpush.bf16.msra.mxu0 %v623
    %1077 = vmatpush.bf16.msra.mxu0 %v619
    %1078 = vmatpush.bf16.msra.mxu0 %v615
    %1079 = vmatpush.bf16.msra.mxu0 %v611
    %1080 = vmatpush.bf16.msra.mxu0 %v607
    %1081 = vmatpush.bf16.msra.mxu0 %v603
    %1082 = vmatpush.bf16.msra.mxu0 %v599
    %1083 = vmatpush.bf16.msra.mxu0 %v595
    %1084 = vmatmul.bf16.gmra.mxu0 %v1036
    %v1085 = vpop.f32.mrf.mxu0
    %v1086 = vadd.f32 0.0, %v1085
    %v1087 = vpop.f32.mrf.mxu0
    %1088 = vdwg.mxu0
    %v1089 = vadd.f32 %v1032, %v1047
    %v1090 = vadd.f32 %v1033, %v1060
    %v1091 = vadd.f32 %v1034, %v1073
    %v1092 = vadd.f32 %v1035, %v1086
    %v1093 = vxor.u32 %v1089, 2147483648
    %v1094 = vxor.u32 %v1090, 2147483648
    %v1095 = vxor.u32 %v1091, 2147483648
    %v1096 = vmul.f32 %v1093, 1.442695
    %v1097 = vpow.pop %v1096
    %v1098 = vmul.f32 %v1094, 1.442695
    %v1099 = vpow.pop %v1098
    %v1100 = vmul.f32 %v1095, 1.442695
    %v1101 = vpow.pop %v1100
    %v1102 = vadd.f32 %v1097, 1.0
    %v1103 = vadd.f32 %v1099, 1.0
    %v1104 = vadd.f32 %v1101, 1.0
    %v1105 = vrcp.pop %v1102
    %v1106 = vmul.f32 %v1102, %v1105
    %v1107 = vsub.f32 1.0, %v1106
    %v1108 = vmul.f32 %v1105, %v1107
    %v1109 = vadd.f32 %v1105, %v1108
    %vm1110 = vweird.f32 %v1102
    %vm1111 = vweird.f32 %v1105
    %vm1112 = vmor %vm1110, %vm1111
    %v1113 = vsel %vm1112, %v1105, %v1109
    %v1114 = vand.u32 2147483647, %v1102
    %vm1115 = vcmp.eq.f32.partialorder %v1114, 8.507059e+37
    %v1116 = vand.u32 %v1102, 2147483648
    %v1117 = vor.u32 1.1754944e-38, %v1116
    %v1118 = vsel %vm1115, %v1117, %v1113
    %v1119 = vmul.f32 1.0, %v1118
    %v1120 = vrcp.pop %v1103
    %v1121 = vmul.f32 %v1103, %v1120
    %v1122 = vsub.f32 1.0, %v1121
    %v1123 = vmul.f32 %v1120, %v1122
    %v1124 = vadd.f32 %v1120, %v1123
    %vm1125 = vweird.f32 %v1103
    %vm1126 = vweird.f32 %v1120
    %vm1127 = vmor %vm1125, %vm1126
    %v1128 = vsel %vm1127, %v1120, %v1124
    %v1129 = vand.u32 2147483647, %v1103
    %vm1130 = vcmp.eq.f32.partialorder %v1129, 8.507059e+37
    %v1131 = vand.u32 %v1103, 2147483648
    %v1132 = vor.u32 1.1754944e-38, %v1131
    %v1133 = vsel %vm1130, %v1132, %v1128
    %v1134 = vmul.f32 1.0, %v1133
    %v1135 = vrcp.pop %v1104
    %v1136 = vmul.f32 %v1104, %v1135
    %v1137 = vsub.f32 1.0, %v1136
    %v1138 = vmul.f32 %v1135, %v1137
    %v1139 = vadd.f32 %v1135, %v1138
    %vm1140 = vweird.f32 %v1104
    %vm1141 = vweird.f32 %v1135
    %vm1142 = vmor %vm1140, %vm1141
    %v1143 = vsel %vm1142, %v1135, %v1139
    %v1144 = vand.u32 2147483647, %v1104
    %vm1145 = vcmp.eq.f32.partialorder %v1144, 8.507059e+37
    %v1146 = vand.u32 %v1104, 2147483648
    %v1147 = vor.u32 1.1754944e-38, %v1146
    %v1148 = vsel %vm1145, %v1147, %v1143
    %v1149 = vmul.f32 1.0, %v1148
    %v1150 = vtanh.pop %v1092
    %v1151 = vmul.f32 %v1134, %v1026
    %v1152 = vmul.f32 %v1119, %v1150
    %v1153 = vadd.f32 %v1151, %v1152
    %v1154 = vtanh.pop %v1153
    %v1155 = vmul.f32 %v1149, %v1154
    %s1156 = smul.u32 4, 4
    %s1157 = smul.addr %s1156, 8
    %s1158 = scalar_lea.vmem [#allocation4], %s1157
    %v1159 = vld [vmem:[%s1158] sm:$0xff]
    %v1160 = vld [vmem:[%s1158 + $0x8] sm:$0xff]
    %v1161 = vld [vmem:[%s1158 + $0x10] sm:$0xff]
    %v1162 = vld [vmem:[%s1158 + $0x18] sm:$0xff]
    %v1163 = vpack.c.bf16 %v1155, %v1155
    %1164 = vmatpush.bf16.msra.mxu0 %v620
    %1165 = vmatpush.bf16.msra.mxu0 %v616
    %1166 = vmatpush.bf16.msra.mxu0 %v612
    %1167 = vmatpush.bf16.msra.mxu0 %v608
    %1168 = vmatpush.bf16.msra.mxu0 %v604
    %1169 = vmatpush.bf16.msra.mxu0 %v600
    %1170 = vmatpush.bf16.msra.mxu0 %v596
    %1171 = vmatpush.bf16.msra.mxu0 %v592
    %1172 = vmatmul.bf16.gmra.mxu0 %v1163
    %v1173 = vpop.f32.mrf.mxu0
    %v1174 = vadd.f32 0.0, %v1173
    %v1175 = vpop.f32.mrf.mxu0
    %1176 = vdwg.mxu0
    %1177 = vmatpush.bf16.msra.mxu0 %v621
    %1178 = vmatpush.bf16.msra.mxu0 %v617
    %1179 = vmatpush.bf16.msra.mxu0 %v613
    %1180 = vmatpush.bf16.msra.mxu0 %v609
    %1181 = vmatpush.bf16.msra.mxu0 %v605
    %1182 = vmatpush.bf16.msra.mxu0 %v601
    %1183 = vmatpush.bf16.msra.mxu0 %v597
    %1184 = vmatpush.bf16.msra.mxu0 %v593
    %1185 = vmatmul.bf16.gmra.mxu0 %v1163
    %v1186 = vpop.f32.mrf.mxu0
    %v1187 = vadd.f32 0.0, %v1186
    %v1188 = vpop.f32.mrf.mxu0
    %1189 = vdwg.mxu0
    %1190 = vmatpush.bf16.msra.mxu0 %v622
    %1191 = vmatpush.bf16.msra.mxu0 %v618
    %1192 = vmatpush.bf16.msra.mxu0 %v614
    %1193 = vmatpush.bf16.msra.mxu0 %v610
    %1194 = vmatpush.bf16.msra.mxu0 %v606
    %1195 = vmatpush.bf16.msra.mxu0 %v602
    %1196 = vmatpush.bf16.msra.mxu0 %v598
    %1197 = vmatpush.bf16.msra.mxu0 %v594
    %1198 = vmatmul.bf16.gmra.mxu0 %v1163
    %v1199 = vpop.f32.mrf.mxu0
    %v1200 = vadd.f32 0.0, %v1199
    %v1201 = vpop.f32.mrf.mxu0
    %1202 = vdwg.mxu0
    %1203 = vmatpush.bf16.msra.mxu0 %v623
    %1204 = vmatpush.bf16.msra.mxu0 %v619
    %1205 = vmatpush.bf16.msra.mxu0 %v615
    %1206 = vmatpush.bf16.msra.mxu0 %v611
    %1207 = vmatpush.bf16.msra.mxu0 %v607
    %1208 = vmatpush.bf16.msra.mxu0 %v603
    %1209 = vmatpush.bf16.msra.mxu0 %v599
    %1210 = vmatpush.bf16.msra.mxu0 %v595
    %1211 = vmatmul.bf16.gmra.mxu0 %v1163
    %v1212 = vpop.f32.mrf.mxu0
    %v1213 = vadd.f32 0.0, %v1212
    %v1214 = vpop.f32.mrf.mxu0
    %1215 = vdwg.mxu0
    %v1216 = vadd.f32 %v1159, %v1174
    %v1217 = vadd.f32 %v1160, %v1187
    %v1218 = vadd.f32 %v1161, %v1200
    %v1219 = vadd.f32 %v1162, %v1213
    %v1220 = vxor.u32 %v1216, 2147483648
    %v1221 = vxor.u32 %v1217, 2147483648
    %v1222 = vxor.u32 %v1218, 2147483648
    %v1223 = vmul.f32 %v1220, 1.442695
    %v1224 = vpow.pop %v1223
    %v1225 = vmul.f32 %v1221, 1.442695
    %v1226 = vpow.pop %v1225
    %v1227 = vmul.f32 %v1222, 1.442695
    %v1228 = vpow.pop %v1227
    %v1229 = vadd.f32 %v1224, 1.0
    %v1230 = vadd.f32 %v1226, 1.0
    %v1231 = vadd.f32 %v1228, 1.0
    %v1232 = vrcp.pop %v1229
    %v1233 = vmul.f32 %v1229, %v1232
    %v1234 = vsub.f32 1.0, %v1233
    %v1235 = vmul.f32 %v1232, %v1234
    %v1236 = vadd.f32 %v1232, %v1235
    %vm1237 = vweird.f32 %v1229
    %vm1238 = vweird.f32 %v1232
    %vm1239 = vmor %vm1237, %vm1238
    %v1240 = vsel %vm1239, %v1232, %v1236
    %v1241 = vand.u32 2147483647, %v1229
    %vm1242 = vcmp.eq.f32.partialorder %v1241, 8.507059e+37
    %v1243 = vand.u32 %v1229, 2147483648
    %v1244 = vor.u32 1.1754944e-38, %v1243
    %v1245 = vsel %vm1242, %v1244, %v1240
    %v1246 = vmul.f32 1.0, %v1245
    %v1247 = vrcp.pop %v1230
    %v1248 = vmul.f32 %v1230, %v1247
    %v1249 = vsub.f32 1.0, %v1248
    %v1250 = vmul.f32 %v1247, %v1249
    %v1251 = vadd.f32 %v1247, %v1250
    %vm1252 = vweird.f32 %v1230
    %vm1253 = vweird.f32 %v1247
    %vm1254 = vmor %vm1252, %vm1253
    %v1255 = vsel %vm1254, %v1247, %v1251
    %v1256 = vand.u32 2147483647, %v1230
    %vm1257 = vcmp.eq.f32.partialorder %v1256, 8.507059e+37
    %v1258 = vand.u32 %v1230, 2147483648
    %v1259 = vor.u32 1.1754944e-38, %v1258
    %v1260 = vsel %vm1257, %v1259, %v1255
    %v1261 = vmul.f32 1.0, %v1260
    %v1262 = vrcp.pop %v1231
    %v1263 = vmul.f32 %v1231, %v1262
    %v1264 = vsub.f32 1.0, %v1263
    %v1265 = vmul.f32 %v1262, %v1264
    %v1266 = vadd.f32 %v1262, %v1265
    %vm1267 = vweird.f32 %v1231
    %vm1268 = vweird.f32 %v1262
    %vm1269 = vmor %vm1267, %vm1268
    %v1270 = vsel %vm1269, %v1262, %v1266
    %v1271 = vand.u32 2147483647, %v1231
    %vm1272 = vcmp.eq.f32.partialorder %v1271, 8.507059e+37
    %v1273 = vand.u32 %v1231, 2147483648
    %v1274 = vor.u32 1.1754944e-38, %v1273
    %v1275 = vsel %vm1272, %v1274, %v1270
    %v1276 = vmul.f32 1.0, %v1275
    %v1277 = vtanh.pop %v1219
    %v1278 = vmul.f32 %v1261, %v1153
    %v1279 = vmul.f32 %v1246, %v1277
    %v1280 = vadd.f32 %v1278, %v1279
    %v1281 = vtanh.pop %v1280
    %v1282 = vmul.f32 %v1276, %v1281
    %s1283 = smul.u32 5, 4
    %s1284 = smul.addr %s1283, 8
    %s1285 = scalar_lea.vmem [#allocation4], %s1284
    %v1286 = vld [vmem:[%s1285] sm:$0xff]
    %v1287 = vld [vmem:[%s1285 + $0x8] sm:$0xff]
    %v1288 = vld [vmem:[%s1285 + $0x10] sm:$0xff]
    %v1289 = vld [vmem:[%s1285 + $0x18] sm:$0xff]
    %v1290 = vpack.c.bf16 %v1282, %v1282
    %1291 = vmatpush.bf16.msra.mxu0 %v620
    %1292 = vmatpush.bf16.msra.mxu0 %v616
    %1293 = vmatpush.bf16.msra.mxu0 %v612
    %1294 = vmatpush.bf16.msra.mxu0 %v608
    %1295 = vmatpush.bf16.msra.mxu0 %v604
    %1296 = vmatpush.bf16.msra.mxu0 %v600
    %1297 = vmatpush.bf16.msra.mxu0 %v596
    %1298 = vmatpush.bf16.msra.mxu0 %v592
    %1299 = vmatmul.bf16.gmra.mxu0 %v1290
    %v1300 = vpop.f32.mrf.mxu0
    %v1301 = vadd.f32 0.0, %v1300
    %v1302 = vpop.f32.mrf.mxu0
    %1303 = vdwg.mxu0
    %1304 = vmatpush.bf16.msra.mxu0 %v621
    %1305 = vmatpush.bf16.msra.mxu0 %v617
    %1306 = vmatpush.bf16.msra.mxu0 %v613
    %1307 = vmatpush.bf16.msra.mxu0 %v609
    %1308 = vmatpush.bf16.msra.mxu0 %v605
    %1309 = vmatpush.bf16.msra.mxu0 %v601
    %1310 = vmatpush.bf16.msra.mxu0 %v597
    %1311 = vmatpush.bf16.msra.mxu0 %v593
    %1312 = vmatmul.bf16.gmra.mxu0 %v1290
    %v1313 = vpop.f32.mrf.mxu0
    %v1314 = vadd.f32 0.0, %v1313
    %v1315 = vpop.f32.mrf.mxu0
    %1316 = vdwg.mxu0
    %1317 = vmatpush.bf16.msra.mxu0 %v622
    %1318 = vmatpush.bf16.msra.mxu0 %v618
    %1319 = vmatpush.bf16.msra.mxu0 %v614
    %1320 = vmatpush.bf16.msra.mxu0 %v610
    %1321 = vmatpush.bf16.msra.mxu0 %v606
    %1322 = vmatpush.bf16.msra.mxu0 %v602
    %1323 = vmatpush.bf16.msra.mxu0 %v598
    %1324 = vmatpush.bf16.msra.mxu0 %v594
    %1325 = vmatmul.bf16.gmra.mxu0 %v1290
    %v1326 = vpop.f32.mrf.mxu0
    %v1327 = vadd.f32 0.0, %v1326
    %v1328 = vpop.f32.mrf.mxu0
    %1329 = vdwg.mxu0
    %1330 = vmatpush.bf16.msra.mxu0 %v623
    %1331 = vmatpush.bf16.msra.mxu0 %v619
    %1332 = vmatpush.bf16.msra.mxu0 %v615
    %1333 = vmatpush.bf16.msra.mxu0 %v611
    %1334 = vmatpush.bf16.msra.mxu0 %v607
    %1335 = vmatpush.bf16.msra.mxu0 %v603
    %1336 = vmatpush.bf16.msra.mxu0 %v599
    %1337 = vmatpush.bf16.msra.mxu0 %v595
    %1338 = vmatmul.bf16.gmra.mxu0 %v1290
    %v1339 = vpop.f32.mrf.mxu0
    %v1340 = vadd.f32 0.0, %v1339
    %v1341 = vpop.f32.mrf.mxu0
    %1342 = vdwg.mxu0
    %v1343 = vadd.f32 %v1286, %v1301
    %v1344 = vadd.f32 %v1287, %v1314
    %v1345 = vadd.f32 %v1288, %v1327
    %v1346 = vadd.f32 %v1289, %v1340
    %v1347 = vxor.u32 %v1343, 2147483648
    %v1348 = vxor.u32 %v1344, 2147483648
    %v1349 = vxor.u32 %v1345, 2147483648
    %v1350 = vmul.f32 %v1347, 1.442695
    %v1351 = vpow.pop %v1350
    %v1352 = vmul.f32 %v1348, 1.442695
    %v1353 = vpow.pop %v1352
    %v1354 = vmul.f32 %v1349, 1.442695
    %v1355 = vpow.pop %v1354
    %v1356 = vadd.f32 %v1351, 1.0
    %v1357 = vadd.f32 %v1353, 1.0
    %v1358 = vadd.f32 %v1355, 1.0
    %v1359 = vrcp.pop %v1356
    %v1360 = vmul.f32 %v1356, %v1359
    %v1361 = vsub.f32 1.0, %v1360
    %v1362 = vmul.f32 %v1359, %v1361
    %v1363 = vadd.f32 %v1359, %v1362
    %vm1364 = vweird.f32 %v1356
    %vm1365 = vweird.f32 %v1359
    %vm1366 = vmor %vm1364, %vm1365
    %v1367 = vsel %vm1366, %v1359, %v1363
    %v1368 = vand.u32 2147483647, %v1356
    %vm1369 = vcmp.eq.f32.partialorder %v1368, 8.507059e+37
    %v1370 = vand.u32 %v1356, 2147483648
    %v1371 = vor.u32 1.1754944e-38, %v1370
    %v1372 = vsel %vm1369, %v1371, %v1367
    %v1373 = vmul.f32 1.0, %v1372
    %v1374 = vrcp.pop %v1357
    %v1375 = vmul.f32 %v1357, %v1374
    %v1376 = vsub.f32 1.0, %v1375
    %v1377 = vmul.f32 %v1374, %v1376
    %v1378 = vadd.f32 %v1374, %v1377
    %vm1379 = vweird.f32 %v1357
    %vm1380 = vweird.f32 %v1374
    %vm1381 = vmor %vm1379, %vm1380
    %v1382 = vsel %vm1381, %v1374, %v1378
    %v1383 = vand.u32 2147483647, %v1357
    %vm1384 = vcmp.eq.f32.partialorder %v1383, 8.507059e+37
    %v1385 = vand.u32 %v1357, 2147483648
    %v1386 = vor.u32 1.1754944e-38, %v1385
    %v1387 = vsel %vm1384, %v1386, %v1382
    %v1388 = vmul.f32 1.0, %v1387
    %v1389 = vrcp.pop %v1358
    %v1390 = vmul.f32 %v1358, %v1389
    %v1391 = vsub.f32 1.0, %v1390
    %v1392 = vmul.f32 %v1389, %v1391
    %v1393 = vadd.f32 %v1389, %v1392
    %vm1394 = vweird.f32 %v1358
    %vm1395 = vweird.f32 %v1389
    %vm1396 = vmor %vm1394, %vm1395
    %v1397 = vsel %vm1396, %v1389, %v1393
    %v1398 = vand.u32 2147483647, %v1358
    %vm1399 = vcmp.eq.f32.partialorder %v1398, 8.507059e+37
    %v1400 = vand.u32 %v1358, 2147483648
    %v1401 = vor.u32 1.1754944e-38, %v1400
    %v1402 = vsel %vm1399, %v1401, %v1397
    %v1403 = vmul.f32 1.0, %v1402
    %v1404 = vtanh.pop %v1346
    %v1405 = vmul.f32 %v1388, %v1280
    %v1406 = vmul.f32 %v1373, %v1404
    %v1407 = vadd.f32 %v1405, %v1406
    %v1408 = vtanh.pop %v1407
    %v1409 = vmul.f32 %v1403, %v1408
    %s1410 = smul.u32 6, 4
    %s1411 = smul.addr %s1410, 8
    %s1412 = scalar_lea.vmem [#allocation4], %s1411
    %v1413 = vld [vmem:[%s1412] sm:$0xff]
    %v1414 = vld [vmem:[%s1412 + $0x8] sm:$0xff]
    %v1415 = vld [vmem:[%s1412 + $0x10] sm:$0xff]
    %v1416 = vld [vmem:[%s1412 + $0x18] sm:$0xff]
    %v1417 = vpack.c.bf16 %v1409, %v1409
    %1418 = vmatpush.bf16.msra.mxu0 %v620
    %1419 = vmatpush.bf16.msra.mxu0 %v616
    %1420 = vmatpush.bf16.msra.mxu0 %v612
    %1421 = vmatpush.bf16.msra.mxu0 %v608
    %1422 = vmatpush.bf16.msra.mxu0 %v604
    %1423 = vmatpush.bf16.msra.mxu0 %v600
    %1424 = vmatpush.bf16.msra.mxu0 %v596
    %1425 = vmatpush.bf16.msra.mxu0 %v592
    %1426 = vmatmul.bf16.gmra.mxu0 %v1417
    %v1427 = vpop.f32.mrf.mxu0
    %v1428 = vadd.f32 0.0, %v1427
    %v1429 = vpop.f32.mrf.mxu0
    %1430 = vdwg.mxu0
    %1431 = vmatpush.bf16.msra.mxu0 %v621
    %1432 = vmatpush.bf16.msra.mxu0 %v617
    %1433 = vmatpush.bf16.msra.mxu0 %v613
    %1434 = vmatpush.bf16.msra.mxu0 %v609
    %1435 = vmatpush.bf16.msra.mxu0 %v605
    %1436 = vmatpush.bf16.msra.mxu0 %v601
    %1437 = vmatpush.bf16.msra.mxu0 %v597
    %1438 = vmatpush.bf16.msra.mxu0 %v593
    %1439 = vmatmul.bf16.gmra.mxu0 %v1417
    %v1440 = vpop.f32.mrf.mxu0
    %v1441 = vadd.f32 0.0, %v1440
    %v1442 = vpop.f32.mrf.mxu0
    %1443 = vdwg.mxu0
    %1444 = vmatpush.bf16.msra.mxu0 %v622
    %1445 = vmatpush.bf16.msra.mxu0 %v618
    %1446 = vmatpush.bf16.msra.mxu0 %v614
    %1447 = vmatpush.bf16.msra.mxu0 %v610
    %1448 = vmatpush.bf16.msra.mxu0 %v606
    %1449 = vmatpush.bf16.msra.mxu0 %v602
    %1450 = vmatpush.bf16.msra.mxu0 %v598
    %1451 = vmatpush.bf16.msra.mxu0 %v594
    %1452 = vmatmul.bf16.gmra.mxu0 %v1417
    %v1453 = vpop.f32.mrf.mxu0
    %v1454 = vadd.f32 0.0, %v1453
    %v1455 = vpop.f32.mrf.mxu0
    %1456 = vdwg.mxu0
    %1457 = vmatpush.bf16.msra.mxu0 %v623
    %1458 = vmatpush.bf16.msra.mxu0 %v619
    %1459 = vmatpush.bf16.msra.mxu0 %v615
    %1460 = vmatpush.bf16.msra.mxu0 %v611
    %1461 = vmatpush.bf16.msra.mxu0 %v607
    %1462 = vmatpush.bf16.msra.mxu0 %v603
    %1463 = vmatpush.bf16.msra.mxu0 %v599
    %1464 = vmatpush.bf16.msra.mxu0 %v595
    %1465 = vmatmul.bf16.gmra.mxu0 %v1417
    %v1466 = vpop.f32.mrf.mxu0
    %v1467 = vadd.f32 0.0, %v1466
    %v1468 = vpop.f32.mrf.mxu0
    %1469 = vdwg.mxu0
    %v1470 = vadd.f32 %v1413, %v1428
    %v1471 = vadd.f32 %v1414, %v1441
    %v1472 = vadd.f32 %v1415, %v1454
    %v1473 = vadd.f32 %v1416, %v1467
    %v1474 = vxor.u32 %v1470, 2147483648
    %v1475 = vxor.u32 %v1471, 2147483648
    %v1476 = vxor.u32 %v1472, 2147483648
    %v1477 = vmul.f32 %v1474, 1.442695
    %v1478 = vpow.pop %v1477
    %v1479 = vmul.f32 %v1475, 1.442695
    %v1480 = vpow.pop %v1479
    %v1481 = vmul.f32 %v1476, 1.442695
    %v1482 = vpow.pop %v1481
    %v1483 = vadd.f32 %v1478, 1.0
    %v1484 = vadd.f32 %v1480, 1.0
    %v1485 = vadd.f32 %v1482, 1.0
    %v1486 = vrcp.pop %v1483
    %v1487 = vmul.f32 %v1483, %v1486
    %v1488 = vsub.f32 1.0, %v1487
    %v1489 = vmul.f32 %v1486, %v1488
    %v1490 = vadd.f32 %v1486, %v1489
    %vm1491 = vweird.f32 %v1483
    %vm1492 = vweird.f32 %v1486
    %vm1493 = vmor %vm1491, %vm1492
    %v1494 = vsel %vm1493, %v1486, %v1490
    %v1495 = vand.u32 2147483647, %v1483
    %vm1496 = vcmp.eq.f32.partialorder %v1495, 8.507059e+37
    %v1497 = vand.u32 %v1483, 2147483648
    %v1498 = vor.u32 1.1754944e-38, %v1497
    %v1499 = vsel %vm1496, %v1498, %v1494
    %v1500 = vmul.f32 1.0, %v1499
    %v1501 = vrcp.pop %v1484
    %v1502 = vmul.f32 %v1484, %v1501
    %v1503 = vsub.f32 1.0, %v1502
    %v1504 = vmul.f32 %v1501, %v1503
    %v1505 = vadd.f32 %v1501, %v1504
    %vm1506 = vweird.f32 %v1484
    %vm1507 = vweird.f32 %v1501
    %vm1508 = vmor %vm1506, %vm1507
    %v1509 = vsel %vm1508, %v1501, %v1505
    %v1510 = vand.u32 2147483647, %v1484
    %vm1511 = vcmp.eq.f32.partialorder %v1510, 8.507059e+37
    %v1512 = vand.u32 %v1484, 2147483648
    %v1513 = vor.u32 1.1754944e-38, %v1512
    %v1514 = vsel %vm1511, %v1513, %v1509
    %v1515 = vmul.f32 1.0, %v1514
    %v1516 = vrcp.pop %v1485
    %v1517 = vmul.f32 %v1485, %v1516
    %v1518 = vsub.f32 1.0, %v1517
    %v1519 = vmul.f32 %v1516, %v1518
    %v1520 = vadd.f32 %v1516, %v1519
    %vm1521 = vweird.f32 %v1485
    %vm1522 = vweird.f32 %v1516
    %vm1523 = vmor %vm1521, %vm1522
    %v1524 = vsel %vm1523, %v1516, %v1520
    %v1525 = vand.u32 2147483647, %v1485
    %vm1526 = vcmp.eq.f32.partialorder %v1525, 8.507059e+37
    %v1527 = vand.u32 %v1485, 2147483648
    %v1528 = vor.u32 1.1754944e-38, %v1527
    %v1529 = vsel %vm1526, %v1528, %v1524
    %v1530 = vmul.f32 1.0, %v1529
    %v1531 = vtanh.pop %v1473
    %v1532 = vmul.f32 %v1515, %v1407
    %v1533 = vmul.f32 %v1500, %v1531
    %v1534 = vadd.f32 %v1532, %v1533
    %v1535 = vtanh.pop %v1534
    %v1536 = vmul.f32 %v1530, %v1535
    %s1537 = smul.u32 7, 4
    %s1538 = smul.addr %s1537, 8
    %s1539 = scalar_lea.vmem [#allocation4], %s1538
    %v1540 = vld [vmem:[%s1539] sm:$0xff]
    %v1541 = vld [vmem:[%s1539 + $0x8] sm:$0xff]
    %v1542 = vld [vmem:[%s1539 + $0x10] sm:$0xff]
    %v1543 = vld [vmem:[%s1539 + $0x18] sm:$0xff]
    %v1544 = vpack.c.bf16 %v1536, %v1536
    %1545 = vmatpush.bf16.msra.mxu0 %v620
    %1546 = vmatpush.bf16.msra.mxu0 %v616
    %1547 = vmatpush.bf16.msra.mxu0 %v612
    %1548 = vmatpush.bf16.msra.mxu0 %v608
    %1549 = vmatpush.bf16.msra.mxu0 %v604
    %1550 = vmatpush.bf16.msra.mxu0 %v600
    %1551 = vmatpush.bf16.msra.mxu0 %v596
    %1552 = vmatpush.bf16.msra.mxu0 %v592
    %1553 = vmatmul.bf16.gmra.mxu0 %v1544
    %v1554 = vpop.f32.mrf.mxu0
    %v1555 = vadd.f32 0.0, %v1554
    %v1556 = vpop.f32.mrf.mxu0
    %1557 = vdwg.mxu0
    %1558 = vmatpush.bf16.msra.mxu0 %v621
    %1559 = vmatpush.bf16.msra.mxu0 %v617
    %1560 = vmatpush.bf16.msra.mxu0 %v613
    %1561 = vmatpush.bf16.msra.mxu0 %v609
    %1562 = vmatpush.bf16.msra.mxu0 %v605
    %1563 = vmatpush.bf16.msra.mxu0 %v601
    %1564 = vmatpush.bf16.msra.mxu0 %v597
    %1565 = vmatpush.bf16.msra.mxu0 %v593
    %1566 = vmatmul.bf16.gmra.mxu0 %v1544
    %v1567 = vpop.f32.mrf.mxu0
    %v1568 = vadd.f32 0.0, %v1567
    %v1569 = vpop.f32.mrf.mxu0
    %1570 = vdwg.mxu0
    %1571 = vmatpush.bf16.msra.mxu0 %v622
    %1572 = vmatpush.bf16.msra.mxu0 %v618
    %1573 = vmatpush.bf16.msra.mxu0 %v614
    %1574 = vmatpush.bf16.msra.mxu0 %v610
    %1575 = vmatpush.bf16.msra.mxu0 %v606
    %1576 = vmatpush.bf16.msra.mxu0 %v602
    %1577 = vmatpush.bf16.msra.mxu0 %v598
    %1578 = vmatpush.bf16.msra.mxu0 %v594
    %1579 = vmatmul.bf16.gmra.mxu0 %v1544
    %v1580 = vpop.f32.mrf.mxu0
    %v1581 = vadd.f32 0.0, %v1580
    %v1582 = vpop.f32.mrf.mxu0
    %1583 = vdwg.mxu0
    %1584 = vmatpush.bf16.msra.mxu0 %v623
    %1585 = vmatpush.bf16.msra.mxu0 %v619
    %1586 = vmatpush.bf16.msra.mxu0 %v615
    %1587 = vmatpush.bf16.msra.mxu0 %v611
    %1588 = vmatpush.bf16.msra.mxu0 %v607
    %1589 = vmatpush.bf16.msra.mxu0 %v603
    %1590 = vmatpush.bf16.msra.mxu0 %v599
    %1591 = vmatpush.bf16.msra.mxu0 %v595
    %1592 = vmatmul.bf16.gmra.mxu0 %v1544
    %v1593 = vpop.f32.mrf.mxu0
    %v1594 = vadd.f32 0.0, %v1593
    %v1595 = vpop.f32.mrf.mxu0
    %1596 = vdwg.mxu0
    %v1597 = vadd.f32 %v1540, %v1555
    %v1598 = vadd.f32 %v1541, %v1568
    %v1599 = vadd.f32 %v1542, %v1581
    %v1600 = vadd.f32 %v1543, %v1594
    %v1601 = vxor.u32 %v1597, 2147483648
    %v1602 = vxor.u32 %v1598, 2147483648
    %v1603 = vxor.u32 %v1599, 2147483648
    %v1604 = vmul.f32 %v1601, 1.442695
    %v1605 = vpow.pop %v1604
    %v1606 = vmul.f32 %v1602, 1.442695
    %v1607 = vpow.pop %v1606
    %v1608 = vmul.f32 %v1603, 1.442695
    %v1609 = vpow.pop %v1608
    %v1610 = vadd.f32 %v1605, 1.0
    %v1611 = vadd.f32 %v1607, 1.0
    %v1612 = vadd.f32 %v1609, 1.0
    %v1613 = vrcp.pop %v1610
    %v1614 = vmul.f32 %v1610, %v1613
    %v1615 = vsub.f32 1.0, %v1614
    %v1616 = vmul.f32 %v1613, %v1615
    %v1617 = vadd.f32 %v1613, %v1616
    %vm1618 = vweird.f32 %v1610
    %vm1619 = vweird.f32 %v1613
    %vm1620 = vmor %vm1618, %vm1619
    %v1621 = vsel %vm1620, %v1613, %v1617
    %v1622 = vand.u32 2147483647, %v1610
    %vm1623 = vcmp.eq.f32.partialorder %v1622, 8.507059e+37
    %v1624 = vand.u32 %v1610, 2147483648
    %v1625 = vor.u32 1.1754944e-38, %v1624
    %v1626 = vsel %vm1623, %v1625, %v1621
    %v1627 = vmul.f32 1.0, %v1626
    %v1628 = vrcp.pop %v1611
    %v1629 = vmul.f32 %v1611, %v1628
    %v1630 = vsub.f32 1.0, %v1629
    %v1631 = vmul.f32 %v1628, %v1630
    %v1632 = vadd.f32 %v1628, %v1631
    %vm1633 = vweird.f32 %v1611
    %vm1634 = vweird.f32 %v1628
    %vm1635 = vmor %vm1633, %vm1634
    %v1636 = vsel %vm1635, %v1628, %v1632
    %v1637 = vand.u32 2147483647, %v1611
    %vm1638 = vcmp.eq.f32.partialorder %v1637, 8.507059e+37
    %v1639 = vand.u32 %v1611, 2147483648
    %v1640 = vor.u32 1.1754944e-38, %v1639
    %v1641 = vsel %vm1638, %v1640, %v1636
    %v1642 = vmul.f32 1.0, %v1641
    %v1643 = vrcp.pop %v1612
    %v1644 = vmul.f32 %v1612, %v1643
    %v1645 = vsub.f32 1.0, %v1644
    %v1646 = vmul.f32 %v1643, %v1645
    %v1647 = vadd.f32 %v1643, %v1646
    %vm1648 = vweird.f32 %v1612
    %vm1649 = vweird.f32 %v1643
    %vm1650 = vmor %vm1648, %vm1649
    %v1651 = vsel %vm1650, %v1643, %v1647
    %v1652 = vand.u32 2147483647, %v1612
    %vm1653 = vcmp.eq.f32.partialorder %v1652, 8.507059e+37
    %v1654 = vand.u32 %v1612, 2147483648
    %v1655 = vor.u32 1.1754944e-38, %v1654
    %v1656 = vsel %vm1653, %v1655, %v1651
    %v1657 = vmul.f32 1.0, %v1656
    %v1658 = vtanh.pop %v1600
    %v1659 = vmul.f32 %v1642, %v1534
    %v1660 = vmul.f32 %v1627, %v1658
    %v1661 = vadd.f32 %v1659, %v1660
    %v1662 = vtanh.pop %v1661
    %v1663 = vmul.f32 %v1657, %v1662
    %p1664 = scmp.ne.s32.totalorder 0, 0
    // Predicated region
    $region46: #{lstmnet_forward.3} parent=1 // pred_check
      %p1665 = pneg %p1664
    $region47: #{lstmnet_forward.3} parent=1 // pred_check_branch
      %1667 = sbr.rel (%p1665) target = $region49
    $region48: #{lstmnet_forward.3} parent=1 // pred_region
      %1668 = vst [vmem:[#allocation2] sm:$0xff] %v1663
      %1669 = vst [vmem:[#allocation3] sm:$0xff] %v1661
    $region49: #{lstmnet_forward.3} parent=1 // pred_fallthru
      _
    // Predicated region
    $region50: #{lstmnet_forward.3} parent=1 // pred_check
      %p1670 = pneg %p64
    $region51: #{lstmnet_forward.3} parent=1 // pred_check_branch
      %1672 = sbr.rel (%p1670) target = $region53
    $region52: #{lstmnet_forward.3} parent=1 // pred_region
      %1673 = vst [vmem:[%s8] sm:$0xff] %v1663
      %1674 = vst [vmem:[%s9] sm:$0xff] %v1661
      %v1675 = vmax.f32 %v1663, 0.0
      %v1676 = vpack.c.bf16 %v1675, %v1675
      %v1677 = vld [vmem:[%s6] sm:$0xf]
      %v1678 = vld [vmem:[%s6 + $0x4] sm:$0xf]
      %v1679 = vld [vmem:[%s6 + $0x8] sm:$0xf]
      %v1680 = vld [vmem:[%s6 + $0xc] sm:$0xf]
      %v1681 = vld [vmem:[%s6 + $0x10] sm:$0xf]
      %v1682 = vld [vmem:[%s6 + $0x14] sm:$0xf]
      %v1683 = vld [vmem:[%s6 + $0x18] sm:$0xf]
      %v1684 = vld [vmem:[%s6 + $0x1c] sm:$0xf]
      %v1685 = vld [vmem:[%s6 + $0x20] sm:$0xf]
      %v1686 = vld [vmem:[%s6 + $0x24] sm:$0xf]
      %v1687 = vld [vmem:[%s6 + $0x28] sm:$0xf]
      %v1688 = vld [vmem:[%s6 + $0x2c] sm:$0xf]
      %v1689 = vld [vmem:[%s6 + $0x30] sm:$0xf]
      %v1690 = vld [vmem:[%s6 + $0x34] sm:$0xf]
      %v1691 = vld [vmem:[%s6 + $0x38] sm:$0xf]
      %v1692 = vld [vmem:[%s6 + $0x3c] sm:$0xf]
      %v1693 = vld [vmem:[%s7] sm:$0x1]
      %v1695 = vperm.slane %v1693, 0
      %v1713 = vunpack.c.l.b16 %v1677
      %v1714 = vunpack.c.l.b16 %v1678
      %v1715 = vunpack.c.l.b16 %v1679
      %v1716 = vunpack.c.l.b16 %v1680
      %v1717 = vunpack.c.l.b16 %v1681
      %v1718 = vunpack.c.l.b16 %v1682
      %v1719 = vunpack.c.l.b16 %v1683
      %v1720 = vunpack.c.l.b16 %v1684
      %v1721 = vunpack.c.l.b16 %v1685
      %v1722 = vunpack.c.l.b16 %v1686
      %v1723 = vunpack.c.l.b16 %v1687
      %v1724 = vunpack.c.l.b16 %v1688
      %v1725 = vunpack.c.l.b16 %v1689
      %v1726 = vunpack.c.l.b16 %v1690
      %v1727 = vunpack.c.l.b16 %v1691
      %v1728 = vunpack.c.l.b16 %v1692
      %v1729 = vpack.c.b16 %v1714, %v1713
      %v1730 = vpack.c.b16 %v1716, %v1715
      %v1731 = vpack.c.b16 %v1718, %v1717
      %v1732 = vpack.c.b16 %v1720, %v1719
      %v1733 = vpack.c.b16 %v1722, %v1721
      %v1734 = vpack.c.b16 %v1724, %v1723
      %v1735 = vpack.c.b16 %v1726, %v1725
      %v1736 = vpack.c.b16 %v1728, %v1727
      %1745 = vmatpush.bf16.msra.mxu0 %v1736
      %1746 = vmatpush.bf16.msra.mxu0 %v1735
      %1747 = vmatpush.bf16.msra.mxu0 %v1734
      %1748 = vmatpush.bf16.msra.mxu0 %v1733
      %1749 = vmatpush.bf16.msra.mxu0 %v1732
      %1750 = vmatpush.bf16.msra.mxu0 %v1731
      %1751 = vmatpush.bf16.msra.mxu0 %v1730
      %1752 = vmatpush.bf16.msra.mxu0 %v1729
      %1753 = vmatmul.bf16.gmra.mxu0 %v1676
      %v1754 = vpop.f32.mrf.mxu0
      %v1755 = vadd.f32 %v1695, %v1754
      %v1756 = vpop.f32.mrf.mxu0
      %1757 = vdwg.mxu0
      %vm1758 = vcmask 31744
      %1759 = vst.msk [vmem:[%s10] sm:$0xff] %vm1758, %v1755
    $region53: #{lstmnet_forward.3} parent=1 // pred_fallthru
      _
    // Predicated region
    $region54: #{lstmnet_forward.3} parent=1 // pred_check
      _
    $region55: #{lstmnet_forward.3} parent=1 // pred_check_branch
      %1761 = sbr.rel (0) target = $region57
    $region56: #{lstmnet_forward.3} parent=1 // pred_region
      _
    $region57: #{lstmnet_forward.3} parent=1 // pred_fallthru
      _
    // Predicated region
    $region58: #{lstmnet_forward.3} parent=1 // pred_check
      _
    $region59: #{lstmnet_forward.3} parent=1 // pred_check_branch
      %1763 = sbr.rel (0) target = $region61
    $region60: #{lstmnet_forward.3} parent=1 // pred_region
      _
    $region61: #{lstmnet_forward.3} parent=1 // pred_fallthru
      _
    // Predicated region
    $region62: #{lstmnet_forward.3} parent=1 // pred_check
      _
    $region63: #{lstmnet_forward.3} parent=1 // pred_check_branch
      %1765 = sbr.rel (0) target = $region65
    $region64: #{lstmnet_forward.3} parent=1 // pred_region
      _
    $region65: #{lstmnet_forward.3} parent=1 // pred_fallthru
      _
    // Predicated region
    $region66: #{lstmnet_forward.3} parent=1 // pred_check
      _
    $region67: #{lstmnet_forward.3} parent=1 // pred_check_branch
      %1767 = sbr.rel (0) target = $region69
    $region68: #{lstmnet_forward.3} parent=1 // pred_region
      _
    $region69: #{lstmnet_forward.3} parent=1 // pred_fallthru
      _
    // Predicated region
    $region70: #{lstmnet_forward.3} parent=1 // pred_check
      _
    $region71: #{lstmnet_forward.3} parent=1 // pred_check_branch
      %1769 = sbr.rel (0) target = $region73
    $region72: #{lstmnet_forward.3} parent=1 // pred_region
      _
    $region73: #{lstmnet_forward.3} parent=1 // pred_fallthru
      _
    // Predicated region
    $region74: #{lstmnet_forward.3} parent=1 // pred_check
      _
    $region75: #{lstmnet_forward.3} parent=1 // pred_check_branch
      %1771 = sbr.rel (0) target = $region77
    $region76: #{lstmnet_forward.3} parent=1 // pred_region
      _
    $region77: #{lstmnet_forward.3} parent=1 // pred_fallthru
      _
    %1772 = vsyncpa [#allocation6], 1
    %1773 = vsyncpa [#allocation8], 1

// kernel: lstmnet_forward.2
$region0: #{lstmnet_forward.2}
  #allocation0 [shape = 'u32[]', space=smem, size = 0x4, offset = 0x4, fixed_abs, tag = 'smem constant byte address 0x4 - core index']
  #allocation1 [shape = 'u32[72,128]{1,0:T(1,128)}', space=vmem, size = 0x9000, scoped, tag = 'internal scratch']
  #allocation2 [shape = 'f32[8,128]{1,0:T(8,128)}', space=vmem, size = 0x1000, scoped, tag = 'scratch operand']
  #allocation3 [shape = 'f32[8,128]{1,0:T(8,128)}', space=vmem, size = 0x1000, scoped, tag = 'scratch operand']
  #allocation4 [shape = 'f32[64,512]{1,0:T(8,128)}', space=vmem, size = 0x20000, scoped, tag = 'scratch operand']
  %s0 = inlined_call_operand.vmem [shape: f32[8,8,16], index: 0, kind: input, shape index: {}]
  %s1 = inlined_call_operand.vmem [shape: f32[8,128], index: 1, kind: input, shape index: {}]
  %s2 = inlined_call_operand.vmem [shape: f32[8,128], index: 2, kind: input, shape index: {}]
  %s3 = inlined_call_operand.vmem [shape: bf16[16,512], index: 3, kind: input, shape index: {}]
  %s4 = inlined_call_operand.hbm [shape: bf16[128,512], index: 4, kind: input, shape index: {}]
  %s5 = inlined_call_operand.vmem [shape: f32[1,512], index: 5, kind: input, shape index: {}]
  %s6 = inlined_call_operand.vmem [shape: bf16[8,8,128], index: 6, kind: output, shape index: {0}]
  %s7 = inlined_call_operand.vmem [shape: f32[8,128], index: 7, kind: output, shape index: {1}]
  %s8 = inlined_call_operand.vmem [shape: f32[8,128], index: 8, kind: output, shape index: {2}]
  %9 = xla_tuple %s6, %s7, %s8
  %s10 = sld [smem:[#allocation0]]
  $region66: #{lstmnet_forward.2} parent=0
    _
  %s12 = ssub.s32 1, %s10
  %s13 = scalar_select 0, %s12, %s10
  $region1: #{lstmnet_forward.2} parent=0
    #allocation5 [shape = 'u8[131072]{0}', space=vmem, size = 0x20000, scoped, tag = 'input window, operand 4, single buffered']
    #allocation6 [shape = 's32[1]{0}', space=sflag, size = 0x4, scoped, tag = 'scoped memory for lstmnet_forward.2']
    %14 = vsyncpa [#allocation6], 0
    // Predicated region
    $region2: #{lstmnet_forward.2} parent=1 // pred_check
      _
    $region3: #{lstmnet_forward.2} parent=1 // pred_check_branch
      %16 = sbr.rel (0) target = $region5
    $region4: #{lstmnet_forward.2} parent=1 // pred_region
      _
    $region5: #{lstmnet_forward.2} parent=1 // pred_fallthru
      _
    // Predicated region
    $region6: #{lstmnet_forward.2} parent=1 // pred_check
      _
    $region7: #{lstmnet_forward.2} parent=1 // pred_check_branch
      %18 = sbr.rel (0) target = $region9
    $region8: #{lstmnet_forward.2} parent=1 // pred_region
      _
    $region9: #{lstmnet_forward.2} parent=1 // pred_fallthru
      _
    // Predicated region
    $region10: #{lstmnet_forward.2} parent=1 // pred_check
      _
    $region11: #{lstmnet_forward.2} parent=1 // pred_check_branch
      %20 = sbr.rel (0) target = $region13
    $region12: #{lstmnet_forward.2} parent=1 // pred_region
      _
    $region13: #{lstmnet_forward.2} parent=1 // pred_fallthru
      _
    // Predicated region
    $region14: #{lstmnet_forward.2} parent=1 // pred_check
      _
    $region15: #{lstmnet_forward.2} parent=1 // pred_check_branch
      %22 = sbr.rel (0) target = $region17
    $region16: #{lstmnet_forward.2} parent=1 // pred_region
      _
    $region17: #{lstmnet_forward.2} parent=1 // pred_fallthru
      _
    // Predicated region
    $region18: #{lstmnet_forward.2} parent=1 // pred_check
      _
    $region19: #{lstmnet_forward.2} parent=1 // pred_check_branch
      %24 = sbr.rel (0) target = $region21
    $region20: #{lstmnet_forward.2} parent=1 // pred_region
      %26 = vsyncadd [#allocation6], 0
      %s27 = sshll.u32 %s4, 4
      %s28 = int_to_ptr.hbm [resolvable:$true] %s27
      %s29 = sshll.u32 [#allocation5], 4
      %s30 = int_to_ptr.vmem [resolvable:$true] %s29
      %35 = dma.hbm_to_vmem [thread:$0]  %s28, 4096, %s30, [#allocation6], 256, 256, 16
    $region21: #{lstmnet_forward.2} parent=1 // pred_fallthru
      _
    // Predicated region
    $region22: #{lstmnet_forward.2} parent=1 // pred_check
      _
    $region23: #{lstmnet_forward.2} parent=1 // pred_check_branch
      %37 = sbr.rel (0) target = $region25
    $region24: #{lstmnet_forward.2} parent=1 // pred_region
      _
    $region25: #{lstmnet_forward.2} parent=1 // pred_fallthru
      _
    // Predicated region
    $region26: #{lstmnet_forward.2} parent=1 // pred_check
      _
    $region27: #{lstmnet_forward.2} parent=1 // pred_check_branch
      %39 = sbr.rel (0) target = $region29
    $region28: #{lstmnet_forward.2} parent=1 // pred_region
      %41 = dma.done [#allocation6], 4096
    $region29: #{lstmnet_forward.2} parent=1 // pred_fallthru
      _
    %p43 = scmp.eq.s32.totalorder 0, 0
    // Predicated region
    $region30: #{lstmnet_forward.2} parent=1 // pred_check
      %p44 = pneg %p43
    $region31: #{lstmnet_forward.2} parent=1 // pred_check_branch
      %46 = sbr.rel (%p44) target = $region33
    $region32: #{lstmnet_forward.2} parent=1 // pred_region
      %v47 = vld [vmem:[%s1] sm:$0xff]
      %48 = vst [vmem:[#allocation2] sm:$0xff] %v47
      %v49 = vld [vmem:[%s2] sm:$0xff]
      %50 = vst [vmem:[#allocation3] sm:$0xff] %v49
    $region33: #{lstmnet_forward.2} parent=1 // pred_fallthru
      _
    %v51 = vld [vmem:[#allocation2] sm:$0xff]
    %v52 = vld [vmem:[#allocation3] sm:$0xff]
    %v53 = vld [vmem:[%s0] sm:$0xff]
    %v54 = vld [vmem:[%s0 + $0x8] sm:$0xff]
    %v55 = vld [vmem:[%s0 + $0x10] sm:$0xff]
    %v56 = vld [vmem:[%s0 + $0x18] sm:$0xff]
    %v57 = vld [vmem:[%s0 + $0x20] sm:$0xff]
    %v58 = vld [vmem:[%s0 + $0x28] sm:$0xff]
    %v59 = vld [vmem:[%s0 + $0x30] sm:$0xff]
    %v60 = vld [vmem:[%s0 + $0x38] sm:$0xff]
    %v61 = vpack.c.bf16 %v54, %v53
    %v62 = vpack.c.bf16 %v56, %v55
    %v63 = vpack.c.bf16 %v58, %v57
    %v64 = vpack.c.bf16 %v60, %v59
    %v65 = vld [vmem:[%s3] sm:$0xff]
    %v66 = vld [vmem:[%s3 + $0x8] sm:$0xff]
    %v67 = vld [vmem:[%s3 + $0x10] sm:$0xff]
    %v68 = vld [vmem:[%s3 + $0x18] sm:$0xff]
    %v69 = vld [vmem:[%s5] sm:$0xf]
    %v71 = vperm.slane %v69, 0
    %v72 = vperm.slane %v69, 1
    %v73 = vperm.slane %v69, 2
    %v74 = vperm.slane %v69, 3
    %v83 = vunpack.c.l.b16 %v65
    %v84 = vunpack.c.h.b16 %v65
    %v85 = vunpack.c.l.b16 %v66
    %v86 = vunpack.c.h.b16 %v66
    %v87 = vunpack.c.l.b16 %v67
    %v88 = vunpack.c.h.b16 %v67
    %v89 = vunpack.c.l.b16 %v68
    %v90 = vunpack.c.h.b16 %v68
    %v91 = vpack.c.b16 %v87, %v83
    %v92 = vpack.c.b16 %v88, %v84
    %v93 = vpack.c.b16 %v89, %v85
    %v94 = vpack.c.b16 %v90, %v86
    %vm99 = vcmask 130048
    %v101 = vsel %vm99, %v61, 0
    %v104 = vsel %vm99, %v62, 0
    %v107 = vsel %vm99, %v63, 0
    %v110 = vsel %vm99, %v64, 0
    %112 = vmatpush.bf16.msra.mxu0 0
    %113 = vmatpush.bf16.msra.mxu0 0
    %114 = vmatpush.bf16.msra.mxu0 0
    %115 = vmatpush.bf16.msra.mxu0 0
    %116 = vmatpush.bf16.msra.mxu0 0
    %117 = vmatpush.bf16.msra.mxu0 0
    %118 = vmatpush.bf16.msra.mxu0 0
    %119 = vmatpush.bf16.msra.mxu0 %v91
    %120 = vmatmul.bf16.gmra.mxu0 %v101
    %v121 = vpop.f32.mrf.mxu0
    %v122 = vadd.f32 %v71, %v121
    %v123 = vpop.f32.mrf.mxu0
    %v124 = vadd.f32 %v71, %v123
    %125 = vmatmul.bf16.gmra.mxu0 %v104
    %v126 = vpop.f32.mrf.mxu0
    %v127 = vadd.f32 %v71, %v126
    %v128 = vpop.f32.mrf.mxu0
    %v129 = vadd.f32 %v71, %v128
    %130 = vmatmul.bf16.gmra.mxu0 %v107
    %v131 = vpop.f32.mrf.mxu0
    %v132 = vadd.f32 %v71, %v131
    %v133 = vpop.f32.mrf.mxu0
    %v134 = vadd.f32 %v71, %v133
    %135 = vmatmul.bf16.gmra.mxu0 %v110
    %v136 = vpop.f32.mrf.mxu0
    %v137 = vadd.f32 %v71, %v136
    %v138 = vpop.f32.mrf.mxu0
    %v139 = vadd.f32 %v71, %v138
    %140 = vdwg.mxu0
    %141 = vmatpush.bf16.msra.mxu0 0
    %142 = vmatpush.bf16.msra.mxu0 0
    %143 = vmatpush.bf16.msra.mxu0 0
    %144 = vmatpush.bf16.msra.mxu0 0
    %145 = vmatpush.bf16.msra.mxu0 0
    %146 = vmatpush.bf16.msra.mxu0 0
    %147 = vmatpush.bf16.msra.mxu0 0
    %148 = vmatpush.bf16.msra.mxu0 %v92
    %149 = vmatmul.bf16.gmra.mxu0 %v101
    %v150 = vpop.f32.mrf.mxu0
    %v151 = vadd.f32 %v72, %v150
    %v152 = vpop.f32.mrf.mxu0
    %v153 = vadd.f32 %v72, %v152
    %154 = vmatmul.bf16.gmra.mxu0 %v104
    %v155 = vpop.f32.mrf.mxu0
    %v156 = vadd.f32 %v72, %v155
    %v157 = vpop.f32.mrf.mxu0
    %v158 = vadd.f32 %v72, %v157
    %159 = vmatmul.bf16.gmra.mxu0 %v107
    %v160 = vpop.f32.mrf.mxu0
    %v161 = vadd.f32 %v72, %v160
    %v162 = vpop.f32.mrf.mxu0
    %v163 = vadd.f32 %v72, %v162
    %164 = vmatmul.bf16.gmra.mxu0 %v110
    %v165 = vpop.f32.mrf.mxu0
    %v166 = vadd.f32 %v72, %v165
    %v167 = vpop.f32.mrf.mxu0
    %v168 = vadd.f32 %v72, %v167
    %169 = vdwg.mxu0
    %170 = vmatpush.bf16.msra.mxu0 0
    %171 = vmatpush.bf16.msra.mxu0 0
    %172 = vmatpush.bf16.msra.mxu0 0
    %173 = vmatpush.bf16.msra.mxu0 0
    %174 = vmatpush.bf16.msra.mxu0 0
    %175 = vmatpush.bf16.msra.mxu0 0
    %176 = vmatpush.bf16.msra.mxu0 0
    %177 = vmatpush.bf16.msra.mxu0 %v93
    %178 = vmatmul.bf16.gmra.mxu0 %v101
    %v179 = vpop.f32.mrf.mxu0
    %v180 = vadd.f32 %v73, %v179
    %v181 = vpop.f32.mrf.mxu0
    %v182 = vadd.f32 %v73, %v181
    %183 = vmatmul.bf16.gmra.mxu0 %v104
    %v184 = vpop.f32.mrf.mxu0
    %v185 = vadd.f32 %v73, %v184
    %v186 = vpop.f32.mrf.mxu0
    %v187 = vadd.f32 %v73, %v186
    %188 = vmatmul.bf16.gmra.mxu0 %v107
    %v189 = vpop.f32.mrf.mxu0
    %v190 = vadd.f32 %v73, %v189
    %v191 = vpop.f32.mrf.mxu0
    %v192 = vadd.f32 %v73, %v191
    %193 = vmatmul.bf16.gmra.mxu0 %v110
    %v194 = vpop.f32.mrf.mxu0
    %v195 = vadd.f32 %v73, %v194
    %v196 = vpop.f32.mrf.mxu0
    %v197 = vadd.f32 %v73, %v196
    %198 = vdwg.mxu0
    %199 = vmatpush.bf16.msra.mxu0 0
    %200 = vmatpush.bf16.msra.mxu0 0
    %201 = vmatpush.bf16.msra.mxu0 0
    %202 = vmatpush.bf16.msra.mxu0 0
    %203 = vmatpush.bf16.msra.mxu0 0
    %204 = vmatpush.bf16.msra.mxu0 0
    %205 = vmatpush.bf16.msra.mxu0 0
    %206 = vmatpush.bf16.msra.mxu0 %v94
    %207 = vmatmul.bf16.gmra.mxu0 %v101
    %v208 = vpop.f32.mrf.mxu0
    %v209 = vadd.f32 %v74, %v208
    %v210 = vpop.f32.mrf.mxu0
    %v211 = vadd.f32 %v74, %v210
    %212 = vmatmul.bf16.gmra.mxu0 %v104
    %v213 = vpop.f32.mrf.mxu0
    %v214 = vadd.f32 %v74, %v213
    %v215 = vpop.f32.mrf.mxu0
    %v216 = vadd.f32 %v74, %v215
    %217 = vmatmul.bf16.gmra.mxu0 %v107
    %v218 = vpop.f32.mrf.mxu0
    %v219 = vadd.f32 %v74, %v218
    %v220 = vpop.f32.mrf.mxu0
    %v221 = vadd.f32 %v74, %v220
    %222 = vmatmul.bf16.gmra.mxu0 %v110
    %v223 = vpop.f32.mrf.mxu0
    %v224 = vadd.f32 %v74, %v223
    %v225 = vpop.f32.mrf.mxu0
    %v226 = vadd.f32 %v74, %v225
    %227 = vdwg.mxu0
    %228 = vst [vmem:[#allocation4] sm:$0xff] %v122
    %229 = vst [vmem:[#allocation4 + $0x8] sm:$0xff] %v151
    %230 = vst [vmem:[#allocation4 + $0x10] sm:$0xff] %v180
    %231 = vst [vmem:[#allocation4 + $0x18] sm:$0xff] %v209
    %232 = vst [vmem:[#allocation4 + $0x20] sm:$0xff] %v124
    %233 = vst [vmem:[#allocation4 + $0x28] sm:$0xff] %v153
    %234 = vst [vmem:[#allocation4 + $0x30] sm:$0xff] %v182
    %235 = vst [vmem:[#allocation4 + $0x38] sm:$0xff] %v211
    %236 = vst [vmem:[#allocation4 + $0x40] sm:$0xff] %v127
    %237 = vst [vmem:[#allocation4 + $0x48] sm:$0xff] %v156
    %238 = vst [vmem:[#allocation4 + $0x50] sm:$0xff] %v185
    %239 = vst [vmem:[#allocation4 + $0x58] sm:$0xff] %v214
    %240 = vst [vmem:[#allocation4 + $0x60] sm:$0xff] %v129
    %241 = vst [vmem:[#allocation4 + $0x68] sm:$0xff] %v158
    %242 = vst [vmem:[#allocation4 + $0x70] sm:$0xff] %v187
    %243 = vst [vmem:[#allocation4 + $0x78] sm:$0xff] %v216
    %244 = vst [vmem:[#allocation4 + $0x80] sm:$0xff] %v132
    %245 = vst [vmem:[#allocation4 + $0x88] sm:$0xff] %v161
    %246 = vst [vmem:[#allocation4 + $0x90] sm:$0xff] %v190
    %247 = vst [vmem:[#allocation4 + $0x98] sm:$0xff] %v219
    %248 = vst [vmem:[#allocation4 + $0xa0] sm:$0xff] %v134
    %249 = vst [vmem:[#allocation4 + $0xa8] sm:$0xff] %v163
    %250 = vst [vmem:[#allocation4 + $0xb0] sm:$0xff] %v192
    %251 = vst [vmem:[#allocation4 + $0xb8] sm:$0xff] %v221
    %252 = vst [vmem:[#allocation4 + $0xc0] sm:$0xff] %v137
    %253 = vst [vmem:[#allocation4 + $0xc8] sm:$0xff] %v166
    %254 = vst [vmem:[#allocation4 + $0xd0] sm:$0xff] %v195
    %255 = vst [vmem:[#allocation4 + $0xd8] sm:$0xff] %v224
    %256 = vst [vmem:[#allocation4 + $0xe0] sm:$0xff] %v139
    %257 = vst [vmem:[#allocation4 + $0xe8] sm:$0xff] %v168
    %258 = vst [vmem:[#allocation4 + $0xf0] sm:$0xff] %v197
    %259 = vst [vmem:[#allocation4 + $0xf8] sm:$0xff] %v226
    %v260 = vld [vmem:[#allocation5] sm:$0xff]
    %v261 = vld [vmem:[#allocation5 + $0x8] sm:$0xff]
    %v262 = vld [vmem:[#allocation5 + $0x10] sm:$0xff]
    %v263 = vld [vmem:[#allocation5 + $0x18] sm:$0xff]
    %v264 = vld [vmem:[#allocation5 + $0x20] sm:$0xff]
    %v265 = vld [vmem:[#allocation5 + $0x28] sm:$0xff]
    %v266 = vld [vmem:[#allocation5 + $0x30] sm:$0xff]
    %v267 = vld [vmem:[#allocation5 + $0x38] sm:$0xff]
    %v268 = vld [vmem:[#allocation5 + $0x40] sm:$0xff]
    %v269 = vld [vmem:[#allocation5 + $0x48] sm:$0xff]
    %v270 = vld [vmem:[#allocation5 + $0x50] sm:$0xff]
    %v271 = vld [vmem:[#allocation5 + $0x58] sm:$0xff]
    %v272 = vld [vmem:[#allocation5 + $0x60] sm:$0xff]
    %v273 = vld [vmem:[#allocation5 + $0x68] sm:$0xff]
    %v274 = vld [vmem:[#allocation5 + $0x70] sm:$0xff]
    %v275 = vld [vmem:[#allocation5 + $0x78] sm:$0xff]
    %v276 = vld [vmem:[#allocation5 + $0x80] sm:$0xff]
    %v277 = vld [vmem:[#allocation5 + $0x88] sm:$0xff]
    %v278 = vld [vmem:[#allocation5 + $0x90] sm:$0xff]
    %v279 = vld [vmem:[#allocation5 + $0x98] sm:$0xff]
    %v280 = vld [vmem:[#allocation5 + $0xa0] sm:$0xff]
    %v281 = vld [vmem:[#allocation5 + $0xa8] sm:$0xff]
    %v282 = vld [vmem:[#allocation5 + $0xb0] sm:$0xff]
    %v283 = vld [vmem:[#allocation5 + $0xb8] sm:$0xff]
    %v284 = vld [vmem:[#allocation5 + $0xc0] sm:$0xff]
    %v285 = vld [vmem:[#allocation5 + $0xc8] sm:$0xff]
    %v286 = vld [vmem:[#allocation5 + $0xd0] sm:$0xff]
    %v287 = vld [vmem:[#allocation5 + $0xd8] sm:$0xff]
    %v288 = vld [vmem:[#allocation5 + $0xe0] sm:$0xff]
    %v289 = vld [vmem:[#allocation5 + $0xe8] sm:$0xff]
    %v290 = vld [vmem:[#allocation5 + $0xf0] sm:$0xff]
    %v291 = vld [vmem:[#allocation5 + $0xf8] sm:$0xff]
    %s292 = smul.u32 0, 4
    %s293 = smul.addr %s292, 8
    %s294 = scalar_lea.vmem [#allocation4], %s293
    %v295 = vld [vmem:[%s294] sm:$0xff]
    %v296 = vld [vmem:[%s294 + $0x8] sm:$0xff]
    %v297 = vld [vmem:[%s294 + $0x10] sm:$0xff]
    %v298 = vld [vmem:[%s294 + $0x18] sm:$0xff]
    %v299 = vpack.c.bf16 %v51, %v51
    %v332 = vunpack.c.l.b16 %v260
    %v333 = vunpack.c.h.b16 %v260
    %v334 = vunpack.c.l.b16 %v261
    %v335 = vunpack.c.h.b16 %v261
    %v336 = vunpack.c.l.b16 %v262
    %v337 = vunpack.c.h.b16 %v262
    %v338 = vunpack.c.l.b16 %v263
    %v339 = vunpack.c.h.b16 %v263
    %v340 = vunpack.c.l.b16 %v264
    %v341 = vunpack.c.h.b16 %v264
    %v342 = vunpack.c.l.b16 %v265
    %v343 = vunpack.c.h.b16 %v265
    %v344 = vunpack.c.l.b16 %v266
    %v345 = vunpack.c.h.b16 %v266
    %v346 = vunpack.c.l.b16 %v267
    %v347 = vunpack.c.h.b16 %v267
    %v348 = vunpack.c.l.b16 %v268
    %v349 = vunpack.c.h.b16 %v268
    %v350 = vunpack.c.l.b16 %v269
    %v351 = vunpack.c.h.b16 %v269
    %v352 = vunpack.c.l.b16 %v270
    %v353 = vunpack.c.h.b16 %v270
    %v354 = vunpack.c.l.b16 %v271
    %v355 = vunpack.c.h.b16 %v271
    %v356 = vunpack.c.l.b16 %v272
    %v357 = vunpack.c.h.b16 %v272
    %v358 = vunpack.c.l.b16 %v273
    %v359 = vunpack.c.h.b16 %v273
    %v360 = vunpack.c.l.b16 %v274
    %v361 = vunpack.c.h.b16 %v274
    %v362 = vunpack.c.l.b16 %v275
    %v363 = vunpack.c.h.b16 %v275
    %v364 = vunpack.c.l.b16 %v276
    %v365 = vunpack.c.h.b16 %v276
    %v366 = vunpack.c.l.b16 %v277
    %v367 = vunpack.c.h.b16 %v277
    %v368 = vunpack.c.l.b16 %v278
    %v369 = vunpack.c.h.b16 %v278
    %v370 = vunpack.c.l.b16 %v279
    %v371 = vunpack.c.h.b16 %v279
    %v372 = vunpack.c.l.b16 %v280
    %v373 = vunpack.c.h.b16 %v280
    %v374 = vunpack.c.l.b16 %v281
    %v375 = vunpack.c.h.b16 %v281
    %v376 = vunpack.c.l.b16 %v282
    %v377 = vunpack.c.h.b16 %v282
    %v378 = vunpack.c.l.b16 %v283
    %v379 = vunpack.c.h.b16 %v283
    %v380 = vunpack.c.l.b16 %v284
    %v381 = vunpack.c.h.b16 %v284
    %v382 = vunpack.c.l.b16 %v285
    %v383 = vunpack.c.h.b16 %v285
    %v384 = vunpack.c.l.b16 %v286
    %v385 = vunpack.c.h.b16 %v286
    %v386 = vunpack.c.l.b16 %v287
    %v387 = vunpack.c.h.b16 %v287
    %v388 = vunpack.c.l.b16 %v288
    %v389 = vunpack.c.h.b16 %v288
    %v390 = vunpack.c.l.b16 %v289
    %v391 = vunpack.c.h.b16 %v289
    %v392 = vunpack.c.l.b16 %v290
    %v393 = vunpack.c.h.b16 %v290
    %v394 = vunpack.c.l.b16 %v291
    %v395 = vunpack.c.h.b16 %v291
    %v396 = vpack.c.b16 %v336, %v332
    %v397 = vpack.c.b16 %v337, %v333
    %v398 = vpack.c.b16 %v338, %v334
    %v399 = vpack.c.b16 %v339, %v335
    %v400 = vpack.c.b16 %v344, %v340
    %v401 = vpack.c.b16 %v345, %v341
    %v402 = vpack.c.b16 %v346, %v342
    %v403 = vpack.c.b16 %v347, %v343
    %v404 = vpack.c.b16 %v352, %v348
    %v405 = vpack.c.b16 %v353, %v349
    %v406 = vpack.c.b16 %v354, %v350
    %v407 = vpack.c.b16 %v355, %v351
    %v408 = vpack.c.b16 %v360, %v356
    %v409 = vpack.c.b16 %v361, %v357
    %v410 = vpack.c.b16 %v362, %v358
    %v411 = vpack.c.b16 %v363, %v359
    %v412 = vpack.c.b16 %v368, %v364
    %v413 = vpack.c.b16 %v369, %v365
    %v414 = vpack.c.b16 %v370, %v366
    %v415 = vpack.c.b16 %v371, %v367
    %v416 = vpack.c.b16 %v376, %v372
    %v417 = vpack.c.b16 %v377, %v373
    %v418 = vpack.c.b16 %v378, %v374
    %v419 = vpack.c.b16 %v379, %v375
    %v420 = vpack.c.b16 %v384, %v380
    %v421 = vpack.c.b16 %v385, %v381
    %v422 = vpack.c.b16 %v386, %v382
    %v423 = vpack.c.b16 %v387, %v383
    %v424 = vpack.c.b16 %v392, %v388
    %v425 = vpack.c.b16 %v393, %v389
    %v426 = vpack.c.b16 %v394, %v390
    %v427 = vpack.c.b16 %v395, %v391
    %460 = vmatpush.bf16.msra.mxu0 %v424
    %461 = vmatpush.bf16.msra.mxu0 %v420
    %462 = vmatpush.bf16.msra.mxu0 %v416
    %463 = vmatpush.bf16.msra.mxu0 %v412
    %464 = vmatpush.bf16.msra.mxu0 %v408
    %465 = vmatpush.bf16.msra.mxu0 %v404
    %466 = vmatpush.bf16.msra.mxu0 %v400
    %467 = vmatpush.bf16.msra.mxu0 %v396
    %468 = vmatmul.bf16.gmra.mxu0 %v299
    %v469 = vpop.f32.mrf.mxu0
    %v470 = vadd.f32 0.0, %v469
    %v471 = vpop.f32.mrf.mxu0
    %472 = vdwg.mxu0
    %473 = vmatpush.bf16.msra.mxu0 %v425
    %474 = vmatpush.bf16.msra.mxu0 %v421
    %475 = vmatpush.bf16.msra.mxu0 %v417
    %476 = vmatpush.bf16.msra.mxu0 %v413
    %477 = vmatpush.bf16.msra.mxu0 %v409
    %478 = vmatpush.bf16.msra.mxu0 %v405
    %479 = vmatpush.bf16.msra.mxu0 %v401
    %480 = vmatpush.bf16.msra.mxu0 %v397
    %481 = vmatmul.bf16.gmra.mxu0 %v299
    %v482 = vpop.f32.mrf.mxu0
    %v483 = vadd.f32 0.0, %v482
    %v484 = vpop.f32.mrf.mxu0
    %485 = vdwg.mxu0
    %486 = vmatpush.bf16.msra.mxu0 %v426
    %487 = vmatpush.bf16.msra.mxu0 %v422
    %488 = vmatpush.bf16.msra.mxu0 %v418
    %489 = vmatpush.bf16.msra.mxu0 %v414
    %490 = vmatpush.bf16.msra.mxu0 %v410
    %491 = vmatpush.bf16.msra.mxu0 %v406
    %492 = vmatpush.bf16.msra.mxu0 %v402
    %493 = vmatpush.bf16.msra.mxu0 %v398
    %494 = vmatmul.bf16.gmra.mxu0 %v299
    %v495 = vpop.f32.mrf.mxu0
    %v496 = vadd.f32 0.0, %v495
    %v497 = vpop.f32.mrf.mxu0
    %498 = vdwg.mxu0
    %499 = vmatpush.bf16.msra.mxu0 %v427
    %500 = vmatpush.bf16.msra.mxu0 %v423
    %501 = vmatpush.bf16.msra.mxu0 %v419
    %502 = vmatpush.bf16.msra.mxu0 %v415
    %503 = vmatpush.bf16.msra.mxu0 %v411
    %504 = vmatpush.bf16.msra.mxu0 %v407
    %505 = vmatpush.bf16.msra.mxu0 %v403
    %506 = vmatpush.bf16.msra.mxu0 %v399
    %507 = vmatmul.bf16.gmra.mxu0 %v299
    %v508 = vpop.f32.mrf.mxu0
    %v509 = vadd.f32 0.0, %v508
    %v510 = vpop.f32.mrf.mxu0
    %511 = vdwg.mxu0
    %v512 = vadd.f32 %v295, %v470
    %v513 = vadd.f32 %v296, %v483
    %v514 = vadd.f32 %v297, %v496
    %v515 = vadd.f32 %v298, %v509
    %v516 = vxor.u32 %v512, 2147483648
    %v517 = vxor.u32 %v513, 2147483648
    %v518 = vxor.u32 %v514, 2147483648
    %v519 = vmul.f32 %v516, 1.442695
    %v520 = vpow.pop %v519
    %v521 = vmul.f32 %v517, 1.442695
    %v522 = vpow.pop %v521
    %v523 = vmul.f32 %v518, 1.442695
    %v524 = vpow.pop %v523
    %v525 = vadd.f32 %v520, 1.0
    %v526 = vadd.f32 %v522, 1.0
    %v527 = vadd.f32 %v524, 1.0
    %v528 = vrcp.pop %v525
    %v529 = vmul.f32 %v525, %v528
    %v530 = vsub.f32 1.0, %v529
    %v531 = vmul.f32 %v528, %v530
    %v532 = vadd.f32 %v528, %v531
    %vm533 = vweird.f32 %v525
    %vm534 = vweird.f32 %v528
    %vm535 = vmor %vm533, %vm534
    %v536 = vsel %vm535, %v528, %v532
    %v537 = vand.u32 2147483647, %v525
    %vm538 = vcmp.eq.f32.partialorder %v537, 8.507059e+37
    %v539 = vand.u32 %v525, 2147483648
    %v540 = vor.u32 1.1754944e-38, %v539
    %v541 = vsel %vm538, %v540, %v536
    %v542 = vmul.f32 1.0, %v541
    %v543 = vrcp.pop %v526
    %v544 = vmul.f32 %v526, %v543
    %v545 = vsub.f32 1.0, %v544
    %v546 = vmul.f32 %v543, %v545
    %v547 = vadd.f32 %v543, %v546
    %vm548 = vweird.f32 %v526
    %vm549 = vweird.f32 %v543
    %vm550 = vmor %vm548, %vm549
    %v551 = vsel %vm550, %v543, %v547
    %v552 = vand.u32 2147483647, %v526
    %vm553 = vcmp.eq.f32.partialorder %v552, 8.507059e+37
    %v554 = vand.u32 %v526, 2147483648
    %v555 = vor.u32 1.1754944e-38, %v554
    %v556 = vsel %vm553, %v555, %v551
    %v557 = vmul.f32 1.0, %v556
    %v558 = vrcp.pop %v527
    %v559 = vmul.f32 %v527, %v558
    %v560 = vsub.f32 1.0, %v559
    %v561 = vmul.f32 %v558, %v560
    %v562 = vadd.f32 %v558, %v561
    %vm563 = vweird.f32 %v527
    %vm564 = vweird.f32 %v558
    %vm565 = vmor %vm563, %vm564
    %v566 = vsel %vm565, %v558, %v562
    %v567 = vand.u32 2147483647, %v527
    %vm568 = vcmp.eq.f32.partialorder %v567, 8.507059e+37
    %v569 = vand.u32 %v527, 2147483648
    %v570 = vor.u32 1.1754944e-38, %v569
    %v571 = vsel %vm568, %v570, %v566
    %v572 = vmul.f32 1.0, %v571
    %v573 = vtanh.pop %v515
    %v574 = vmul.f32 %v557, %v52
    %v575 = vmul.f32 %v542, %v573
    %v576 = vadd.f32 %v574, %v575
    %v577 = vtanh.pop %v576
    %v578 = vmul.f32 %v572, %v577
    %v579 = vpack.c.bf16 %v578, %v578
    %580 = vst [vmem:[%s6] sm:$0xf] %v579
    %s581 = smul.u32 1, 4
    %s582 = smul.addr %s581, 8
    %s583 = scalar_lea.vmem [#allocation4], %s582
    %v584 = vld [vmem:[%s583] sm:$0xff]
    %v585 = vld [vmem:[%s583 + $0x8] sm:$0xff]
    %v586 = vld [vmem:[%s583 + $0x10] sm:$0xff]
    %v587 = vld [vmem:[%s583 + $0x18] sm:$0xff]
    %588 = vmatpush.bf16.msra.mxu0 %v424
    %589 = vmatpush.bf16.msra.mxu0 %v420
    %590 = vmatpush.bf16.msra.mxu0 %v416
    %591 = vmatpush.bf16.msra.mxu0 %v412
    %592 = vmatpush.bf16.msra.mxu0 %v408
    %593 = vmatpush.bf16.msra.mxu0 %v404
    %594 = vmatpush.bf16.msra.mxu0 %v400
    %595 = vmatpush.bf16.msra.mxu0 %v396
    %596 = vmatmul.bf16.gmra.mxu0 %v579
    %v597 = vpop.f32.mrf.mxu0
    %v598 = vadd.f32 0.0, %v597
    %v599 = vpop.f32.mrf.mxu0
    %600 = vdwg.mxu0
    %601 = vmatpush.bf16.msra.mxu0 %v425
    %602 = vmatpush.bf16.msra.mxu0 %v421
    %603 = vmatpush.bf16.msra.mxu0 %v417
    %604 = vmatpush.bf16.msra.mxu0 %v413
    %605 = vmatpush.bf16.msra.mxu0 %v409
    %606 = vmatpush.bf16.msra.mxu0 %v405
    %607 = vmatpush.bf16.msra.mxu0 %v401
    %608 = vmatpush.bf16.msra.mxu0 %v397
    %609 = vmatmul.bf16.gmra.mxu0 %v579
    %v610 = vpop.f32.mrf.mxu0
    %v611 = vadd.f32 0.0, %v610
    %v612 = vpop.f32.mrf.mxu0
    %613 = vdwg.mxu0
    %614 = vmatpush.bf16.msra.mxu0 %v426
    %615 = vmatpush.bf16.msra.mxu0 %v422
    %616 = vmatpush.bf16.msra.mxu0 %v418
    %617 = vmatpush.bf16.msra.mxu0 %v414
    %618 = vmatpush.bf16.msra.mxu0 %v410
    %619 = vmatpush.bf16.msra.mxu0 %v406
    %620 = vmatpush.bf16.msra.mxu0 %v402
    %621 = vmatpush.bf16.msra.mxu0 %v398
    %622 = vmatmul.bf16.gmra.mxu0 %v579
    %v623 = vpop.f32.mrf.mxu0
    %v624 = vadd.f32 0.0, %v623
    %v625 = vpop.f32.mrf.mxu0
    %626 = vdwg.mxu0
    %627 = vmatpush.bf16.msra.mxu0 %v427
    %628 = vmatpush.bf16.msra.mxu0 %v423
    %629 = vmatpush.bf16.msra.mxu0 %v419
    %630 = vmatpush.bf16.msra.mxu0 %v415
    %631 = vmatpush.bf16.msra.mxu0 %v411
    %632 = vmatpush.bf16.msra.mxu0 %v407
    %633 = vmatpush.bf16.msra.mxu0 %v403
    %634 = vmatpush.bf16.msra.mxu0 %v399
    %635 = vmatmul.bf16.gmra.mxu0 %v579
    %v636 = vpop.f32.mrf.mxu0
    %v637 = vadd.f32 0.0, %v636
    %v638 = vpop.f32.mrf.mxu0
    %639 = vdwg.mxu0
    %v640 = vadd.f32 %v584, %v598
    %v641 = vadd.f32 %v585, %v611
    %v642 = vadd.f32 %v586, %v624
    %v643 = vadd.f32 %v587, %v637
    %v644 = vxor.u32 %v640, 2147483648
    %v645 = vxor.u32 %v641, 2147483648
    %v646 = vxor.u32 %v642, 2147483648
    %v647 = vmul.f32 %v644, 1.442695
    %v648 = vpow.pop %v647
    %v649 = vmul.f32 %v645, 1.442695
    %v650 = vpow.pop %v649
    %v651 = vmul.f32 %v646, 1.442695
    %v652 = vpow.pop %v651
    %v653 = vadd.f32 %v648, 1.0
    %v654 = vadd.f32 %v650, 1.0
    %v655 = vadd.f32 %v652, 1.0
    %v656 = vrcp.pop %v653
    %v657 = vmul.f32 %v653, %v656
    %v658 = vsub.f32 1.0, %v657
    %v659 = vmul.f32 %v656, %v658
    %v660 = vadd.f32 %v656, %v659
    %vm661 = vweird.f32 %v653
    %vm662 = vweird.f32 %v656
    %vm663 = vmor %vm661, %vm662
    %v664 = vsel %vm663, %v656, %v660
    %v665 = vand.u32 2147483647, %v653
    %vm666 = vcmp.eq.f32.partialorder %v665, 8.507059e+37
    %v667 = vand.u32 %v653, 2147483648
    %v668 = vor.u32 1.1754944e-38, %v667
    %v669 = vsel %vm666, %v668, %v664
    %v670 = vmul.f32 1.0, %v669
    %v671 = vrcp.pop %v654
    %v672 = vmul.f32 %v654, %v671
    %v673 = vsub.f32 1.0, %v672
    %v674 = vmul.f32 %v671, %v673
    %v675 = vadd.f32 %v671, %v674
    %vm676 = vweird.f32 %v654
    %vm677 = vweird.f32 %v671
    %vm678 = vmor %vm676, %vm677
    %v679 = vsel %vm678, %v671, %v675
    %v680 = vand.u32 2147483647, %v654
    %vm681 = vcmp.eq.f32.partialorder %v680, 8.507059e+37
    %v682 = vand.u32 %v654, 2147483648
    %v683 = vor.u32 1.1754944e-38, %v682
    %v684 = vsel %vm681, %v683, %v679
    %v685 = vmul.f32 1.0, %v684
    %v686 = vrcp.pop %v655
    %v687 = vmul.f32 %v655, %v686
    %v688 = vsub.f32 1.0, %v687
    %v689 = vmul.f32 %v686, %v688
    %v690 = vadd.f32 %v686, %v689
    %vm691 = vweird.f32 %v655
    %vm692 = vweird.f32 %v686
    %vm693 = vmor %vm691, %vm692
    %v694 = vsel %vm693, %v686, %v690
    %v695 = vand.u32 2147483647, %v655
    %vm696 = vcmp.eq.f32.partialorder %v695, 8.507059e+37
    %v697 = vand.u32 %v655, 2147483648
    %v698 = vor.u32 1.1754944e-38, %v697
    %v699 = vsel %vm696, %v698, %v694
    %v700 = vmul.f32 1.0, %v699
    %v701 = vtanh.pop %v643
    %v702 = vmul.f32 %v685, %v576
    %v703 = vmul.f32 %v670, %v701
    %v704 = vadd.f32 %v702, %v703
    %v705 = vtanh.pop %v704
    %v706 = vmul.f32 %v700, %v705
    %v707 = vpack.c.bf16 %v706, %v706
    %s708 = scalar_lea.vmem %s6, 4
    %709 = vst [vmem:[%s708] sm:$0xf] %v707
    %s710 = smul.u32 2, 4
    %s711 = smul.addr %s710, 8
    %s712 = scalar_lea.vmem [#allocation4], %s711
    %v713 = vld [vmem:[%s712] sm:$0xff]
    %v714 = vld [vmem:[%s712 + $0x8] sm:$0xff]
    %v715 = vld [vmem:[%s712 + $0x10] sm:$0xff]
    %v716 = vld [vmem:[%s712 + $0x18] sm:$0xff]
    %717 = vmatpush.bf16.msra.mxu0 %v424
    %718 = vmatpush.bf16.msra.mxu0 %v420
    %719 = vmatpush.bf16.msra.mxu0 %v416
    %720 = vmatpush.bf16.msra.mxu0 %v412
    %721 = vmatpush.bf16.msra.mxu0 %v408
    %722 = vmatpush.bf16.msra.mxu0 %v404
    %723 = vmatpush.bf16.msra.mxu0 %v400
    %724 = vmatpush.bf16.msra.mxu0 %v396
    %725 = vmatmul.bf16.gmra.mxu0 %v707
    %v726 = vpop.f32.mrf.mxu0
    %v727 = vadd.f32 0.0, %v726
    %v728 = vpop.f32.mrf.mxu0
    %729 = vdwg.mxu0
    %730 = vmatpush.bf16.msra.mxu0 %v425
    %731 = vmatpush.bf16.msra.mxu0 %v421
    %732 = vmatpush.bf16.msra.mxu0 %v417
    %733 = vmatpush.bf16.msra.mxu0 %v413
    %734 = vmatpush.bf16.msra.mxu0 %v409
    %735 = vmatpush.bf16.msra.mxu0 %v405
    %736 = vmatpush.bf16.msra.mxu0 %v401
    %737 = vmatpush.bf16.msra.mxu0 %v397
    %738 = vmatmul.bf16.gmra.mxu0 %v707
    %v739 = vpop.f32.mrf.mxu0
    %v740 = vadd.f32 0.0, %v739
    %v741 = vpop.f32.mrf.mxu0
    %742 = vdwg.mxu0
    %743 = vmatpush.bf16.msra.mxu0 %v426
    %744 = vmatpush.bf16.msra.mxu0 %v422
    %745 = vmatpush.bf16.msra.mxu0 %v418
    %746 = vmatpush.bf16.msra.mxu0 %v414
    %747 = vmatpush.bf16.msra.mxu0 %v410
    %748 = vmatpush.bf16.msra.mxu0 %v406
    %749 = vmatpush.bf16.msra.mxu0 %v402
    %750 = vmatpush.bf16.msra.mxu0 %v398
    %751 = vmatmul.bf16.gmra.mxu0 %v707
    %v752 = vpop.f32.mrf.mxu0
    %v753 = vadd.f32 0.0, %v752
    %v754 = vpop.f32.mrf.mxu0
    %755 = vdwg.mxu0
    %756 = vmatpush.bf16.msra.mxu0 %v427
    %757 = vmatpush.bf16.msra.mxu0 %v423
    %758 = vmatpush.bf16.msra.mxu0 %v419
    %759 = vmatpush.bf16.msra.mxu0 %v415
    %760 = vmatpush.bf16.msra.mxu0 %v411
    %761 = vmatpush.bf16.msra.mxu0 %v407
    %762 = vmatpush.bf16.msra.mxu0 %v403
    %763 = vmatpush.bf16.msra.mxu0 %v399
    %764 = vmatmul.bf16.gmra.mxu0 %v707
    %v765 = vpop.f32.mrf.mxu0
    %v766 = vadd.f32 0.0, %v765
    %v767 = vpop.f32.mrf.mxu0
    %768 = vdwg.mxu0
    %v769 = vadd.f32 %v713, %v727
    %v770 = vadd.f32 %v714, %v740
    %v771 = vadd.f32 %v715, %v753
    %v772 = vadd.f32 %v716, %v766
    %v773 = vxor.u32 %v769, 2147483648
    %v774 = vxor.u32 %v770, 2147483648
    %v775 = vxor.u32 %v771, 2147483648
    %v776 = vmul.f32 %v773, 1.442695
    %v777 = vpow.pop %v776
    %v778 = vmul.f32 %v774, 1.442695
    %v779 = vpow.pop %v778
    %v780 = vmul.f32 %v775, 1.442695
    %v781 = vpow.pop %v780
    %v782 = vadd.f32 %v777, 1.0
    %v783 = vadd.f32 %v779, 1.0
    %v784 = vadd.f32 %v781, 1.0
    %v785 = vrcp.pop %v782
    %v786 = vmul.f32 %v782, %v785
    %v787 = vsub.f32 1.0, %v786
    %v788 = vmul.f32 %v785, %v787
    %v789 = vadd.f32 %v785, %v788
    %vm790 = vweird.f32 %v782
    %vm791 = vweird.f32 %v785
    %vm792 = vmor %vm790, %vm791
    %v793 = vsel %vm792, %v785, %v789
    %v794 = vand.u32 2147483647, %v782
    %vm795 = vcmp.eq.f32.partialorder %v794, 8.507059e+37
    %v796 = vand.u32 %v782, 2147483648
    %v797 = vor.u32 1.1754944e-38, %v796
    %v798 = vsel %vm795, %v797, %v793
    %v799 = vmul.f32 1.0, %v798
    %v800 = vrcp.pop %v783
    %v801 = vmul.f32 %v783, %v800
    %v802 = vsub.f32 1.0, %v801
    %v803 = vmul.f32 %v800, %v802
    %v804 = vadd.f32 %v800, %v803
    %vm805 = vweird.f32 %v783
    %vm806 = vweird.f32 %v800
    %vm807 = vmor %vm805, %vm806
    %v808 = vsel %vm807, %v800, %v804
    %v809 = vand.u32 2147483647, %v783
    %vm810 = vcmp.eq.f32.partialorder %v809, 8.507059e+37
    %v811 = vand.u32 %v783, 2147483648
    %v812 = vor.u32 1.1754944e-38, %v811
    %v813 = vsel %vm810, %v812, %v808
    %v814 = vmul.f32 1.0, %v813
    %v815 = vrcp.pop %v784
    %v816 = vmul.f32 %v784, %v815
    %v817 = vsub.f32 1.0, %v816
    %v818 = vmul.f32 %v815, %v817
    %v819 = vadd.f32 %v815, %v818
    %vm820 = vweird.f32 %v784
    %vm821 = vweird.f32 %v815
    %vm822 = vmor %vm820, %vm821
    %v823 = vsel %vm822, %v815, %v819
    %v824 = vand.u32 2147483647, %v784
    %vm825 = vcmp.eq.f32.partialorder %v824, 8.507059e+37
    %v826 = vand.u32 %v784, 2147483648
    %v827 = vor.u32 1.1754944e-38, %v826
    %v828 = vsel %vm825, %v827, %v823
    %v829 = vmul.f32 1.0, %v828
    %v830 = vtanh.pop %v772
    %v831 = vmul.f32 %v814, %v704
    %v832 = vmul.f32 %v799, %v830
    %v833 = vadd.f32 %v831, %v832
    %v834 = vtanh.pop %v833
    %v835 = vmul.f32 %v829, %v834
    %v836 = vpack.c.bf16 %v835, %v835
    %s837 = scalar_lea.vmem %s6, 8
    %838 = vst [vmem:[%s837] sm:$0xf] %v836
    %s839 = smul.u32 3, 4
    %s840 = smul.addr %s839, 8
    %s841 = scalar_lea.vmem [#allocation4], %s840
    %v842 = vld [vmem:[%s841] sm:$0xff]
    %v843 = vld [vmem:[%s841 + $0x8] sm:$0xff]
    %v844 = vld [vmem:[%s841 + $0x10] sm:$0xff]
    %v845 = vld [vmem:[%s841 + $0x18] sm:$0xff]
    %846 = vmatpush.bf16.msra.mxu0 %v424
    %847 = vmatpush.bf16.msra.mxu0 %v420
    %848 = vmatpush.bf16.msra.mxu0 %v416
    %849 = vmatpush.bf16.msra.mxu0 %v412
    %850 = vmatpush.bf16.msra.mxu0 %v408
    %851 = vmatpush.bf16.msra.mxu0 %v404
    %852 = vmatpush.bf16.msra.mxu0 %v400
    %853 = vmatpush.bf16.msra.mxu0 %v396
    %854 = vmatmul.bf16.gmra.mxu0 %v836
    %v855 = vpop.f32.mrf.mxu0
    %v856 = vadd.f32 0.0, %v855
    %v857 = vpop.f32.mrf.mxu0
    %858 = vdwg.mxu0
    %859 = vmatpush.bf16.msra.mxu0 %v425
    %860 = vmatpush.bf16.msra.mxu0 %v421
    %861 = vmatpush.bf16.msra.mxu0 %v417
    %862 = vmatpush.bf16.msra.mxu0 %v413
    %863 = vmatpush.bf16.msra.mxu0 %v409
    %864 = vmatpush.bf16.msra.mxu0 %v405
    %865 = vmatpush.bf16.msra.mxu0 %v401
    %866 = vmatpush.bf16.msra.mxu0 %v397
    %867 = vmatmul.bf16.gmra.mxu0 %v836
    %v868 = vpop.f32.mrf.mxu0
    %v869 = vadd.f32 0.0, %v868
    %v870 = vpop.f32.mrf.mxu0
    %871 = vdwg.mxu0
    %872 = vmatpush.bf16.msra.mxu0 %v426
    %873 = vmatpush.bf16.msra.mxu0 %v422
    %874 = vmatpush.bf16.msra.mxu0 %v418
    %875 = vmatpush.bf16.msra.mxu0 %v414
    %876 = vmatpush.bf16.msra.mxu0 %v410
    %877 = vmatpush.bf16.msra.mxu0 %v406
    %878 = vmatpush.bf16.msra.mxu0 %v402
    %879 = vmatpush.bf16.msra.mxu0 %v398
    %880 = vmatmul.bf16.gmra.mxu0 %v836
    %v881 = vpop.f32.mrf.mxu0
    %v882 = vadd.f32 0.0, %v881
    %v883 = vpop.f32.mrf.mxu0
    %884 = vdwg.mxu0
    %885 = vmatpush.bf16.msra.mxu0 %v427
    %886 = vmatpush.bf16.msra.mxu0 %v423
    %887 = vmatpush.bf16.msra.mxu0 %v419
    %888 = vmatpush.bf16.msra.mxu0 %v415
    %889 = vmatpush.bf16.msra.mxu0 %v411
    %890 = vmatpush.bf16.msra.mxu0 %v407
    %891 = vmatpush.bf16.msra.mxu0 %v403
    %892 = vmatpush.bf16.msra.mxu0 %v399
    %893 = vmatmul.bf16.gmra.mxu0 %v836
    %v894 = vpop.f32.mrf.mxu0
    %v895 = vadd.f32 0.0, %v894
    %v896 = vpop.f32.mrf.mxu0
    %897 = vdwg.mxu0
    %v898 = vadd.f32 %v842, %v856
    %v899 = vadd.f32 %v843, %v869
    %v900 = vadd.f32 %v844, %v882
    %v901 = vadd.f32 %v845, %v895
    %v902 = vxor.u32 %v898, 2147483648
    %v903 = vxor.u32 %v899, 2147483648
    %v904 = vxor.u32 %v900, 2147483648
    %v905 = vmul.f32 %v902, 1.442695
    %v906 = vpow.pop %v905
    %v907 = vmul.f32 %v903, 1.442695
    %v908 = vpow.pop %v907
    %v909 = vmul.f32 %v904, 1.442695
    %v910 = vpow.pop %v909
    %v911 = vadd.f32 %v906, 1.0
    %v912 = vadd.f32 %v908, 1.0
    %v913 = vadd.f32 %v910, 1.0
    %v914 = vrcp.pop %v911
    %v915 = vmul.f32 %v911, %v914
    %v916 = vsub.f32 1.0, %v915
    %v917 = vmul.f32 %v914, %v916
    %v918 = vadd.f32 %v914, %v917
    %vm919 = vweird.f32 %v911
    %vm920 = vweird.f32 %v914
    %vm921 = vmor %vm919, %vm920
    %v922 = vsel %vm921, %v914, %v918
    %v923 = vand.u32 2147483647, %v911
    %vm924 = vcmp.eq.f32.partialorder %v923, 8.507059e+37
    %v925 = vand.u32 %v911, 2147483648
    %v926 = vor.u32 1.1754944e-38, %v925
    %v927 = vsel %vm924, %v926, %v922
    %v928 = vmul.f32 1.0, %v927
    %v929 = vrcp.pop %v912
    %v930 = vmul.f32 %v912, %v929
    %v931 = vsub.f32 1.0, %v930
    %v932 = vmul.f32 %v929, %v931
    %v933 = vadd.f32 %v929, %v932
    %vm934 = vweird.f32 %v912
    %vm935 = vweird.f32 %v929
    %vm936 = vmor %vm934, %vm935
    %v937 = vsel %vm936, %v929, %v933
    %v938 = vand.u32 2147483647, %v912
    %vm939 = vcmp.eq.f32.partialorder %v938, 8.507059e+37
    %v940 = vand.u32 %v912, 2147483648
    %v941 = vor.u32 1.1754944e-38, %v940
    %v942 = vsel %vm939, %v941, %v937
    %v943 = vmul.f32 1.0, %v942
    %v944 = vrcp.pop %v913
    %v945 = vmul.f32 %v913, %v944
    %v946 = vsub.f32 1.0, %v945
    %v947 = vmul.f32 %v944, %v946
    %v948 = vadd.f32 %v944, %v947
    %vm949 = vweird.f32 %v913
    %vm950 = vweird.f32 %v944
    %vm951 = vmor %vm949, %vm950
    %v952 = vsel %vm951, %v944, %v948
    %v953 = vand.u32 2147483647, %v913
    %vm954 = vcmp.eq.f32.partialorder %v953, 8.507059e+37
    %v955 = vand.u32 %v913, 2147483648
    %v956 = vor.u32 1.1754944e-38, %v955
    %v957 = vsel %vm954, %v956, %v952
    %v958 = vmul.f32 1.0, %v957
    %v959 = vtanh.pop %v901
    %v960 = vmul.f32 %v943, %v833
    %v961 = vmul.f32 %v928, %v959
    %v962 = vadd.f32 %v960, %v961
    %v963 = vtanh.pop %v962
    %v964 = vmul.f32 %v958, %v963
    %v965 = vpack.c.bf16 %v964, %v964
    %s966 = scalar_lea.vmem %s6, 12
    %967 = vst [vmem:[%s966] sm:$0xf] %v965
    %s968 = smul.u32 4, 4
    %s969 = smul.addr %s968, 8
    %s970 = scalar_lea.vmem [#allocation4], %s969
    %v971 = vld [vmem:[%s970] sm:$0xff]
    %v972 = vld [vmem:[%s970 + $0x8] sm:$0xff]
    %v973 = vld [vmem:[%s970 + $0x10] sm:$0xff]
    %v974 = vld [vmem:[%s970 + $0x18] sm:$0xff]
    %975 = vmatpush.bf16.msra.mxu0 %v424
    %976 = vmatpush.bf16.msra.mxu0 %v420
    %977 = vmatpush.bf16.msra.mxu0 %v416
    %978 = vmatpush.bf16.msra.mxu0 %v412
    %979 = vmatpush.bf16.msra.mxu0 %v408
    %980 = vmatpush.bf16.msra.mxu0 %v404
    %981 = vmatpush.bf16.msra.mxu0 %v400
    %982 = vmatpush.bf16.msra.mxu0 %v396
    %983 = vmatmul.bf16.gmra.mxu0 %v965
    %v984 = vpop.f32.mrf.mxu0
    %v985 = vadd.f32 0.0, %v984
    %v986 = vpop.f32.mrf.mxu0
    %987 = vdwg.mxu0
    %988 = vmatpush.bf16.msra.mxu0 %v425
    %989 = vmatpush.bf16.msra.mxu0 %v421
    %990 = vmatpush.bf16.msra.mxu0 %v417
    %991 = vmatpush.bf16.msra.mxu0 %v413
    %992 = vmatpush.bf16.msra.mxu0 %v409
    %993 = vmatpush.bf16.msra.mxu0 %v405
    %994 = vmatpush.bf16.msra.mxu0 %v401
    %995 = vmatpush.bf16.msra.mxu0 %v397
    %996 = vmatmul.bf16.gmra.mxu0 %v965
    %v997 = vpop.f32.mrf.mxu0
    %v998 = vadd.f32 0.0, %v997
    %v999 = vpop.f32.mrf.mxu0
    %1000 = vdwg.mxu0
    %1001 = vmatpush.bf16.msra.mxu0 %v426
    %1002 = vmatpush.bf16.msra.mxu0 %v422
    %1003 = vmatpush.bf16.msra.mxu0 %v418
    %1004 = vmatpush.bf16.msra.mxu0 %v414
    %1005 = vmatpush.bf16.msra.mxu0 %v410
    %1006 = vmatpush.bf16.msra.mxu0 %v406
    %1007 = vmatpush.bf16.msra.mxu0 %v402
    %1008 = vmatpush.bf16.msra.mxu0 %v398
    %1009 = vmatmul.bf16.gmra.mxu0 %v965
    %v1010 = vpop.f32.mrf.mxu0
    %v1011 = vadd.f32 0.0, %v1010
    %v1012 = vpop.f32.mrf.mxu0
    %1013 = vdwg.mxu0
    %1014 = vmatpush.bf16.msra.mxu0 %v427
    %1015 = vmatpush.bf16.msra.mxu0 %v423
    %1016 = vmatpush.bf16.msra.mxu0 %v419
    %1017 = vmatpush.bf16.msra.mxu0 %v415
    %1018 = vmatpush.bf16.msra.mxu0 %v411
    %1019 = vmatpush.bf16.msra.mxu0 %v407
    %1020 = vmatpush.bf16.msra.mxu0 %v403
    %1021 = vmatpush.bf16.msra.mxu0 %v399
    %1022 = vmatmul.bf16.gmra.mxu0 %v965
    %v1023 = vpop.f32.mrf.mxu0
    %v1024 = vadd.f32 0.0, %v1023
    %v1025 = vpop.f32.mrf.mxu0
    %1026 = vdwg.mxu0
    %v1027 = vadd.f32 %v971, %v985
    %v1028 = vadd.f32 %v972, %v998
    %v1029 = vadd.f32 %v973, %v1011
    %v1030 = vadd.f32 %v974, %v1024
    %v1031 = vxor.u32 %v1027, 2147483648
    %v1032 = vxor.u32 %v1028, 2147483648
    %v1033 = vxor.u32 %v1029, 2147483648
    %v1034 = vmul.f32 %v1031, 1.442695
    %v1035 = vpow.pop %v1034
    %v1036 = vmul.f32 %v1032, 1.442695
    %v1037 = vpow.pop %v1036
    %v1038 = vmul.f32 %v1033, 1.442695
    %v1039 = vpow.pop %v1038
    %v1040 = vadd.f32 %v1035, 1.0
    %v1041 = vadd.f32 %v1037, 1.0
    %v1042 = vadd.f32 %v1039, 1.0
    %v1043 = vrcp.pop %v1040
    %v1044 = vmul.f32 %v1040, %v1043
    %v1045 = vsub.f32 1.0, %v1044
    %v1046 = vmul.f32 %v1043, %v1045
    %v1047 = vadd.f32 %v1043, %v1046
    %vm1048 = vweird.f32 %v1040
    %vm1049 = vweird.f32 %v1043
    %vm1050 = vmor %vm1048, %vm1049
    %v1051 = vsel %vm1050, %v1043, %v1047
    %v1052 = vand.u32 2147483647, %v1040
    %vm1053 = vcmp.eq.f32.partialorder %v1052, 8.507059e+37
    %v1054 = vand.u32 %v1040, 2147483648
    %v1055 = vor.u32 1.1754944e-38, %v1054
    %v1056 = vsel %vm1053, %v1055, %v1051
    %v1057 = vmul.f32 1.0, %v1056
    %v1058 = vrcp.pop %v1041
    %v1059 = vmul.f32 %v1041, %v1058
    %v1060 = vsub.f32 1.0, %v1059
    %v1061 = vmul.f32 %v1058, %v1060
    %v1062 = vadd.f32 %v1058, %v1061
    %vm1063 = vweird.f32 %v1041
    %vm1064 = vweird.f32 %v1058
    %vm1065 = vmor %vm1063, %vm1064
    %v1066 = vsel %vm1065, %v1058, %v1062
    %v1067 = vand.u32 2147483647, %v1041
    %vm1068 = vcmp.eq.f32.partialorder %v1067, 8.507059e+37
    %v1069 = vand.u32 %v1041, 2147483648
    %v1070 = vor.u32 1.1754944e-38, %v1069
    %v1071 = vsel %vm1068, %v1070, %v1066
    %v1072 = vmul.f32 1.0, %v1071
    %v1073 = vrcp.pop %v1042
    %v1074 = vmul.f32 %v1042, %v1073
    %v1075 = vsub.f32 1.0, %v1074
    %v1076 = vmul.f32 %v1073, %v1075
    %v1077 = vadd.f32 %v1073, %v1076
    %vm1078 = vweird.f32 %v1042
    %vm1079 = vweird.f32 %v1073
    %vm1080 = vmor %vm1078, %vm1079
    %v1081 = vsel %vm1080, %v1073, %v1077
    %v1082 = vand.u32 2147483647, %v1042
    %vm1083 = vcmp.eq.f32.partialorder %v1082, 8.507059e+37
    %v1084 = vand.u32 %v1042, 2147483648
    %v1085 = vor.u32 1.1754944e-38, %v1084
    %v1086 = vsel %vm1083, %v1085, %v1081
    %v1087 = vmul.f32 1.0, %v1086
    %v1088 = vtanh.pop %v1030
    %v1089 = vmul.f32 %v1072, %v962
    %v1090 = vmul.f32 %v1057, %v1088
    %v1091 = vadd.f32 %v1089, %v1090
    %v1092 = vtanh.pop %v1091
    %v1093 = vmul.f32 %v1087, %v1092
    %v1094 = vpack.c.bf16 %v1093, %v1093
    %s1095 = scalar_lea.vmem %s6, 16
    %1096 = vst [vmem:[%s1095] sm:$0xf] %v1094
    %s1097 = smul.u32 5, 4
    %s1098 = smul.addr %s1097, 8
    %s1099 = scalar_lea.vmem [#allocation4], %s1098
    %v1100 = vld [vmem:[%s1099] sm:$0xff]
    %v1101 = vld [vmem:[%s1099 + $0x8] sm:$0xff]
    %v1102 = vld [vmem:[%s1099 + $0x10] sm:$0xff]
    %v1103 = vld [vmem:[%s1099 + $0x18] sm:$0xff]
    %1104 = vmatpush.bf16.msra.mxu0 %v424
    %1105 = vmatpush.bf16.msra.mxu0 %v420
    %1106 = vmatpush.bf16.msra.mxu0 %v416
    %1107 = vmatpush.bf16.msra.mxu0 %v412
    %1108 = vmatpush.bf16.msra.mxu0 %v408
    %1109 = vmatpush.bf16.msra.mxu0 %v404
    %1110 = vmatpush.bf16.msra.mxu0 %v400
    %1111 = vmatpush.bf16.msra.mxu0 %v396
    %1112 = vmatmul.bf16.gmra.mxu0 %v1094
    %v1113 = vpop.f32.mrf.mxu0
    %v1114 = vadd.f32 0.0, %v1113
    %v1115 = vpop.f32.mrf.mxu0
    %1116 = vdwg.mxu0
    %1117 = vmatpush.bf16.msra.mxu0 %v425
    %1118 = vmatpush.bf16.msra.mxu0 %v421
    %1119 = vmatpush.bf16.msra.mxu0 %v417
    %1120 = vmatpush.bf16.msra.mxu0 %v413
    %1121 = vmatpush.bf16.msra.mxu0 %v409
    %1122 = vmatpush.bf16.msra.mxu0 %v405
    %1123 = vmatpush.bf16.msra.mxu0 %v401
    %1124 = vmatpush.bf16.msra.mxu0 %v397
    %1125 = vmatmul.bf16.gmra.mxu0 %v1094
    %v1126 = vpop.f32.mrf.mxu0
    %v1127 = vadd.f32 0.0, %v1126
    %v1128 = vpop.f32.mrf.mxu0
    %1129 = vdwg.mxu0
    %1130 = vmatpush.bf16.msra.mxu0 %v426
    %1131 = vmatpush.bf16.msra.mxu0 %v422
    %1132 = vmatpush.bf16.msra.mxu0 %v418
    %1133 = vmatpush.bf16.msra.mxu0 %v414
    %1134 = vmatpush.bf16.msra.mxu0 %v410
    %1135 = vmatpush.bf16.msra.mxu0 %v406
    %1136 = vmatpush.bf16.msra.mxu0 %v402
    %1137 = vmatpush.bf16.msra.mxu0 %v398
    %1138 = vmatmul.bf16.gmra.mxu0 %v1094
    %v1139 = vpop.f32.mrf.mxu0
    %v1140 = vadd.f32 0.0, %v1139
    %v1141 = vpop.f32.mrf.mxu0
    %1142 = vdwg.mxu0
    %1143 = vmatpush.bf16.msra.mxu0 %v427
    %1144 = vmatpush.bf16.msra.mxu0 %v423
    %1145 = vmatpush.bf16.msra.mxu0 %v419
    %1146 = vmatpush.bf16.msra.mxu0 %v415
    %1147 = vmatpush.bf16.msra.mxu0 %v411
    %1148 = vmatpush.bf16.msra.mxu0 %v407
    %1149 = vmatpush.bf16.msra.mxu0 %v403
    %1150 = vmatpush.bf16.msra.mxu0 %v399
    %1151 = vmatmul.bf16.gmra.mxu0 %v1094
    %v1152 = vpop.f32.mrf.mxu0
    %v1153 = vadd.f32 0.0, %v1152
    %v1154 = vpop.f32.mrf.mxu0
    %1155 = vdwg.mxu0
    %v1156 = vadd.f32 %v1100, %v1114
    %v1157 = vadd.f32 %v1101, %v1127
    %v1158 = vadd.f32 %v1102, %v1140
    %v1159 = vadd.f32 %v1103, %v1153
    %v1160 = vxor.u32 %v1156, 2147483648
    %v1161 = vxor.u32 %v1157, 2147483648
    %v1162 = vxor.u32 %v1158, 2147483648
    %v1163 = vmul.f32 %v1160, 1.442695
    %v1164 = vpow.pop %v1163
    %v1165 = vmul.f32 %v1161, 1.442695
    %v1166 = vpow.pop %v1165
    %v1167 = vmul.f32 %v1162, 1.442695
    %v1168 = vpow.pop %v1167
    %v1169 = vadd.f32 %v1164, 1.0
    %v1170 = vadd.f32 %v1166, 1.0
    %v1171 = vadd.f32 %v1168, 1.0
    %v1172 = vrcp.pop %v1169
    %v1173 = vmul.f32 %v1169, %v1172
    %v1174 = vsub.f32 1.0, %v1173
    %v1175 = vmul.f32 %v1172, %v1174
    %v1176 = vadd.f32 %v1172, %v1175
    %vm1177 = vweird.f32 %v1169
    %vm1178 = vweird.f32 %v1172
    %vm1179 = vmor %vm1177, %vm1178
    %v1180 = vsel %vm1179, %v1172, %v1176
    %v1181 = vand.u32 2147483647, %v1169
    %vm1182 = vcmp.eq.f32.partialorder %v1181, 8.507059e+37
    %v1183 = vand.u32 %v1169, 2147483648
    %v1184 = vor.u32 1.1754944e-38, %v1183
    %v1185 = vsel %vm1182, %v1184, %v1180
    %v1186 = vmul.f32 1.0, %v1185
    %v1187 = vrcp.pop %v1170
    %v1188 = vmul.f32 %v1170, %v1187
    %v1189 = vsub.f32 1.0, %v1188
    %v1190 = vmul.f32 %v1187, %v1189
    %v1191 = vadd.f32 %v1187, %v1190
    %vm1192 = vweird.f32 %v1170
    %vm1193 = vweird.f32 %v1187
    %vm1194 = vmor %vm1192, %vm1193
    %v1195 = vsel %vm1194, %v1187, %v1191
    %v1196 = vand.u32 2147483647, %v1170
    %vm1197 = vcmp.eq.f32.partialorder %v1196, 8.507059e+37
    %v1198 = vand.u32 %v1170, 2147483648
    %v1199 = vor.u32 1.1754944e-38, %v1198
    %v1200 = vsel %vm1197, %v1199, %v1195
    %v1201 = vmul.f32 1.0, %v1200
    %v1202 = vrcp.pop %v1171
    %v1203 = vmul.f32 %v1171, %v1202
    %v1204 = vsub.f32 1.0, %v1203
    %v1205 = vmul.f32 %v1202, %v1204
    %v1206 = vadd.f32 %v1202, %v1205
    %vm1207 = vweird.f32 %v1171
    %vm1208 = vweird.f32 %v1202
    %vm1209 = vmor %vm1207, %vm1208
    %v1210 = vsel %vm1209, %v1202, %v1206
    %v1211 = vand.u32 2147483647, %v1171
    %vm1212 = vcmp.eq.f32.partialorder %v1211, 8.507059e+37
    %v1213 = vand.u32 %v1171, 2147483648
    %v1214 = vor.u32 1.1754944e-38, %v1213
    %v1215 = vsel %vm1212, %v1214, %v1210
    %v1216 = vmul.f32 1.0, %v1215
    %v1217 = vtanh.pop %v1159
    %v1218 = vmul.f32 %v1201, %v1091
    %v1219 = vmul.f32 %v1186, %v1217
    %v1220 = vadd.f32 %v1218, %v1219
    %v1221 = vtanh.pop %v1220
    %v1222 = vmul.f32 %v1216, %v1221
    %v1223 = vpack.c.bf16 %v1222, %v1222
    %s1224 = scalar_lea.vmem %s6, 20
    %1225 = vst [vmem:[%s1224] sm:$0xf] %v1223
    %s1226 = smul.u32 6, 4
    %s1227 = smul.addr %s1226, 8
    %s1228 = scalar_lea.vmem [#allocation4], %s1227
    %v1229 = vld [vmem:[%s1228] sm:$0xff]
    %v1230 = vld [vmem:[%s1228 + $0x8] sm:$0xff]
    %v1231 = vld [vmem:[%s1228 + $0x10] sm:$0xff]
    %v1232 = vld [vmem:[%s1228 + $0x18] sm:$0xff]
    %1233 = vmatpush.bf16.msra.mxu0 %v424
    %1234 = vmatpush.bf16.msra.mxu0 %v420
    %1235 = vmatpush.bf16.msra.mxu0 %v416
    %1236 = vmatpush.bf16.msra.mxu0 %v412
    %1237 = vmatpush.bf16.msra.mxu0 %v408
    %1238 = vmatpush.bf16.msra.mxu0 %v404
    %1239 = vmatpush.bf16.msra.mxu0 %v400
    %1240 = vmatpush.bf16.msra.mxu0 %v396
    %1241 = vmatmul.bf16.gmra.mxu0 %v1223
    %v1242 = vpop.f32.mrf.mxu0
    %v1243 = vadd.f32 0.0, %v1242
    %v1244 = vpop.f32.mrf.mxu0
    %1245 = vdwg.mxu0
    %1246 = vmatpush.bf16.msra.mxu0 %v425
    %1247 = vmatpush.bf16.msra.mxu0 %v421
    %1248 = vmatpush.bf16.msra.mxu0 %v417
    %1249 = vmatpush.bf16.msra.mxu0 %v413
    %1250 = vmatpush.bf16.msra.mxu0 %v409
    %1251 = vmatpush.bf16.msra.mxu0 %v405
    %1252 = vmatpush.bf16.msra.mxu0 %v401
    %1253 = vmatpush.bf16.msra.mxu0 %v397
    %1254 = vmatmul.bf16.gmra.mxu0 %v1223
    %v1255 = vpop.f32.mrf.mxu0
    %v1256 = vadd.f32 0.0, %v1255
    %v1257 = vpop.f32.mrf.mxu0
    %1258 = vdwg.mxu0
    %1259 = vmatpush.bf16.msra.mxu0 %v426
    %1260 = vmatpush.bf16.msra.mxu0 %v422
    %1261 = vmatpush.bf16.msra.mxu0 %v418
    %1262 = vmatpush.bf16.msra.mxu0 %v414
    %1263 = vmatpush.bf16.msra.mxu0 %v410
    %1264 = vmatpush.bf16.msra.mxu0 %v406
    %1265 = vmatpush.bf16.msra.mxu0 %v402
    %1266 = vmatpush.bf16.msra.mxu0 %v398
    %1267 = vmatmul.bf16.gmra.mxu0 %v1223
    %v1268 = vpop.f32.mrf.mxu0
    %v1269 = vadd.f32 0.0, %v1268
    %v1270 = vpop.f32.mrf.mxu0
    %1271 = vdwg.mxu0
    %1272 = vmatpush.bf16.msra.mxu0 %v427
    %1273 = vmatpush.bf16.msra.mxu0 %v423
    %1274 = vmatpush.bf16.msra.mxu0 %v419
    %1275 = vmatpush.bf16.msra.mxu0 %v415
    %1276 = vmatpush.bf16.msra.mxu0 %v411
    %1277 = vmatpush.bf16.msra.mxu0 %v407
    %1278 = vmatpush.bf16.msra.mxu0 %v403
    %1279 = vmatpush.bf16.msra.mxu0 %v399
    %1280 = vmatmul.bf16.gmra.mxu0 %v1223
    %v1281 = vpop.f32.mrf.mxu0
    %v1282 = vadd.f32 0.0, %v1281
    %v1283 = vpop.f32.mrf.mxu0
    %1284 = vdwg.mxu0
    %v1285 = vadd.f32 %v1229, %v1243
    %v1286 = vadd.f32 %v1230, %v1256
    %v1287 = vadd.f32 %v1231, %v1269
    %v1288 = vadd.f32 %v1232, %v1282
    %v1289 = vxor.u32 %v1285, 2147483648
    %v1290 = vxor.u32 %v1286, 2147483648
    %v1291 = vxor.u32 %v1287, 2147483648
    %v1292 = vmul.f32 %v1289, 1.442695
    %v1293 = vpow.pop %v1292
    %v1294 = vmul.f32 %v1290, 1.442695
    %v1295 = vpow.pop %v1294
    %v1296 = vmul.f32 %v1291, 1.442695
    %v1297 = vpow.pop %v1296
    %v1298 = vadd.f32 %v1293, 1.0
    %v1299 = vadd.f32 %v1295, 1.0
    %v1300 = vadd.f32 %v1297, 1.0
    %v1301 = vrcp.pop %v1298
    %v1302 = vmul.f32 %v1298, %v1301
    %v1303 = vsub.f32 1.0, %v1302
    %v1304 = vmul.f32 %v1301, %v1303
    %v1305 = vadd.f32 %v1301, %v1304
    %vm1306 = vweird.f32 %v1298
    %vm1307 = vweird.f32 %v1301
    %vm1308 = vmor %vm1306, %vm1307
    %v1309 = vsel %vm1308, %v1301, %v1305
    %v1310 = vand.u32 2147483647, %v1298
    %vm1311 = vcmp.eq.f32.partialorder %v1310, 8.507059e+37
    %v1312 = vand.u32 %v1298, 2147483648
    %v1313 = vor.u32 1.1754944e-38, %v1312
    %v1314 = vsel %vm1311, %v1313, %v1309
    %v1315 = vmul.f32 1.0, %v1314
    %v1316 = vrcp.pop %v1299
    %v1317 = vmul.f32 %v1299, %v1316
    %v1318 = vsub.f32 1.0, %v1317
    %v1319 = vmul.f32 %v1316, %v1318
    %v1320 = vadd.f32 %v1316, %v1319
    %vm1321 = vweird.f32 %v1299
    %vm1322 = vweird.f32 %v1316
    %vm1323 = vmor %vm1321, %vm1322
    %v1324 = vsel %vm1323, %v1316, %v1320
    %v1325 = vand.u32 2147483647, %v1299
    %vm1326 = vcmp.eq.f32.partialorder %v1325, 8.507059e+37
    %v1327 = vand.u32 %v1299, 2147483648
    %v1328 = vor.u32 1.1754944e-38, %v1327
    %v1329 = vsel %vm1326, %v1328, %v1324
    %v1330 = vmul.f32 1.0, %v1329
    %v1331 = vrcp.pop %v1300
    %v1332 = vmul.f32 %v1300, %v1331
    %v1333 = vsub.f32 1.0, %v1332
    %v1334 = vmul.f32 %v1331, %v1333
    %v1335 = vadd.f32 %v1331, %v1334
    %vm1336 = vweird.f32 %v1300
    %vm1337 = vweird.f32 %v1331
    %vm1338 = vmor %vm1336, %vm1337
    %v1339 = vsel %vm1338, %v1331, %v1335
    %v1340 = vand.u32 2147483647, %v1300
    %vm1341 = vcmp.eq.f32.partialorder %v1340, 8.507059e+37
    %v1342 = vand.u32 %v1300, 2147483648
    %v1343 = vor.u32 1.1754944e-38, %v1342
    %v1344 = vsel %vm1341, %v1343, %v1339
    %v1345 = vmul.f32 1.0, %v1344
    %v1346 = vtanh.pop %v1288
    %v1347 = vmul.f32 %v1330, %v1220
    %v1348 = vmul.f32 %v1315, %v1346
    %v1349 = vadd.f32 %v1347, %v1348
    %v1350 = vtanh.pop %v1349
    %v1351 = vmul.f32 %v1345, %v1350
    %v1352 = vpack.c.bf16 %v1351, %v1351
    %s1353 = scalar_lea.vmem %s6, 24
    %1354 = vst [vmem:[%s1353] sm:$0xf] %v1352
    %s1355 = smul.u32 7, 4
    %s1356 = smul.addr %s1355, 8
    %s1357 = scalar_lea.vmem [#allocation4], %s1356
    %v1358 = vld [vmem:[%s1357] sm:$0xff]
    %v1359 = vld [vmem:[%s1357 + $0x8] sm:$0xff]
    %v1360 = vld [vmem:[%s1357 + $0x10] sm:$0xff]
    %v1361 = vld [vmem:[%s1357 + $0x18] sm:$0xff]
    %1362 = vmatpush.bf16.msra.mxu0 %v424
    %1363 = vmatpush.bf16.msra.mxu0 %v420
    %1364 = vmatpush.bf16.msra.mxu0 %v416
    %1365 = vmatpush.bf16.msra.mxu0 %v412
    %1366 = vmatpush.bf16.msra.mxu0 %v408
    %1367 = vmatpush.bf16.msra.mxu0 %v404
    %1368 = vmatpush.bf16.msra.mxu0 %v400
    %1369 = vmatpush.bf16.msra.mxu0 %v396
    %1370 = vmatmul.bf16.gmra.mxu0 %v1352
    %v1371 = vpop.f32.mrf.mxu0
    %v1372 = vadd.f32 0.0, %v1371
    %v1373 = vpop.f32.mrf.mxu0
    %1374 = vdwg.mxu0
    %1375 = vmatpush.bf16.msra.mxu0 %v425
    %1376 = vmatpush.bf16.msra.mxu0 %v421
    %1377 = vmatpush.bf16.msra.mxu0 %v417
    %1378 = vmatpush.bf16.msra.mxu0 %v413
    %1379 = vmatpush.bf16.msra.mxu0 %v409
    %1380 = vmatpush.bf16.msra.mxu0 %v405
    %1381 = vmatpush.bf16.msra.mxu0 %v401
    %1382 = vmatpush.bf16.msra.mxu0 %v397
    %1383 = vmatmul.bf16.gmra.mxu0 %v1352
    %v1384 = vpop.f32.mrf.mxu0
    %v1385 = vadd.f32 0.0, %v1384
    %v1386 = vpop.f32.mrf.mxu0
    %1387 = vdwg.mxu0
    %1388 = vmatpush.bf16.msra.mxu0 %v426
    %1389 = vmatpush.bf16.msra.mxu0 %v422
    %1390 = vmatpush.bf16.msra.mxu0 %v418
    %1391 = vmatpush.bf16.msra.mxu0 %v414
    %1392 = vmatpush.bf16.msra.mxu0 %v410
    %1393 = vmatpush.bf16.msra.mxu0 %v406
    %1394 = vmatpush.bf16.msra.mxu0 %v402
    %1395 = vmatpush.bf16.msra.mxu0 %v398
    %1396 = vmatmul.bf16.gmra.mxu0 %v1352
    %v1397 = vpop.f32.mrf.mxu0
    %v1398 = vadd.f32 0.0, %v1397
    %v1399 = vpop.f32.mrf.mxu0
    %1400 = vdwg.mxu0
    %1401 = vmatpush.bf16.msra.mxu0 %v427
    %1402 = vmatpush.bf16.msra.mxu0 %v423
    %1403 = vmatpush.bf16.msra.mxu0 %v419
    %1404 = vmatpush.bf16.msra.mxu0 %v415
    %1405 = vmatpush.bf16.msra.mxu0 %v411
    %1406 = vmatpush.bf16.msra.mxu0 %v407
    %1407 = vmatpush.bf16.msra.mxu0 %v403
    %1408 = vmatpush.bf16.msra.mxu0 %v399
    %1409 = vmatmul.bf16.gmra.mxu0 %v1352
    %v1410 = vpop.f32.mrf.mxu0
    %v1411 = vadd.f32 0.0, %v1410
    %v1412 = vpop.f32.mrf.mxu0
    %1413 = vdwg.mxu0
    %v1414 = vadd.f32 %v1358, %v1372
    %v1415 = vadd.f32 %v1359, %v1385
    %v1416 = vadd.f32 %v1360, %v1398
    %v1417 = vadd.f32 %v1361, %v1411
    %v1418 = vxor.u32 %v1414, 2147483648
    %v1419 = vxor.u32 %v1415, 2147483648
    %v1420 = vxor.u32 %v1416, 2147483648
    %v1421 = vmul.f32 %v1418, 1.442695
    %v1422 = vpow.pop %v1421
    %v1423 = vmul.f32 %v1419, 1.442695
    %v1424 = vpow.pop %v1423
    %v1425 = vmul.f32 %v1420, 1.442695
    %v1426 = vpow.pop %v1425
    %v1427 = vadd.f32 %v1422, 1.0
    %v1428 = vadd.f32 %v1424, 1.0
    %v1429 = vadd.f32 %v1426, 1.0
    %v1430 = vrcp.pop %v1427
    %v1431 = vmul.f32 %v1427, %v1430
    %v1432 = vsub.f32 1.0, %v1431
    %v1433 = vmul.f32 %v1430, %v1432
    %v1434 = vadd.f32 %v1430, %v1433
    %vm1435 = vweird.f32 %v1427
    %vm1436 = vweird.f32 %v1430
    %vm1437 = vmor %vm1435, %vm1436
    %v1438 = vsel %vm1437, %v1430, %v1434
    %v1439 = vand.u32 2147483647, %v1427
    %vm1440 = vcmp.eq.f32.partialorder %v1439, 8.507059e+37
    %v1441 = vand.u32 %v1427, 2147483648
    %v1442 = vor.u32 1.1754944e-38, %v1441
    %v1443 = vsel %vm1440, %v1442, %v1438
    %v1444 = vmul.f32 1.0, %v1443
    %v1445 = vrcp.pop %v1428
    %v1446 = vmul.f32 %v1428, %v1445
    %v1447 = vsub.f32 1.0, %v1446
    %v1448 = vmul.f32 %v1445, %v1447
    %v1449 = vadd.f32 %v1445, %v1448
    %vm1450 = vweird.f32 %v1428
    %vm1451 = vweird.f32 %v1445
    %vm1452 = vmor %vm1450, %vm1451
    %v1453 = vsel %vm1452, %v1445, %v1449
    %v1454 = vand.u32 2147483647, %v1428
    %vm1455 = vcmp.eq.f32.partialorder %v1454, 8.507059e+37
    %v1456 = vand.u32 %v1428, 2147483648
    %v1457 = vor.u32 1.1754944e-38, %v1456
    %v1458 = vsel %vm1455, %v1457, %v1453
    %v1459 = vmul.f32 1.0, %v1458
    %v1460 = vrcp.pop %v1429
    %v1461 = vmul.f32 %v1429, %v1460
    %v1462 = vsub.f32 1.0, %v1461
    %v1463 = vmul.f32 %v1460, %v1462
    %v1464 = vadd.f32 %v1460, %v1463
    %vm1465 = vweird.f32 %v1429
    %vm1466 = vweird.f32 %v1460
    %vm1467 = vmor %vm1465, %vm1466
    %v1468 = vsel %vm1467, %v1460, %v1464
    %v1469 = vand.u32 2147483647, %v1429
    %vm1470 = vcmp.eq.f32.partialorder %v1469, 8.507059e+37
    %v1471 = vand.u32 %v1429, 2147483648
    %v1472 = vor.u32 1.1754944e-38, %v1471
    %v1473 = vsel %vm1470, %v1472, %v1468
    %v1474 = vmul.f32 1.0, %v1473
    %v1475 = vtanh.pop %v1417
    %v1476 = vmul.f32 %v1459, %v1349
    %v1477 = vmul.f32 %v1444, %v1475
    %v1478 = vadd.f32 %v1476, %v1477
    %v1479 = vtanh.pop %v1478
    %v1480 = vmul.f32 %v1474, %v1479
    %v1481 = vpack.c.bf16 %v1480, %v1480
    %s1482 = scalar_lea.vmem %s6, 28
    %1483 = vst [vmem:[%s1482] sm:$0xf] %v1481
    %p1484 = scmp.ne.s32.totalorder 0, 0
    // Predicated region
    $region34: #{lstmnet_forward.2} parent=1 // pred_check
      %p1485 = pneg %p1484
    $region35: #{lstmnet_forward.2} parent=1 // pred_check_branch
      %1487 = sbr.rel (%p1485) target = $region37
    $region36: #{lstmnet_forward.2} parent=1 // pred_region
      %1488 = vst [vmem:[#allocation2] sm:$0xff] %v1480
      %1489 = vst [vmem:[#allocation3] sm:$0xff] %v1478
    $region37: #{lstmnet_forward.2} parent=1 // pred_fallthru
      _
    // Predicated region
    $region38: #{lstmnet_forward.2} parent=1 // pred_check
      %p1490 = pneg %p43
    $region39: #{lstmnet_forward.2} parent=1 // pred_check_branch
      %1492 = sbr.rel (%p1490) target = $region41
    $region40: #{lstmnet_forward.2} parent=1 // pred_region
      %1493 = vst [vmem:[%s7] sm:$0xff] %v1480
      %1494 = vst [vmem:[%s8] sm:$0xff] %v1478
    $region41: #{lstmnet_forward.2} parent=1 // pred_fallthru
      _
    // Predicated region
    $region42: #{lstmnet_forward.2} parent=1 // pred_check
      _
    $region43: #{lstmnet_forward.2} parent=1 // pred_check_branch
      %1496 = sbr.rel (0) target = $region45
    $region44: #{lstmnet_forward.2} parent=1 // pred_region
      _
    $region45: #{lstmnet_forward.2} parent=1 // pred_fallthru
      _
    // Predicated region
    $region46: #{lstmnet_forward.2} parent=1 // pred_check
      _
    $region47: #{lstmnet_forward.2} parent=1 // pred_check_branch
      %1498 = sbr.rel (0) target = $region49
    $region48: #{lstmnet_forward.2} parent=1 // pred_region
      _
    $region49: #{lstmnet_forward.2} parent=1 // pred_fallthru
      _
    // Predicated region
    $region50: #{lstmnet_forward.2} parent=1 // pred_check
      _
    $region51: #{lstmnet_forward.2} parent=1 // pred_check_branch
      %1500 = sbr.rel (0) target = $region53
    $region52: #{lstmnet_forward.2} parent=1 // pred_region
      _
    $region53: #{lstmnet_forward.2} parent=1 // pred_fallthru
      _
    // Predicated region
    $region54: #{lstmnet_forward.2} parent=1 // pred_check
      _
    $region55: #{lstmnet_forward.2} parent=1 // pred_check_branch
      %1502 = sbr.rel (0) target = $region57
    $region56: #{lstmnet_forward.2} parent=1 // pred_region
      _
    $region57: #{lstmnet_forward.2} parent=1 // pred_fallthru
      _
    // Predicated region
    $region58: #{lstmnet_forward.2} parent=1 // pred_check
      _
    $region59: #{lstmnet_forward.2} parent=1 // pred_check_branch
      %1504 = sbr.rel (0) target = $region61
    $region60: #{lstmnet_forward.2} parent=1 // pred_region
      _
    $region61: #{lstmnet_forward.2} parent=1 // pred_fallthru
      _
    // Predicated region
    $region62: #{lstmnet_forward.2} parent=1 // pred_check
      _
    $region63: #{lstmnet_forward.2} parent=1 // pred_check_branch
      %1506 = sbr.rel (0) target = $region65
    $region64: #{lstmnet_forward.2} parent=1 // pred_region
      _
    $region65: #{lstmnet_forward.2} parent=1 // pred_fallthru
      _
    %1507 = vsyncpa [#allocation6], 1

</llo_original>
